<compile_context>
chip_gen: v6e
topology: v6e:2x2x1
jax: 0.10.0
libtpu: 0.0.40
codegen_flags: <defaults>
</compile_context>

<pallas_src>
import functools

import jax
import jax.numpy as jnp
from jax import lax
from jax.experimental import pallas as pl
from jax.experimental.pallas import tpu as pltpu

MAX_LENGTH = 10
SOS_token = 0
NEG_INF = -1e30        # finite "-inf" used to mask padded vocab columns
LANE = 128             # TPU lane width
SUBLANE = 8            # TPU sublane width


def _round_up(x, m):
    return (x + m - 1) // m * m


def _decoder_kernel(w_big_ref, b_hn_ref, w_out_t_ref, b_out_ref, h0_ref,
                    logp_ref, hfin_ref):
    """Greedy GRU decoder, MAX_LENGTH steps, fully unrolled, all operands in VMEM.

    w_big_ref   : (Vp+Hp, 4*Hp)  fused gate table, gate-blocked columns:
                    [0:Hp)      r gate   (emb rows: emb@W_ir.T+b_ir+b_hr ; h rows: W_hr.T)
                    [Hp:2Hp)    z gate   (emb rows: emb@W_iz.T+b_iz+b_hz ; h rows: W_hz.T)
                    [2Hp:3Hp)   n input  (emb rows: emb@W_in.T+b_in      ; h rows: 0)
                    [3Hp:4Hp)   n hidden (emb rows: 0                    ; h rows: W_hn.T)
    b_hn_ref    : (1, Hp)        b_hn (kept separate: multiplied by r)
    w_out_t_ref : (Hp, Vp)       output projection, transposed
    b_out_ref   : (1, Vp)        bias; padded vocab columns hold NEG_INF
    h0_ref      : (Bp, Hp)       initial hidden (encoder_hidden, zero-padded)
    logp_ref    : (MAX_LENGTH, Bp, Vp)  output log-probs (step-major; wrapper transposes)
    hfin_ref    : (Bp, Hp)       final hidden
    """
    Bp, Hp = h0_ref.shape
    Vp = b_out_ref.shape[1]

    # Loop-invariant weight loads, hoisted out of the static unroll.
    w_big = w_big_ref[...]
    b_hn = b_hn_ref[...]
    w_out_t = w_out_t_ref[...]
    b_out = b_out_ref[...]

    h = h0_ref[...]
    iota_v = lax.broadcasted_iota(jnp.int32, (Bp, Vp), 1)
    onehot = (iota_v == SOS_token).astype(jnp.float32)   # decoder_input = SOS

    step_logits = []
    for _ in range(MAX_LENGTH):                          # static unroll
        # One fused MXU matmul per step: [onehot, h] @ W_big (K = Vp+Hp = 256).
        u = jnp.concatenate([onehot, h], axis=-1)                      # (Bp, Vp+Hp)
        g = jnp.dot(u, w_big, preferred_element_type=jnp.float32)      # (Bp, 4*Hp)

        # GRU cell (PyTorch gate order r, z, n); gate slices are lane-tile aligned.
        r = jax.nn.sigmoid(g[:, 0:Hp])
        z = jax.nn.sigmoid(g[:, Hp:2 * Hp])
        n = jnp.tanh(g[:, 2 * Hp:3 * Hp] + r * (g[:, 3 * Hp:4 * Hp] + b_hn))
        h = (1.0 - z) * n + z * h

        # Output projection; padded vocab columns pick up NEG_INF from the bias.
        logits = jnp.dot(h, w_out_t, preferred_element_type=jnp.float32) + b_out
        step_logits.append(logits)                        # carried in vregs

        # Greedy next token: first index attaining the max (matches torch.topk).
        m = jnp.max(logits, axis=-1, keepdims=True)
        cand = jnp.where(logits >= m, iota_v, Vp)
        idx = jnp.min(cand, axis=-1, keepdims=True)
        onehot = (iota_v == idx).astype(jnp.float32)

    # Deferred, vectorized log-softmax over all steps + one dense store.
    stacked = jnp.stack(step_logits, axis=0)              # (T, Bp, Vp)
    m = jnp.max(stacked, axis=-1, keepdims=True)
    lse = m + jnp.log(jnp.sum(jnp.exp(stacked - m), axis=-1, keepdims=True))
    logp_ref[...] = stacked - lse
    hfin_ref[...] = h


def _pack_params(params):
    """Lane-pad + gate-block the weights into the fused kernel operands.

    NOTE: params are closed over via functools.partial, so under jit this whole
    packing (including the (V,H)@(H,3H) fusion matmul) constant-folds at compile
    time.  If params ever become traced jit arguments, hoist this out of the
    per-call path.
    """
    emb = params["emb"].astype(jnp.float32)              # (V, H)
    V, H = emb.shape
    Hp = _round_up(H, LANE)
    Vp = _round_up(V, LANE)

    w_ih = params["w_ih"].astype(jnp.float32)            # (3H, H)
    w_hh = params["w_hh"].astype(jnp.float32)            # (3H, H)
    b_ih = params["b_ih"].astype(jnp.float32)            # (3H,)
    b_hh = params["b_hh"].astype(jnp.float32)            # (3H,)

    def gate(x, g):                                      # PyTorch gate order r, z, n
        return x[g * H:(g + 1) * H]

    w_big = jnp.zeros((Vp + Hp, 4 * Hp), jnp.float32)
    for g in range(3):
        # Embedding rows: emb @ W_i?.T + b_i?  (+ b_h? folded in for r and z —
        # the one-hot sums to 1, so the row-broadcast bias is added exactly once).
        tab = emb @ gate(w_ih, g).T + gate(b_ih, g)
        if g < 2:
            tab = tab + gate(b_hh, g)
        w_big = w_big.at[:V, g * Hp:g * Hp + H].set(tab)
        # Hidden-state rows: W_h?.T.  The n-gate hidden term goes to column
        # block 3 so the kernel can apply r * (W_hn h + b_hn) separately.
        col0 = g * Hp if g < 2 else 3 * Hp
        w_big = w_big.at[Vp:Vp + H, col0:col0 + H].set(gate(w_hh, g).T)

    b_hn = jnp.zeros((1, Hp), jnp.float32).at[0, :H].set(gate(b_hh, 2))

    w_out_t = jnp.zeros((Hp, Vp), jnp.float32).at[:H, :V].set(
        params["w_out"].astype(jnp.float32).T)
    b_out = jnp.full((1, Vp), NEG_INF, jnp.float32).at[0, :V].set(
        params["b_out"].astype(jnp.float32))

    return w_big, b_hn, w_out_t, b_out, V, H, Vp, Hp


def decoder_rnn_forward(params, encoder_outputs, encoder_hidden):
    """Mirrors DecoderRNN.forward with target_tensor=None (greedy decoding)."""
    B = encoder_outputs.shape[0]
    w_big, b_hn, w_out_t, b_out, V, H, Vp, Hp = _pack_params(params)
    Bp = _round_up(max(B, 1), SUBLANE)                   # full sublane tile

    h0 = encoder_hidden[0].astype(jnp.float32)           # (B, H)
    h0_p = jnp.zeros((Bp, Hp), jnp.float32).at[:B, :H].set(h0)

    vmem = pl.BlockSpec(memory_space=pltpu.MemorySpace.VMEM)
    # Footprint: w_big 512 KiB + w_out 64 KiB + outputs/inputs < 64 KiB — well
    # under the default scoped VMEM limit, so no vmem_limit_bytes override.
    logp_pad, hfin_pad = pl.pallas_call(
        _decoder_kernel,
        out_shape=(
            jax.ShapeDtypeStruct((MAX_LENGTH, Bp, Vp), jnp.float32),
            jax.ShapeDtypeStruct((Bp, Hp), jnp.float32),
        ),
        in_specs=[vmem] * 5,
        out_specs=(vmem, vmem),
    )(w_big, b_hn, w_out_t, b_out, h0_p)

    # (T, Bp, Vp) -> (B, T, V); the transpose is ~40 KB and fuses with the slice.
    decoder_outputs = jnp.transpose(logp_pad, (1, 0, 2))[:B, :, :V]
    decoder_hidden = hfin_pad[:B, :H][None]               # (1, B, H)
    return decoder_outputs, decoder_hidden, None


def decoder_rnn_reference(params, encoder_outputs, encoder_hidden):
    """Pure-JAX reference of the same forward pass (for correctness check)."""
    B = encoder_outputs.shape[0]
    H = params["emb"].shape[1]
    h = encoder_hidden[0].astype(jnp.float32)
    tok = jnp.full((B,), SOS_token, dtype=jnp.int32)
    outs = []
    for _ in range(MAX_LENGTH):
        x = params["emb"][tok]
        gi = x @ params["w_ih"].T + params["b_ih"]
        gh = h @ params["w_hh"].T + params["b_hh"]
        r = jax.nn.sigmoid(gi[:, 0:H] + gh[:, 0:H])
        z = jax.nn.sigmoid(gi[:, H:2 * H] + gh[:, H:2 * H])
        n = jnp.tanh(gi[:, 2 * H:3 * H] + r * gh[:, 2 * H:3 * H])
        h = (1.0 - z) * n + z * h
        logits = h @ params["w_out"].T + params["b_out"]
        outs.append(logits)
        tok = jnp.argmax(logits, axis=-1).astype(jnp.int32)
    out = jnp.stack(outs, axis=1)
    return jax.nn.log_softmax(out, axis=-1), h[None], None


def init_params(key, hidden_size, output_size):
    """Deterministic synthetic weights matching nn.Embedding/nn.GRU/nn.Linear shapes."""
    ks = jax.random.split(key, 7)
    k = 1.0 / jnp.sqrt(hidden_size)
    return {
        "emb": jax.random.normal(ks[0], (output_size, hidden_size), jnp.float32),
        "w_ih": jax.random.uniform(ks[1], (3 * hidden_size, hidden_size), jnp.float32, -k, k),
        "w_hh": jax.random.uniform(ks[2], (3 * hidden_size, hidden_size), jnp.float32, -k, k),
        "b_ih": jax.random.uniform(ks[3], (3 * hidden_size,), jnp.float32, -k, k),
        "b_hh": jax.random.uniform(ks[4], (3 * hidden_size,), jnp.float32, -k, k),
        "w_out": jax.random.uniform(ks[5], (output_size, hidden_size), jnp.float32, -k, k),
        "b_out": jax.random.uniform(ks[6], (output_size,), jnp.float32, -k, k),
    }


if __name__ == "__main__":
    B, S, H, V = 2, 8, 32, 20
    key = jax.random.PRNGKey(0)
    kp, ke, kh = jax.random.split(key, 3)

    params = init_params(kp, H, V)
    encoder_outputs = jax.random.normal(ke, (B, S, H), jnp.float32)
    encoder_hidden = jax.random.normal(kh, (1, B, H), jnp.float32)

    fwd = jax.jit(functools.partial(decoder_rnn_forward, params))
    dec_out, dec_hidden, _ = fwd(encoder_outputs, encoder_hidden)
    jax.block_until_ready((dec_out, dec_hidden))

    ref_out, ref_hidden, _ = decoder_rnn_reference(params, encoder_outputs, encoder_hidden)

    assert dec_out.shape == (B, MAX_LENGTH, V)
    assert dec_hidden.shape == (1, B, H)
    assert jnp.allclose(dec_out, ref_out, atol=1e-4, rtol=1e-4)
    assert jnp.allclose(dec_hidden, ref_hidden, atol=1e-4, rtol=1e-4)

    print("KERNEL_OK")
</pallas_src>

<mosaic_0001>
module attributes {stable_mosaic.version = 11 : i64} {
  func.func @_decoder_kernel(%arg0: memref<256x512xf32, #tpu.memory_space<vmem>>, %arg1: memref<1x128xf32, #tpu.memory_space<vmem>>, %arg2: memref<128x128xf32, #tpu.memory_space<vmem>>, %arg3: memref<1x128xf32, #tpu.memory_space<vmem>>, %arg4: memref<8x128xf32, #tpu.memory_space<vmem>>, %arg5: memref<10x8x128xf32, #tpu.memory_space<vmem>>, %arg6: memref<8x128xf32, #tpu.memory_space<vmem>>) attributes {dimension_semantics = [], scalar_prefetch = 0 : i64, scratch_operands = 0 : i64, tpu.core_type = #tpu.core_type<tc>} {
    %c0 = arith.constant 0 : index
    %c0_0 = arith.constant 0 : index
    %0 = vector.load %arg0[%c0, %c0_0] : memref<256x512xf32, #tpu.memory_space<vmem>>, vector<256x512xf32>
    %c0_1 = arith.constant 0 : index
    %c0_2 = arith.constant 0 : index
    %1 = vector.load %arg1[%c0_1, %c0_2] : memref<1x128xf32, #tpu.memory_space<vmem>>, vector<1x128xf32>
    %c0_3 = arith.constant 0 : index
    %c0_4 = arith.constant 0 : index
    %2 = vector.load %arg2[%c0_3, %c0_4] : memref<128x128xf32, #tpu.memory_space<vmem>>, vector<128x128xf32>
    %c0_5 = arith.constant 0 : index
    %c0_6 = arith.constant 0 : index
    %3 = vector.load %arg3[%c0_5, %c0_6] : memref<1x128xf32, #tpu.memory_space<vmem>>, vector<1x128xf32>
    %c0_7 = arith.constant 0 : index
    %c0_8 = arith.constant 0 : index
    %4 = vector.load %arg4[%c0_7, %c0_8] : memref<8x128xf32, #tpu.memory_space<vmem>>, vector<8x128xf32>
    %5 = tpu.iota {dimensions = array<i32: 1>} : vector<8x128xi32>
    %c0_i32 = arith.constant 0 : i32
    %6 = vector.broadcast %c0_i32 : i32 to vector<8x128xi32>
    %7 = arith.cmpi eq, %5, %6 : vector<8x128xi32>
    %8 = arith.extui %7 : vector<8x128xi1> to vector<8x128xi32>
    %9 = arith.sitofp %8 : vector<8x128xi32> to vector<8x128xf32>
    %10 = tpu.concatenate %9, %4 in 1 : vector<8x128xf32>, vector<8x128xf32> -> vector<8x256xf32>
    %cst = arith.constant dense<0.000000e+00> : vector<8x512xf32>
    %11 = tpu.matmul %10, %0, %cst {dimension_numbers = #tpu.dot_dimension_numbers<[1], [0], [0], [1], [0, 0, 1, 1], [], []>} : vector<8x256xf32>, vector<256x512xf32>, vector<8x512xf32> -> vector<8x512xf32>
    %12 = vector.extract_strided_slice %11 {offsets = [0, 0], sizes = [8, 128], strides = [1, 1]} : vector<8x512xf32> to vector<8x128xf32>
    %13 = arith.negf %12 : vector<8x128xf32>
    %14 = math.exp %13 : vector<8x128xf32>
    %cst_9 = arith.constant 1.000000e+00 : f32
    %15 = vector.broadcast %cst_9 : f32 to vector<8x128xf32>
    %16 = arith.addf %15, %14 : vector<8x128xf32>
    %17 = arith.divf %15, %16 : vector<8x128xf32>
    %18 = vector.extract_strided_slice %11 {offsets = [0, 128], sizes = [8, 128], strides = [1, 1]} : vector<8x512xf32> to vector<8x128xf32>
    %19 = arith.negf %18 : vector<8x128xf32>
    %20 = math.exp %19 : vector<8x128xf32>
    %cst_10 = arith.constant 1.000000e+00 : f32
    %21 = vector.broadcast %cst_10 : f32 to vector<8x128xf32>
    %22 = arith.addf %21, %20 : vector<8x128xf32>
    %23 = arith.divf %21, %22 : vector<8x128xf32>
    %24 = vector.extract_strided_slice %11 {offsets = [0, 256], sizes = [8, 128], strides = [1, 1]} : vector<8x512xf32> to vector<8x128xf32>
    %25 = vector.extract_strided_slice %11 {offsets = [0, 384], sizes = [8, 128], strides = [1, 1]} : vector<8x512xf32> to vector<8x128xf32>
    %26 = vector.broadcast %1 : vector<1x128xf32> to vector<8x128xf32>
    %27 = arith.addf %25, %26 : vector<8x128xf32>
    %28 = arith.mulf %17, %27 : vector<8x128xf32>
    %29 = arith.addf %24, %28 : vector<8x128xf32>
    %30 = math.tanh %29 : vector<8x128xf32>
    %cst_11 = arith.constant 1.000000e+00 : f32
    %31 = vector.broadcast %cst_11 : f32 to vector<8x128xf32>
    %32 = arith.subf %31, %23 : vector<8x128xf32>
    %33 = arith.mulf %32, %30 : vector<8x128xf32>
    %34 = arith.mulf %23, %4 : vector<8x128xf32>
    %35 = arith.addf %33, %34 : vector<8x128xf32>
    %cst_12 = arith.constant dense<0.000000e+00> : vector<8x128xf32>
    %36 = tpu.matmul %35, %2, %cst_12 {dimension_numbers = #tpu.dot_dimension_numbers<[1], [0], [0], [1], [0, 0, 1, 1], [], []>} : vector<8x128xf32>, vector<128x128xf32>, vector<8x128xf32> -> vector<8x128xf32>
    %37 = vector.broadcast %3 : vector<1x128xf32> to vector<8x128xf32>
    %38 = arith.addf %36, %37 : vector<8x128xf32>
    %cst_13 = arith.constant dense<0xFF800000> : vector<8xf32>
    %39 = vector.multi_reduction <maximumf>, %38, %cst_13 [1] : vector<8x128xf32> to vector<8xf32>
    %40 = vector.shape_cast %39 : vector<8xf32> to vector<8x1xf32>
    %41 = vector.broadcast %40 : vector<8x1xf32> to vector<8x128xf32>
    %42 = arith.cmpf oge, %38, %41 : vector<8x128xf32>
    %c128_i32 = arith.constant 128 : i32
    %43 = vector.broadcast %c128_i32 : i32 to vector<8x128xi32>
    %44 = arith.select %42, %5, %43 : vector<8x128xi1>, vector<8x128xi32>
    %cst_14 = arith.constant dense<2147483647> : vector<8xi32>
    %45 = vector.multi_reduction <minsi>, %44, %cst_14 [1] : vector<8x128xi32> to vector<8xi32>
    %46 = vector.shape_cast %45 : vector<8xi32> to vector<8x1xi32>
    %47 = vector.broadcast %46 : vector<8x1xi32> to vector<8x128xi32>
    %48 = arith.cmpi eq, %5, %47 : vector<8x128xi32>
    %49 = arith.extui %48 : vector<8x128xi1> to vector<8x128xi32>
    %50 = arith.sitofp %49 : vector<8x128xi32> to vector<8x128xf32>
    %51 = tpu.concatenate %50, %35 in 1 : vector<8x128xf32>, vector<8x128xf32> -> vector<8x256xf32>
    %cst_15 = arith.constant dense<0.000000e+00> : vector<8x512xf32>
    %52 = tpu.matmul %51, %0, %cst_15 {dimension_numbers = #tpu.dot_dimension_numbers<[1], [0], [0], [1], [0, 0, 1, 1], [], []>} : vector<8x256xf32>, vector<256x512xf32>, vector<8x512xf32> -> vector<8x512xf32>
    %53 = vector.extract_strided_slice %52 {offsets = [0, 0], sizes = [8, 128], strides = [1, 1]} : vector<8x512xf32> to vector<8x128xf32>
    %54 = arith.negf %53 : vector<8x128xf32>
    %55 = math.exp %54 : vector<8x128xf32>
    %cst_16 = arith.constant 1.000000e+00 : f32
    %56 = vector.broadcast %cst_16 : f32 to vector<8x128xf32>
    %57 = arith.addf %56, %55 : vector<8x128xf32>
    %58 = arith.divf %56, %57 : vector<8x128xf32>
    %59 = vector.extract_strided_slice %52 {offsets = [0, 128], sizes = [8, 128], strides = [1, 1]} : vector<8x512xf32> to vector<8x128xf32>
    %60 = arith.negf %59 : vector<8x128xf32>
    %61 = math.exp %60 : vector<8x128xf32>
    %cst_17 = arith.constant 1.000000e+00 : f32
    %62 = vector.broadcast %cst_17 : f32 to vector<8x128xf32>
    %63 = arith.addf %62, %61 : vector<8x128xf32>
    %64 = arith.divf %62, %63 : vector<8x128xf32>
    %65 = vector.extract_strided_slice %52 {offsets = [0, 256], sizes = [8, 128], strides = [1, 1]} : vector<8x512xf32> to vector<8x128xf32>
    %66 = vector.extract_strided_slice %52 {offsets = [0, 384], sizes = [8, 128], strides = [1, 1]} : vector<8x512xf32> to vector<8x128xf32>
    %67 = vector.broadcast %1 : vector<1x128xf32> to vector<8x128xf32>
    %68 = arith.addf %66, %67 : vector<8x128xf32>
    %69 = arith.mulf %58, %68 : vector<8x128xf32>
    %70 = arith.addf %65, %69 : vector<8x128xf32>
    %71 = math.tanh %70 : vector<8x128xf32>
    %cst_18 = arith.constant 1.000000e+00 : f32
    %72 = vector.broadcast %cst_18 : f32 to vector<8x128xf32>
    %73 = arith.subf %72, %64 : vector<8x128xf32>
    %74 = arith.mulf %73, %71 : vector<8x128xf32>
    %75 = arith.mulf %64, %35 : vector<8x128xf32>
    %76 = arith.addf %74, %75 : vector<8x128xf32>
    %cst_19 = arith.constant dense<0.000000e+00> : vector<8x128xf32>
    %77 = tpu.matmul %76, %2, %cst_19 {dimension_numbers = #tpu.dot_dimension_numbers<[1], [0], [0], [1], [0, 0, 1, 1], [], []>} : vector<8x128xf32>, vector<128x128xf32>, vector<8x128xf32> -> vector<8x128xf32>
    %78 = vector.broadcast %3 : vector<1x128xf32> to vector<8x128xf32>
    %79 = arith.addf %77, %78 : vector<8x128xf32>
    %cst_20 = arith.constant dense<0xFF800000> : vector<8xf32>
    %80 = vector.multi_reduction <maximumf>, %79, %cst_20 [1] : vector<8x128xf32> to vector<8xf32>
    %81 = vector.shape_cast %80 : vector<8xf32> to vector<8x1xf32>
    %82 = vector.broadcast %81 : vector<8x1xf32> to vector<8x128xf32>
    %83 = arith.cmpf oge, %79, %82 : vector<8x128xf32>
    %c128_i32_21 = arith.constant 128 : i32
    %84 = vector.broadcast %c128_i32_21 : i32 to vector<8x128xi32>
    %85 = arith.select %83, %5, %84 : vector<8x128xi1>, vector<8x128xi32>
    %cst_22 = arith.constant dense<2147483647> : vector<8xi32>
    %86 = vector.multi_reduction <minsi>, %85, %cst_22 [1] : vector<8x128xi32> to vector<8xi32>
    %87 = vector.shape_cast %86 : vector<8xi32> to vector<8x1xi32>
    %88 = vector.broadcast %87 : vector<8x1xi32> to vector<8x128xi32>
    %89 = arith.cmpi eq, %5, %88 : vector<8x128xi32>
    %90 = arith.extui %89 : vector<8x128xi1> to vector<8x128xi32>
    %91 = arith.sitofp %90 : vector<8x128xi32> to vector<8x128xf32>
    %92 = tpu.concatenate %91, %76 in 1 : vector<8x128xf32>, vector<8x128xf32> -> vector<8x256xf32>
    %cst_23 = arith.constant dense<0.000000e+00> : vector<8x512xf32>
    %93 = tpu.matmul %92, %0, %cst_23 {dimension_numbers = #tpu.dot_dimension_numbers<[1], [0], [0], [1], [0, 0, 1, 1], [], []>} : vector<8x256xf32>, vector<256x512xf32>, vector<8x512xf32> -> vector<8x512xf32>
    %94 = vector.extract_strided_slice %93 {offsets = [0, 0], sizes = [8, 128], strides = [1, 1]} : vector<8x512xf32> to vector<8x128xf32>
    %95 = arith.negf %94 : vector<8x128xf32>
    %96 = math.exp %95 : vector<8x128xf32>
    %cst_24 = arith.constant 1.000000e+00 : f32
    %97 = vector.broadcast %cst_24 : f32 to vector<8x128xf32>
    %98 = arith.addf %97, %96 : vector<8x128xf32>
    %99 = arith.divf %97, %98 : vector<8x128xf32>
    %100 = vector.extract_strided_slice %93 {offsets = [0, 128], sizes = [8, 128], strides = [1, 1]} : vector<8x512xf32> to vector<8x128xf32>
    %101 = arith.negf %100 : vector<8x128xf32>
    %102 = math.exp %101 : vector<8x128xf32>
    %cst_25 = arith.constant 1.000000e+00 : f32
    %103 = vector.broadcast %cst_25 : f32 to vector<8x128xf32>
    %104 = arith.addf %103, %102 : vector<8x128xf32>
    %105 = arith.divf %103, %104 : vector<8x128xf32>
    %106 = vector.extract_strided_slice %93 {offsets = [0, 256], sizes = [8, 128], strides = [1, 1]} : vector<8x512xf32> to vector<8x128xf32>
    %107 = vector.extract_strided_slice %93 {offsets = [0, 384], sizes = [8, 128], strides = [1, 1]} : vector<8x512xf32> to vector<8x128xf32>
    %108 = vector.broadcast %1 : vector<1x128xf32> to vector<8x128xf32>
    %109 = arith.addf %107, %108 : vector<8x128xf32>
    %110 = arith.mulf %99, %109 : vector<8x128xf32>
    %111 = arith.addf %106, %110 : vector<8x128xf32>
    %112 = math.tanh %111 : vector<8x128xf32>
    %cst_26 = arith.constant 1.000000e+00 : f32
    %113 = vector.broadcast %cst_26 : f32 to vector<8x128xf32>
    %114 = arith.subf %113, %105 : vector<8x128xf32>
    %115 = arith.mulf %114, %112 : vector<8x128xf32>
    %116 = arith.mulf %105, %76 : vector<8x128xf32>
    %117 = arith.addf %115, %116 : vector<8x128xf32>
    %cst_27 = arith.constant dense<0.000000e+00> : vector<8x128xf32>
    %118 = tpu.matmul %117, %2, %cst_27 {dimension_numbers = #tpu.dot_dimension_numbers<[1], [0], [0], [1], [0, 0, 1, 1], [], []>} : vector<8x128xf32>, vector<128x128xf32>, vector<8x128xf32> -> vector<8x128xf32>
    %119 = vector.broadcast %3 : vector<1x128xf32> to vector<8x128xf32>
    %120 = arith.addf %118, %119 : vector<8x128xf32>
    %cst_28 = arith.constant dense<0xFF800000> : vector<8xf32>
    %121 = vector.multi_reduction <maximumf>, %120, %cst_28 [1] : vector<8x128xf32> to vector<8xf32>
    %122 = vector.shape_cast %121 : vector<8xf32> to vector<8x1xf32>
    %123 = vector.broadcast %122 : vector<8x1xf32> to vector<8x128xf32>
    %124 = arith.cmpf oge, %120, %123 : vector<8x128xf32>
    %c128_i32_29 = arith.constant 128 : i32
    %125 = vector.broadcast %c128_i32_29 : i32 to vector<8x128xi32>
    %126 = arith.select %124, %5, %125 : vector<8x128xi1>, vector<8x128xi32>
    %cst_30 = arith.constant dense<2147483647> : vector<8xi32>
    %127 = vector.multi_reduction <minsi>, %126, %cst_30 [1] : vector<8x128xi32> to vector<8xi32>
    %128 = vector.shape_cast %127 : vector<8xi32> to vector<8x1xi32>
    %129 = vector.broadcast %128 : vector<8x1xi32> to vector<8x128xi32>
    %130 = arith.cmpi eq, %5, %129 : vector<8x128xi32>
    %131 = arith.extui %130 : vector<8x128xi1> to vector<8x128xi32>
    %132 = arith.sitofp %131 : vector<8x128xi32> to vector<8x128xf32>
    %133 = tpu.concatenate %132, %117 in 1 : vector<8x128xf32>, vector<8x128xf32> -> vector<8x256xf32>
    %cst_31 = arith.constant dense<0.000000e+00> : vector<8x512xf32>
    %134 = tpu.matmul %133, %0, %cst_31 {dimension_numbers = #tpu.dot_dimension_numbers<[1], [0], [0], [1], [0, 0, 1, 1], [], []>} : vector<8x256xf32>, vector<256x512xf32>, vector<8x512xf32> -> vector<8x512xf32>
    %135 = vector.extract_strided_slice %134 {offsets = [0, 0], sizes = [8, 128], strides = [1, 1]} : vector<8x512xf32> to vector<8x128xf32>
    %136 = arith.negf %135 : vector<8x128xf32>
    %137 = math.exp %136 : vector<8x128xf32>
    %cst_32 = arith.constant 1.000000e+00 : f32
    %138 = vector.broadcast %cst_32 : f32 to vector<8x128xf32>
    %139 = arith.addf %138, %137 : vector<8x128xf32>
    %140 = arith.divf %138, %139 : vector<8x128xf32>
    %141 = vector.extract_strided_slice %134 {offsets = [0, 128], sizes = [8, 128], strides = [1, 1]} : vector<8x512xf32> to vector<8x128xf32>
    %142 = arith.negf %141 : vector<8x128xf32>
    %143 = math.exp %142 : vector<8x128xf32>
    %cst_33 = arith.constant 1.000000e+00 : f32
    %144 = vector.broadcast %cst_33 : f32 to vector<8x128xf32>
    %145 = arith.addf %144, %143 : vector<8x128xf32>
    %146 = arith.divf %144, %145 : vector<8x128xf32>
    %147 = vector.extract_strided_slice %134 {offsets = [0, 256], sizes = [8, 128], strides = [1, 1]} : vector<8x512xf32> to vector<8x128xf32>
    %148 = vector.extract_strided_slice %134 {offsets = [0, 384], sizes = [8, 128], strides = [1, 1]} : vector<8x512xf32> to vector<8x128xf32>
    %149 = vector.broadcast %1 : vector<1x128xf32> to vector<8x128xf32>
    %150 = arith.addf %148, %149 : vector<8x128xf32>
    %151 = arith.mulf %140, %150 : vector<8x128xf32>
    %152 = arith.addf %147, %151 : vector<8x128xf32>
    %153 = math.tanh %152 : vector<8x128xf32>
    %cst_34 = arith.constant 1.000000e+00 : f32
    %154 = vector.broadcast %cst_34 : f32 to vector<8x128xf32>
    %155 = arith.subf %154, %146 : vector<8x128xf32>
    %156 = arith.mulf %155, %153 : vector<8x128xf32>
    %157 = arith.mulf %146, %117 : vector<8x128xf32>
    %158 = arith.addf %156, %157 : vector<8x128xf32>
    %cst_35 = arith.constant dense<0.000000e+00> : vector<8x128xf32>
    %159 = tpu.matmul %158, %2, %cst_35 {dimension_numbers = #tpu.dot_dimension_numbers<[1], [0], [0], [1], [0, 0, 1, 1], [], []>} : vector<8x128xf32>, vector<128x128xf32>, vector<8x128xf32> -> vector<8x128xf32>
    %160 = vector.broadcast %3 : vector<1x128xf32> to vector<8x128xf32>
    %161 = arith.addf %159, %160 : vector<8x128xf32>
    %cst_36 = arith.constant dense<0xFF800000> : vector<8xf32>
    %162 = vector.multi_reduction <maximumf>, %161, %cst_36 [1] : vector<8x128xf32> to vector<8xf32>
    %163 = vector.shape_cast %162 : vector<8xf32> to vector<8x1xf32>
    %164 = vector.broadcast %163 : vector<8x1xf32> to vector<8x128xf32>
    %165 = arith.cmpf oge, %161, %164 : vector<8x128xf32>
    %c128_i32_37 = arith.constant 128 : i32
    %166 = vector.broadcast %c128_i32_37 : i32 to vector<8x128xi32>
    %167 = arith.select %165, %5, %166 : vector<8x128xi1>, vector<8x128xi32>
    %cst_38 = arith.constant dense<2147483647> : vector<8xi32>
    %168 = vector.multi_reduction <minsi>, %167, %cst_38 [1] : vector<8x128xi32> to vector<8xi32>
    %169 = vector.shape_cast %168 : vector<8xi32> to vector<8x1xi32>
    %170 = vector.broadcast %169 : vector<8x1xi32> to vector<8x128xi32>
    %171 = arith.cmpi eq, %5, %170 : vector<8x128xi32>
    %172 = arith.extui %171 : vector<8x128xi1> to vector<8x128xi32>
    %173 = arith.sitofp %172 : vector<8x128xi32> to vector<8x128xf32>
    %174 = tpu.concatenate %173, %158 in 1 : vector<8x128xf32>, vector<8x128xf32> -> vector<8x256xf32>
    %cst_39 = arith.constant dense<0.000000e+00> : vector<8x512xf32>
    %175 = tpu.matmul %174, %0, %cst_39 {dimension_numbers = #tpu.dot_dimension_numbers<[1], [0], [0], [1], [0, 0, 1, 1], [], []>} : vector<8x256xf32>, vector<256x512xf32>, vector<8x512xf32> -> vector<8x512xf32>
    %176 = vector.extract_strided_slice %175 {offsets = [0, 0], sizes = [8, 128], strides = [1, 1]} : vector<8x512xf32> to vector<8x128xf32>
    %177 = arith.negf %176 : vector<8x128xf32>
    %178 = math.exp %177 : vector<8x128xf32>
    %cst_40 = arith.constant 1.000000e+00 : f32
    %179 = vector.broadcast %cst_40 : f32 to vector<8x128xf32>
    %180 = arith.addf %179, %178 : vector<8x128xf32>
    %181 = arith.divf %179, %180 : vector<8x128xf32>
    %182 = vector.extract_strided_slice %175 {offsets = [0, 128], sizes = [8, 128], strides = [1, 1]} : vector<8x512xf32> to vector<8x128xf32>
    %183 = arith.negf %182 : vector<8x128xf32>
    %184 = math.exp %183 : vector<8x128xf32>
    %cst_41 = arith.constant 1.000000e+00 : f32
    %185 = vector.broadcast %cst_41 : f32 to vector<8x128xf32>
    %186 = arith.addf %185, %184 : vector<8x128xf32>
    %187 = arith.divf %185, %186 : vector<8x128xf32>
    %188 = vector.extract_strided_slice %175 {offsets = [0, 256], sizes = [8, 128], strides = [1, 1]} : vector<8x512xf32> to vector<8x128xf32>
    %189 = vector.extract_strided_slice %175 {offsets = [0, 384], sizes = [8, 128], strides = [1, 1]} : vector<8x512xf32> to vector<8x128xf32>
    %190 = vector.broadcast %1 : vector<1x128xf32> to vector<8x128xf32>
    %191 = arith.addf %189, %190 : vector<8x128xf32>
    %192 = arith.mulf %181, %191 : vector<8x128xf32>
    %193 = arith.addf %188, %192 : vector<8x128xf32>
    %194 = math.tanh %193 : vector<8x128xf32>
    %cst_42 = arith.constant 1.000000e+00 : f32
    %195 = vector.broadcast %cst_42 : f32 to vector<8x128xf32>
    %196 = arith.subf %195, %187 : vector<8x128xf32>
    %197 = arith.mulf %196, %194 : vector<8x128xf32>
    %198 = arith.mulf %187, %158 : vector<8x128xf32>
    %199 = arith.addf %197, %198 : vector<8x128xf32>
    %cst_43 = arith.constant dense<0.000000e+00> : vector<8x128xf32>
    %200 = tpu.matmul %199, %2, %cst_43 {dimension_numbers = #tpu.dot_dimension_numbers<[1], [0], [0], [1], [0, 0, 1, 1], [], []>} : vector<8x128xf32>, vector<128x128xf32>, vector<8x128xf32> -> vector<8x128xf32>
    %201 = vector.broadcast %3 : vector<1x128xf32> to vector<8x128xf32>
    %202 = arith.addf %200, %201 : vector<8x128xf32>
    %cst_44 = arith.constant dense<0xFF800000> : vector<8xf32>
    %203 = vector.multi_reduction <maximumf>, %202, %cst_44 [1] : vector<8x128xf32> to vector<8xf32>
    %204 = vector.shape_cast %203 : vector<8xf32> to vector<8x1xf32>
    %205 = vector.broadcast %204 : vector<8x1xf32> to vector<8x128xf32>
    %206 = arith.cmpf oge, %202, %205 : vector<8x128xf32>
    %c128_i32_45 = arith.constant 128 : i32
    %207 = vector.broadcast %c128_i32_45 : i32 to vector<8x128xi32>
    %208 = arith.select %206, %5, %207 : vector<8x128xi1>, vector<8x128xi32>
    %cst_46 = arith.constant dense<2147483647> : vector<8xi32>
    %209 = vector.multi_reduction <minsi>, %208, %cst_46 [1] : vector<8x128xi32> to vector<8xi32>
    %210 = vector.shape_cast %209 : vector<8xi32> to vector<8x1xi32>
    %211 = vector.broadcast %210 : vector<8x1xi32> to vector<8x128xi32>
    %212 = arith.cmpi eq, %5, %211 : vector<8x128xi32>
    %213 = arith.extui %212 : vector<8x128xi1> to vector<8x128xi32>
    %214 = arith.sitofp %213 : vector<8x128xi32> to vector<8x128xf32>
    %215 = tpu.concatenate %214, %199 in 1 : vector<8x128xf32>, vector<8x128xf32> -> vector<8x256xf32>
    %cst_47 = arith.constant dense<0.000000e+00> : vector<8x512xf32>
    %216 = tpu.matmul %215, %0, %cst_47 {dimension_numbers = #tpu.dot_dimension_numbers<[1], [0], [0], [1], [0, 0, 1, 1], [], []>} : vector<8x256xf32>, vector<256x512xf32>, vector<8x512xf32> -> vector<8x512xf32>
    %217 = vector.extract_strided_slice %216 {offsets = [0, 0], sizes = [8, 128], strides = [1, 1]} : vector<8x512xf32> to vector<8x128xf32>
    %218 = arith.negf %217 : vector<8x128xf32>
    %219 = math.exp %218 : vector<8x128xf32>
    %cst_48 = arith.constant 1.000000e+00 : f32
    %220 = vector.broadcast %cst_48 : f32 to vector<8x128xf32>
    %221 = arith.addf %220, %219 : vector<8x128xf32>
    %222 = arith.divf %220, %221 : vector<8x128xf32>
    %223 = vector.extract_strided_slice %216 {offsets = [0, 128], sizes = [8, 128], strides = [1, 1]} : vector<8x512xf32> to vector<8x128xf32>
    %224 = arith.negf %223 : vector<8x128xf32>
    %225 = math.exp %224 : vector<8x128xf32>
    %cst_49 = arith.constant 1.000000e+00 : f32
    %226 = vector.broadcast %cst_49 : f32 to vector<8x128xf32>
    %227 = arith.addf %226, %225 : vector<8x128xf32>
    %228 = arith.divf %226, %227 : vector<8x128xf32>
    %229 = vector.extract_strided_slice %216 {offsets = [0, 256], sizes = [8, 128], strides = [1, 1]} : vector<8x512xf32> to vector<8x128xf32>
    %230 = vector.extract_strided_slice %216 {offsets = [0, 384], sizes = [8, 128], strides = [1, 1]} : vector<8x512xf32> to vector<8x128xf32>
    %231 = vector.broadcast %1 : vector<1x128xf32> to vector<8x128xf32>
    %232 = arith.addf %230, %231 : vector<8x128xf32>
    %233 = arith.mulf %222, %232 : vector<8x128xf32>
    %234 = arith.addf %229, %233 : vector<8x128xf32>
    %235 = math.tanh %234 : vector<8x128xf32>
    %cst_50 = arith.constant 1.000000e+00 : f32
    %236 = vector.broadcast %cst_50 : f32 to vector<8x128xf32>
    %237 = arith.subf %236, %228 : vector<8x128xf32>
    %238 = arith.mulf %237, %235 : vector<8x128xf32>
    %239 = arith.mulf %228, %199 : vector<8x128xf32>
    %240 = arith.addf %238, %239 : vector<8x128xf32>
    %cst_51 = arith.constant dense<0.000000e+00> : vector<8x128xf32>
    %241 = tpu.matmul %240, %2, %cst_51 {dimension_numbers = #tpu.dot_dimension_numbers<[1], [0], [0], [1], [0, 0, 1, 1], [], []>} : vector<8x128xf32>, vector<128x128xf32>, vector<8x128xf32> -> vector<8x128xf32>
    %242 = vector.broadcast %3 : vector<1x128xf32> to vector<8x128xf32>
    %243 = arith.addf %241, %242 : vector<8x128xf32>
    %cst_52 = arith.constant dense<0xFF800000> : vector<8xf32>
    %244 = vector.multi_reduction <maximumf>, %243, %cst_52 [1] : vector<8x128xf32> to vector<8xf32>
    %245 = vector.shape_cast %244 : vector<8xf32> to vector<8x1xf32>
    %246 = vector.broadcast %245 : vector<8x1xf32> to vector<8x128xf32>
    %247 = arith.cmpf oge, %243, %246 : vector<8x128xf32>
    %c128_i32_53 = arith.constant 128 : i32
    %248 = vector.broadcast %c128_i32_53 : i32 to vector<8x128xi32>
    %249 = arith.select %247, %5, %248 : vector<8x128xi1>, vector<8x128xi32>
    %cst_54 = arith.constant dense<2147483647> : vector<8xi32>
    %250 = vector.multi_reduction <minsi>, %249, %cst_54 [1] : vector<8x128xi32> to vector<8xi32>
    %251 = vector.shape_cast %250 : vector<8xi32> to vector<8x1xi32>
    %252 = vector.broadcast %251 : vector<8x1xi32> to vector<8x128xi32>
    %253 = arith.cmpi eq, %5, %252 : vector<8x128xi32>
    %254 = arith.extui %253 : vector<8x128xi1> to vector<8x128xi32>
    %255 = arith.sitofp %254 : vector<8x128xi32> to vector<8x128xf32>
    %256 = tpu.concatenate %255, %240 in 1 : vector<8x128xf32>, vector<8x128xf32> -> vector<8x256xf32>
    %cst_55 = arith.constant dense<0.000000e+00> : vector<8x512xf32>
    %257 = tpu.matmul %256, %0, %cst_55 {dimension_numbers = #tpu.dot_dimension_numbers<[1], [0], [0], [1], [0, 0, 1, 1], [], []>} : vector<8x256xf32>, vector<256x512xf32>, vector<8x512xf32> -> vector<8x512xf32>
    %258 = vector.extract_strided_slice %257 {offsets = [0, 0], sizes = [8, 128], strides = [1, 1]} : vector<8x512xf32> to vector<8x128xf32>
    %259 = arith.negf %258 : vector<8x128xf32>
    %260 = math.exp %259 : vector<8x128xf32>
    %cst_56 = arith.constant 1.000000e+00 : f32
    %261 = vector.broadcast %cst_56 : f32 to vector<8x128xf32>
    %262 = arith.addf %261, %260 : vector<8x128xf32>
    %263 = arith.divf %261, %262 : vector<8x128xf32>
    %264 = vector.extract_strided_slice %257 {offsets = [0, 128], sizes = [8, 128], strides = [1, 1]} : vector<8x512xf32> to vector<8x128xf32>
    %265 = arith.negf %264 : vector<8x128xf32>
    %266 = math.exp %265 : vector<8x128xf32>
    %cst_57 = arith.constant 1.000000e+00 : f32
    %267 = vector.broadcast %cst_57 : f32 to vector<8x128xf32>
    %268 = arith.addf %267, %266 : vector<8x128xf32>
    %269 = arith.divf %267, %268 : vector<8x128xf32>
    %270 = vector.extract_strided_slice %257 {offsets = [0, 256], sizes = [8, 128], strides = [1, 1]} : vector<8x512xf32> to vector<8x128xf32>
    %271 = vector.extract_strided_slice %257 {offsets = [0, 384], sizes = [8, 128], strides = [1, 1]} : vector<8x512xf32> to vector<8x128xf32>
    %272 = vector.broadcast %1 : vector<1x128xf32> to vector<8x128xf32>
    %273 = arith.addf %271, %272 : vector<8x128xf32>
    %274 = arith.mulf %263, %273 : vector<8x128xf32>
    %275 = arith.addf %270, %274 : vector<8x128xf32>
    %276 = math.tanh %275 : vector<8x128xf32>
    %cst_58 = arith.constant 1.000000e+00 : f32
    %277 = vector.broadcast %cst_58 : f32 to vector<8x128xf32>
    %278 = arith.subf %277, %269 : vector<8x128xf32>
    %279 = arith.mulf %278, %276 : vector<8x128xf32>
    %280 = arith.mulf %269, %240 : vector<8x128xf32>
    %281 = arith.addf %279, %280 : vector<8x128xf32>
    %cst_59 = arith.constant dense<0.000000e+00> : vector<8x128xf32>
    %282 = tpu.matmul %281, %2, %cst_59 {dimension_numbers = #tpu.dot_dimension_numbers<[1], [0], [0], [1], [0, 0, 1, 1], [], []>} : vector<8x128xf32>, vector<128x128xf32>, vector<8x128xf32> -> vector<8x128xf32>
    %283 = vector.broadcast %3 : vector<1x128xf32> to vector<8x128xf32>
    %284 = arith.addf %282, %283 : vector<8x128xf32>
    %cst_60 = arith.constant dense<0xFF800000> : vector<8xf32>
    %285 = vector.multi_reduction <maximumf>, %284, %cst_60 [1] : vector<8x128xf32> to vector<8xf32>
    %286 = vector.shape_cast %285 : vector<8xf32> to vector<8x1xf32>
    %287 = vector.broadcast %286 : vector<8x1xf32> to vector<8x128xf32>
    %288 = arith.cmpf oge, %284, %287 : vector<8x128xf32>
    %c128_i32_61 = arith.constant 128 : i32
    %289 = vector.broadcast %c128_i32_61 : i32 to vector<8x128xi32>
    %290 = arith.select %288, %5, %289 : vector<8x128xi1>, vector<8x128xi32>
    %cst_62 = arith.constant dense<2147483647> : vector<8xi32>
    %291 = vector.multi_reduction <minsi>, %290, %cst_62 [1] : vector<8x128xi32> to vector<8xi32>
    %292 = vector.shape_cast %291 : vector<8xi32> to vector<8x1xi32>
    %293 = vector.broadcast %292 : vector<8x1xi32> to vector<8x128xi32>
    %294 = arith.cmpi eq, %5, %293 : vector<8x128xi32>
    %295 = arith.extui %294 : vector<8x128xi1> to vector<8x128xi32>
    %296 = arith.sitofp %295 : vector<8x128xi32> to vector<8x128xf32>
    %297 = tpu.concatenate %296, %281 in 1 : vector<8x128xf32>, vector<8x128xf32> -> vector<8x256xf32>
    %cst_63 = arith.constant dense<0.000000e+00> : vector<8x512xf32>
    %298 = tpu.matmul %297, %0, %cst_63 {dimension_numbers = #tpu.dot_dimension_numbers<[1], [0], [0], [1], [0, 0, 1, 1], [], []>} : vector<8x256xf32>, vector<256x512xf32>, vector<8x512xf32> -> vector<8x512xf32>
    %299 = vector.extract_strided_slice %298 {offsets = [0, 0], sizes = [8, 128], strides = [1, 1]} : vector<8x512xf32> to vector<8x128xf32>
    %300 = arith.negf %299 : vector<8x128xf32>
    %301 = math.exp %300 : vector<8x128xf32>
    %cst_64 = arith.constant 1.000000e+00 : f32
    %302 = vector.broadcast %cst_64 : f32 to vector<8x128xf32>
    %303 = arith.addf %302, %301 : vector<8x128xf32>
    %304 = arith.divf %302, %303 : vector<8x128xf32>
    %305 = vector.extract_strided_slice %298 {offsets = [0, 128], sizes = [8, 128], strides = [1, 1]} : vector<8x512xf32> to vector<8x128xf32>
    %306 = arith.negf %305 : vector<8x128xf32>
    %307 = math.exp %306 : vector<8x128xf32>
    %cst_65 = arith.constant 1.000000e+00 : f32
    %308 = vector.broadcast %cst_65 : f32 to vector<8x128xf32>
    %309 = arith.addf %308, %307 : vector<8x128xf32>
    %310 = arith.divf %308, %309 : vector<8x128xf32>
    %311 = vector.extract_strided_slice %298 {offsets = [0, 256], sizes = [8, 128], strides = [1, 1]} : vector<8x512xf32> to vector<8x128xf32>
    %312 = vector.extract_strided_slice %298 {offsets = [0, 384], sizes = [8, 128], strides = [1, 1]} : vector<8x512xf32> to vector<8x128xf32>
    %313 = vector.broadcast %1 : vector<1x128xf32> to vector<8x128xf32>
    %314 = arith.addf %312, %313 : vector<8x128xf32>
    %315 = arith.mulf %304, %314 : vector<8x128xf32>
    %316 = arith.addf %311, %315 : vector<8x128xf32>
    %317 = math.tanh %316 : vector<8x128xf32>
    %cst_66 = arith.constant 1.000000e+00 : f32
    %318 = vector.broadcast %cst_66 : f32 to vector<8x128xf32>
    %319 = arith.subf %318, %310 : vector<8x128xf32>
    %320 = arith.mulf %319, %317 : vector<8x128xf32>
    %321 = arith.mulf %310, %281 : vector<8x128xf32>
    %322 = arith.addf %320, %321 : vector<8x128xf32>
    %cst_67 = arith.constant dense<0.000000e+00> : vector<8x128xf32>
    %323 = tpu.matmul %322, %2, %cst_67 {dimension_numbers = #tpu.dot_dimension_numbers<[1], [0], [0], [1], [0, 0, 1, 1], [], []>} : vector<8x128xf32>, vector<128x128xf32>, vector<8x128xf32> -> vector<8x128xf32>
    %324 = vector.broadcast %3 : vector<1x128xf32> to vector<8x128xf32>
    %325 = arith.addf %323, %324 : vector<8x128xf32>
    %cst_68 = arith.constant dense<0xFF800000> : vector<8xf32>
    %326 = vector.multi_reduction <maximumf>, %325, %cst_68 [1] : vector<8x128xf32> to vector<8xf32>
    %327 = vector.shape_cast %326 : vector<8xf32> to vector<8x1xf32>
    %328 = vector.broadcast %327 : vector<8x1xf32> to vector<8x128xf32>
    %329 = arith.cmpf oge, %325, %328 : vector<8x128xf32>
    %c128_i32_69 = arith.constant 128 : i32
    %330 = vector.broadcast %c128_i32_69 : i32 to vector<8x128xi32>
    %331 = arith.select %329, %5, %330 : vector<8x128xi1>, vector<8x128xi32>
    %cst_70 = arith.constant dense<2147483647> : vector<8xi32>
    %332 = vector.multi_reduction <minsi>, %331, %cst_70 [1] : vector<8x128xi32> to vector<8xi32>
    %333 = vector.shape_cast %332 : vector<8xi32> to vector<8x1xi32>
    %334 = vector.broadcast %333 : vector<8x1xi32> to vector<8x128xi32>
    %335 = arith.cmpi eq, %5, %334 : vector<8x128xi32>
    %336 = arith.extui %335 : vector<8x128xi1> to vector<8x128xi32>
    %337 = arith.sitofp %336 : vector<8x128xi32> to vector<8x128xf32>
    %338 = tpu.concatenate %337, %322 in 1 : vector<8x128xf32>, vector<8x128xf32> -> vector<8x256xf32>
    %cst_71 = arith.constant dense<0.000000e+00> : vector<8x512xf32>
    %339 = tpu.matmul %338, %0, %cst_71 {dimension_numbers = #tpu.dot_dimension_numbers<[1], [0], [0], [1], [0, 0, 1, 1], [], []>} : vector<8x256xf32>, vector<256x512xf32>, vector<8x512xf32> -> vector<8x512xf32>
    %340 = vector.extract_strided_slice %339 {offsets = [0, 0], sizes = [8, 128], strides = [1, 1]} : vector<8x512xf32> to vector<8x128xf32>
    %341 = arith.negf %340 : vector<8x128xf32>
    %342 = math.exp %341 : vector<8x128xf32>
    %cst_72 = arith.constant 1.000000e+00 : f32
    %343 = vector.broadcast %cst_72 : f32 to vector<8x128xf32>
    %344 = arith.addf %343, %342 : vector<8x128xf32>
    %345 = arith.divf %343, %344 : vector<8x128xf32>
    %346 = vector.extract_strided_slice %339 {offsets = [0, 128], sizes = [8, 128], strides = [1, 1]} : vector<8x512xf32> to vector<8x128xf32>
    %347 = arith.negf %346 : vector<8x128xf32>
    %348 = math.exp %347 : vector<8x128xf32>
    %cst_73 = arith.constant 1.000000e+00 : f32
    %349 = vector.broadcast %cst_73 : f32 to vector<8x128xf32>
    %350 = arith.addf %349, %348 : vector<8x128xf32>
    %351 = arith.divf %349, %350 : vector<8x128xf32>
    %352 = vector.extract_strided_slice %339 {offsets = [0, 256], sizes = [8, 128], strides = [1, 1]} : vector<8x512xf32> to vector<8x128xf32>
    %353 = vector.extract_strided_slice %339 {offsets = [0, 384], sizes = [8, 128], strides = [1, 1]} : vector<8x512xf32> to vector<8x128xf32>
    %354 = vector.broadcast %1 : vector<1x128xf32> to vector<8x128xf32>
    %355 = arith.addf %353, %354 : vector<8x128xf32>
    %356 = arith.mulf %345, %355 : vector<8x128xf32>
    %357 = arith.addf %352, %356 : vector<8x128xf32>
    %358 = math.tanh %357 : vector<8x128xf32>
    %cst_74 = arith.constant 1.000000e+00 : f32
    %359 = vector.broadcast %cst_74 : f32 to vector<8x128xf32>
    %360 = arith.subf %359, %351 : vector<8x128xf32>
    %361 = arith.mulf %360, %358 : vector<8x128xf32>
    %362 = arith.mulf %351, %322 : vector<8x128xf32>
    %363 = arith.addf %361, %362 : vector<8x128xf32>
    %cst_75 = arith.constant dense<0.000000e+00> : vector<8x128xf32>
    %364 = tpu.matmul %363, %2, %cst_75 {dimension_numbers = #tpu.dot_dimension_numbers<[1], [0], [0], [1], [0, 0, 1, 1], [], []>} : vector<8x128xf32>, vector<128x128xf32>, vector<8x128xf32> -> vector<8x128xf32>
    %365 = vector.broadcast %3 : vector<1x128xf32> to vector<8x128xf32>
    %366 = arith.addf %364, %365 : vector<8x128xf32>
    %cst_76 = arith.constant dense<0xFF800000> : vector<8xf32>
    %367 = vector.multi_reduction <maximumf>, %366, %cst_76 [1] : vector<8x128xf32> to vector<8xf32>
    %368 = vector.shape_cast %367 : vector<8xf32> to vector<8x1xf32>
    %369 = vector.broadcast %368 : vector<8x1xf32> to vector<8x128xf32>
    %370 = arith.cmpf oge, %366, %369 : vector<8x128xf32>
    %c128_i32_77 = arith.constant 128 : i32
    %371 = vector.broadcast %c128_i32_77 : i32 to vector<8x128xi32>
    %372 = arith.select %370, %5, %371 : vector<8x128xi1>, vector<8x128xi32>
    %cst_78 = arith.constant dense<2147483647> : vector<8xi32>
    %373 = vector.multi_reduction <minsi>, %372, %cst_78 [1] : vector<8x128xi32> to vector<8xi32>
    %374 = vector.shape_cast %373 : vector<8xi32> to vector<8x1xi32>
    %375 = vector.broadcast %374 : vector<8x1xi32> to vector<8x128xi32>
    %376 = arith.cmpi eq, %5, %375 : vector<8x128xi32>
    %377 = arith.extui %376 : vector<8x128xi1> to vector<8x128xi32>
    %378 = arith.sitofp %377 : vector<8x128xi32> to vector<8x128xf32>
    %379 = tpu.concatenate %378, %363 in 1 : vector<8x128xf32>, vector<8x128xf32> -> vector<8x256xf32>
    %cst_79 = arith.constant dense<0.000000e+00> : vector<8x512xf32>
    %380 = tpu.matmul %379, %0, %cst_79 {dimension_numbers = #tpu.dot_dimension_numbers<[1], [0], [0], [1], [0, 0, 1, 1], [], []>} : vector<8x256xf32>, vector<256x512xf32>, vector<8x512xf32> -> vector<8x512xf32>
    %381 = vector.extract_strided_slice %380 {offsets = [0, 0], sizes = [8, 128], strides = [1, 1]} : vector<8x512xf32> to vector<8x128xf32>
    %382 = arith.negf %381 : vector<8x128xf32>
    %383 = math.exp %382 : vector<8x128xf32>
    %cst_80 = arith.constant 1.000000e+00 : f32
    %384 = vector.broadcast %cst_80 : f32 to vector<8x128xf32>
    %385 = arith.addf %384, %383 : vector<8x128xf32>
    %386 = arith.divf %384, %385 : vector<8x128xf32>
    %387 = vector.extract_strided_slice %380 {offsets = [0, 128], sizes = [8, 128], strides = [1, 1]} : vector<8x512xf32> to vector<8x128xf32>
    %388 = arith.negf %387 : vector<8x128xf32>
    %389 = math.exp %388 : vector<8x128xf32>
    %cst_81 = arith.constant 1.000000e+00 : f32
    %390 = vector.broadcast %cst_81 : f32 to vector<8x128xf32>
    %391 = arith.addf %390, %389 : vector<8x128xf32>
    %392 = arith.divf %390, %391 : vector<8x128xf32>
    %393 = vector.extract_strided_slice %380 {offsets = [0, 256], sizes = [8, 128], strides = [1, 1]} : vector<8x512xf32> to vector<8x128xf32>
    %394 = vector.extract_strided_slice %380 {offsets = [0, 384], sizes = [8, 128], strides = [1, 1]} : vector<8x512xf32> to vector<8x128xf32>
    %395 = vector.broadcast %1 : vector<1x128xf32> to vector<8x128xf32>
    %396 = arith.addf %394, %395 : vector<8x128xf32>
    %397 = arith.mulf %386, %396 : vector<8x128xf32>
    %398 = arith.addf %393, %397 : vector<8x128xf32>
    %399 = math.tanh %398 : vector<8x128xf32>
    %cst_82 = arith.constant 1.000000e+00 : f32
    %400 = vector.broadcast %cst_82 : f32 to vector<8x128xf32>
    %401 = arith.subf %400, %392 : vector<8x128xf32>
    %402 = arith.mulf %401, %399 : vector<8x128xf32>
    %403 = arith.mulf %392, %363 : vector<8x128xf32>
    %404 = arith.addf %402, %403 : vector<8x128xf32>
    %cst_83 = arith.constant dense<0.000000e+00> : vector<8x128xf32>
    %405 = tpu.matmul %404, %2, %cst_83 {dimension_numbers = #tpu.dot_dimension_numbers<[1], [0], [0], [1], [0, 0, 1, 1], [], []>} : vector<8x128xf32>, vector<128x128xf32>, vector<8x128xf32> -> vector<8x128xf32>
    %406 = vector.broadcast %3 : vector<1x128xf32> to vector<8x128xf32>
    %407 = arith.addf %405, %406 : vector<8x128xf32>
    %408 = vector.shape_cast %38 : vector<8x128xf32> to vector<1x8x128xf32>
    %409 = vector.shape_cast %79 : vector<8x128xf32> to vector<1x8x128xf32>
    %410 = vector.shape_cast %120 : vector<8x128xf32> to vector<1x8x128xf32>
    %411 = vector.shape_cast %161 : vector<8x128xf32> to vector<1x8x128xf32>
    %412 = vector.shape_cast %202 : vector<8x128xf32> to vector<1x8x128xf32>
    %413 = vector.shape_cast %243 : vector<8x128xf32> to vector<1x8x128xf32>
    %414 = vector.shape_cast %284 : vector<8x128xf32> to vector<1x8x128xf32>
    %415 = vector.shape_cast %325 : vector<8x128xf32> to vector<1x8x128xf32>
    %416 = vector.shape_cast %366 : vector<8x128xf32> to vector<1x8x128xf32>
    %417 = vector.shape_cast %407 : vector<8x128xf32> to vector<1x8x128xf32>
    %418 = tpu.concatenate %408, %409, %410, %411, %412, %413, %414, %415, %416, %417 in 0 : vector<1x8x128xf32>, vector<1x8x128xf32>, vector<1x8x128xf32>, vector<1x8x128xf32>, vector<1x8x128xf32>, vector<1x8x128xf32>, vector<1x8x128xf32>, vector<1x8x128xf32>, vector<1x8x128xf32>, vector<1x8x128xf32> -> vector<10x8x128xf32>
    %cst_84 = arith.constant dense<0xFF800000> : vector<10x8xf32>
    %419 = vector.multi_reduction <maximumf>, %418, %cst_84 [2] : vector<10x8x128xf32> to vector<10x8xf32>
    %420 = vector.shape_cast %419 : vector<10x8xf32> to vector<10x8x1xf32>
    %421 = vector.broadcast %420 : vector<10x8x1xf32> to vector<10x8x128xf32>
    %422 = arith.subf %418, %421 : vector<10x8x128xf32>
    %423 = math.exp %422 : vector<10x8x128xf32>
    %cst_85 = arith.constant dense<0.000000e+00> : vector<10x8xf32>
    %424 = vector.multi_reduction <add>, %423, %cst_85 [2] : vector<10x8x128xf32> to vector<10x8xf32>
    %425 = vector.shape_cast %424 : vector<10x8xf32> to vector<10x8x1xf32>
    %426 = math.log %425 : vector<10x8x1xf32>
    %427 = arith.addf %420, %426 : vector<10x8x1xf32>
    %428 = vector.broadcast %427 : vector<10x8x1xf32> to vector<10x8x128xf32>
    %429 = arith.subf %418, %428 : vector<10x8x128xf32>
    %c0_86 = arith.constant 0 : index
    %c0_87 = arith.constant 0 : index
    %c0_88 = arith.constant 0 : index
    %430 = vector.load %arg5[%c0_86, %c0_87, %c0_88] : memref<10x8x128xf32, #tpu.memory_space<vmem>>, vector<10x8x128xf32>
    tpu.vector_store %arg5[%c0_86, %c0_87, %c0_88], %429 {strides = array<i32>} : memref<10x8x128xf32, #tpu.memory_space<vmem>>, vector<10x8x128xf32>,
    %c0_89 = arith.constant 0 : index
    %c0_90 = arith.constant 0 : index
    %431 = vector.load %arg6[%c0_89, %c0_90] : memref<8x128xf32, #tpu.memory_space<vmem>>, vector<8x128xf32>
    tpu.vector_store %arg6[%c0_89, %c0_90], %404 {strides = array<i32>} : memref<8x128xf32, #tpu.memory_space<vmem>>, vector<8x128xf32>,
    return
  }
}

</mosaic_0001>

<llo_original>
// kernel: decoder_rnn_forward.1
$region0: #{decoder_rnn_forward.1}
  #allocation0 [shape = 'u32[]', space=smem, size = 0x4, offset = 0x4, fixed_abs, tag = 'smem constant byte address 0x4 - core index']
  #allocation1 [shape = 'u32[144,128]{1,0:T(1,128)}', space=vmem, size = 0x12000, scoped, tag = 'internal scratch']
  %s0 = inlined_call_operand.vmem [shape: f32[256,512], index: 0, kind: input, shape index: {}]
  %s1 = inlined_call_operand.vmem [shape: f32[1,128], index: 1, kind: input, shape index: {}]
  %s2 = inlined_call_operand.vmem [shape: f32[128,128], index: 2, kind: input, shape index: {}]
  %s3 = inlined_call_operand.vmem [shape: f32[1,128], index: 3, kind: input, shape index: {}]
  %s4 = inlined_call_operand.vmem [shape: f32[8,128], index: 4, kind: input, shape index: {}]
  %s5 = inlined_call_operand.vmem [shape: f32[10,8,128], index: 5, kind: output, shape index: {0}]
  %s6 = inlined_call_operand.vmem [shape: f32[8,128], index: 6, kind: output, shape index: {1}]
  %7 = xla_tuple %s5, %s6
  %s8 = sld [smem:[#allocation0]]
  $region38: #{decoder_rnn_forward.1} parent=0
    _
  %s10 = ssub.s32 1, %s8
  %s11 = scalar_select 0, %s10, %s8
  // Predicated region
  $region2: #{decoder_rnn_forward.1} parent=0 // pred_check
    _
  $region3: #{decoder_rnn_forward.1} parent=0 // pred_check_branch
    %13 = sbr.rel (0) target = $region5
  $region4: #{decoder_rnn_forward.1} parent=0 // pred_region
    _
  $region5: #{decoder_rnn_forward.1} parent=0 // pred_fallthru
    _
  // Predicated region
  $region6: #{decoder_rnn_forward.1} parent=0 // pred_check
    _
  $region7: #{decoder_rnn_forward.1} parent=0 // pred_check_branch
    %15 = sbr.rel (0) target = $region9
  $region8: #{decoder_rnn_forward.1} parent=0 // pred_region
    _
  $region9: #{decoder_rnn_forward.1} parent=0 // pred_fallthru
    _
  // Predicated region
  $region10: #{decoder_rnn_forward.1} parent=0 // pred_check
    _
  $region11: #{decoder_rnn_forward.1} parent=0 // pred_check_branch
    %17 = sbr.rel (0) target = $region13
  $region12: #{decoder_rnn_forward.1} parent=0 // pred_region
    _
  $region13: #{decoder_rnn_forward.1} parent=0 // pred_fallthru
    _
  // Predicated region
  $region14: #{decoder_rnn_forward.1} parent=0 // pred_check
    _
  $region15: #{decoder_rnn_forward.1} parent=0 // pred_check_branch
    %19 = sbr.rel (0) target = $region17
  $region16: #{decoder_rnn_forward.1} parent=0 // pred_region
    _
  $region17: #{decoder_rnn_forward.1} parent=0 // pred_fallthru
    _
  // Predicated region
  $region18: #{decoder_rnn_forward.1} parent=0 // pred_check
    _
  $region19: #{decoder_rnn_forward.1} parent=0 // pred_check_branch
    %21 = sbr.rel (0) target = $region21
  $region20: #{decoder_rnn_forward.1} parent=0 // pred_region
    _
  $region21: #{decoder_rnn_forward.1} parent=0 // pred_fallthru
    _
  %v22 = vld [vmem:[%s0] sm:$0xff]
  %v23 = vld [vmem:[%s0 + $0x8] sm:$0xff]
  %v24 = vld [vmem:[%s0 + $0x10] sm:$0xff]
  %v25 = vld [vmem:[%s0 + $0x18] sm:$0xff]
  %v26 = vld [vmem:[%s0 + $0x20] sm:$0xff]
  %v27 = vld [vmem:[%s0 + $0x28] sm:$0xff]
  %v28 = vld [vmem:[%s0 + $0x30] sm:$0xff]
  %v29 = vld [vmem:[%s0 + $0x38] sm:$0xff]
  %v30 = vld [vmem:[%s0 + $0x40] sm:$0xff]
  %v31 = vld [vmem:[%s0 + $0x48] sm:$0xff]
  %v32 = vld [vmem:[%s0 + $0x50] sm:$0xff]
  %v33 = vld [vmem:[%s0 + $0x58] sm:$0xff]
  %v34 = vld [vmem:[%s0 + $0x60] sm:$0xff]
  %v35 = vld [vmem:[%s0 + $0x68] sm:$0xff]
  %v36 = vld [vmem:[%s0 + $0x70] sm:$0xff]
  %v37 = vld [vmem:[%s0 + $0x78] sm:$0xff]
  %v38 = vld [vmem:[%s0 + $0x80] sm:$0xff]
  %v39 = vld [vmem:[%s0 + $0x88] sm:$0xff]
  %v40 = vld [vmem:[%s0 + $0x90] sm:$0xff]
  %v41 = vld [vmem:[%s0 + $0x98] sm:$0xff]
  %v42 = vld [vmem:[%s0 + $0xa0] sm:$0xff]
  %v43 = vld [vmem:[%s0 + $0xa8] sm:$0xff]
  %v44 = vld [vmem:[%s0 + $0xb0] sm:$0xff]
  %v45 = vld [vmem:[%s0 + $0xb8] sm:$0xff]
  %v46 = vld [vmem:[%s0 + $0xc0] sm:$0xff]
  %v47 = vld [vmem:[%s0 + $0xc8] sm:$0xff]
  %v48 = vld [vmem:[%s0 + $0xd0] sm:$0xff]
  %v49 = vld [vmem:[%s0 + $0xd8] sm:$0xff]
  %v50 = vld [vmem:[%s0 + $0xe0] sm:$0xff]
  %v51 = vld [vmem:[%s0 + $0xe8] sm:$0xff]
  %v52 = vld [vmem:[%s0 + $0xf0] sm:$0xff]
  %v53 = vld [vmem:[%s0 + $0xf8] sm:$0xff]
  %v54 = vld [vmem:[%s0 + $0x100] sm:$0xff]
  %v55 = vld [vmem:[%s0 + $0x108] sm:$0xff]
  %v56 = vld [vmem:[%s0 + $0x110] sm:$0xff]
  %v57 = vld [vmem:[%s0 + $0x118] sm:$0xff]
  %v58 = vld [vmem:[%s0 + $0x120] sm:$0xff]
  %v59 = vld [vmem:[%s0 + $0x128] sm:$0xff]
  %v60 = vld [vmem:[%s0 + $0x130] sm:$0xff]
  %v61 = vld [vmem:[%s0 + $0x138] sm:$0xff]
  %v62 = vld [vmem:[%s0 + $0x140] sm:$0xff]
  %v63 = vld [vmem:[%s0 + $0x148] sm:$0xff]
  %v64 = vld [vmem:[%s0 + $0x150] sm:$0xff]
  %v65 = vld [vmem:[%s0 + $0x158] sm:$0xff]
  %v66 = vld [vmem:[%s0 + $0x160] sm:$0xff]
  %v67 = vld [vmem:[%s0 + $0x168] sm:$0xff]
  %v68 = vld [vmem:[%s0 + $0x170] sm:$0xff]
  %v69 = vld [vmem:[%s0 + $0x178] sm:$0xff]
  %v70 = vld [vmem:[%s0 + $0x180] sm:$0xff]
  %v71 = vld [vmem:[%s0 + $0x188] sm:$0xff]
  %v72 = vld [vmem:[%s0 + $0x190] sm:$0xff]
  %v73 = vld [vmem:[%s0 + $0x198] sm:$0xff]
  %v74 = vld [vmem:[%s0 + $0x1a0] sm:$0xff]
  %v75 = vld [vmem:[%s0 + $0x1a8] sm:$0xff]
  %v76 = vld [vmem:[%s0 + $0x1b0] sm:$0xff]
  %v77 = vld [vmem:[%s0 + $0x1b8] sm:$0xff]
  %v78 = vld [vmem:[%s0 + $0x1c0] sm:$0xff]
  %v79 = vld [vmem:[%s0 + $0x1c8] sm:$0xff]
  %v80 = vld [vmem:[%s0 + $0x1d0] sm:$0xff]
  %v81 = vld [vmem:[%s0 + $0x1d8] sm:$0xff]
  %v82 = vld [vmem:[%s0 + $0x1e0] sm:$0xff]
  %v83 = vld [vmem:[%s0 + $0x1e8] sm:$0xff]
  %v84 = vld [vmem:[%s0 + $0x1f0] sm:$0xff]
  %v85 = vld [vmem:[%s0 + $0x1f8] sm:$0xff]
  %v86 = vld [vmem:[%s0 + $0x200] sm:$0xff]
  %v87 = vld [vmem:[%s0 + $0x208] sm:$0xff]
  %v88 = vld [vmem:[%s0 + $0x210] sm:$0xff]
  %v89 = vld [vmem:[%s0 + $0x218] sm:$0xff]
  %v90 = vld [vmem:[%s0 + $0x220] sm:$0xff]
  %v91 = vld [vmem:[%s0 + $0x228] sm:$0xff]
  %v92 = vld [vmem:[%s0 + $0x230] sm:$0xff]
  %v93 = vld [vmem:[%s0 + $0x238] sm:$0xff]
  %v94 = vld [vmem:[%s0 + $0x240] sm:$0xff]
  %v95 = vld [vmem:[%s0 + $0x248] sm:$0xff]
  %v96 = vld [vmem:[%s0 + $0x250] sm:$0xff]
  %v97 = vld [vmem:[%s0 + $0x258] sm:$0xff]
  %v98 = vld [vmem:[%s0 + $0x260] sm:$0xff]
  %v99 = vld [vmem:[%s0 + $0x268] sm:$0xff]
  %v100 = vld [vmem:[%s0 + $0x270] sm:$0xff]
  %v101 = vld [vmem:[%s0 + $0x278] sm:$0xff]
  %v102 = vld [vmem:[%s0 + $0x280] sm:$0xff]
  %v103 = vld [vmem:[%s0 + $0x288] sm:$0xff]
  %v104 = vld [vmem:[%s0 + $0x290] sm:$0xff]
  %v105 = vld [vmem:[%s0 + $0x298] sm:$0xff]
  %v106 = vld [vmem:[%s0 + $0x2a0] sm:$0xff]
  %v107 = vld [vmem:[%s0 + $0x2a8] sm:$0xff]
  %v108 = vld [vmem:[%s0 + $0x2b0] sm:$0xff]
  %v109 = vld [vmem:[%s0 + $0x2b8] sm:$0xff]
  %v110 = vld [vmem:[%s0 + $0x2c0] sm:$0xff]
  %v111 = vld [vmem:[%s0 + $0x2c8] sm:$0xff]
  %v112 = vld [vmem:[%s0 + $0x2d0] sm:$0xff]
  %v113 = vld [vmem:[%s0 + $0x2d8] sm:$0xff]
  %v114 = vld [vmem:[%s0 + $0x2e0] sm:$0xff]
  %v115 = vld [vmem:[%s0 + $0x2e8] sm:$0xff]
  %v116 = vld [vmem:[%s0 + $0x2f0] sm:$0xff]
  %v117 = vld [vmem:[%s0 + $0x2f8] sm:$0xff]
  %v118 = vld [vmem:[%s0 + $0x300] sm:$0xff]
  %v119 = vld [vmem:[%s0 + $0x308] sm:$0xff]
  %v120 = vld [vmem:[%s0 + $0x310] sm:$0xff]
  %v121 = vld [vmem:[%s0 + $0x318] sm:$0xff]
  %v122 = vld [vmem:[%s0 + $0x320] sm:$0xff]
  %v123 = vld [vmem:[%s0 + $0x328] sm:$0xff]
  %v124 = vld [vmem:[%s0 + $0x330] sm:$0xff]
  %v125 = vld [vmem:[%s0 + $0x338] sm:$0xff]
  %v126 = vld [vmem:[%s0 + $0x340] sm:$0xff]
  %v127 = vld [vmem:[%s0 + $0x348] sm:$0xff]
  %v128 = vld [vmem:[%s0 + $0x350] sm:$0xff]
  %v129 = vld [vmem:[%s0 + $0x358] sm:$0xff]
  %v130 = vld [vmem:[%s0 + $0x360] sm:$0xff]
  %v131 = vld [vmem:[%s0 + $0x368] sm:$0xff]
  %v132 = vld [vmem:[%s0 + $0x370] sm:$0xff]
  %v133 = vld [vmem:[%s0 + $0x378] sm:$0xff]
  %v134 = vld [vmem:[%s0 + $0x380] sm:$0xff]
  %v135 = vld [vmem:[%s0 + $0x388] sm:$0xff]
  %v136 = vld [vmem:[%s0 + $0x390] sm:$0xff]
  %v137 = vld [vmem:[%s0 + $0x398] sm:$0xff]
  %v138 = vld [vmem:[%s0 + $0x3a0] sm:$0xff]
  %v139 = vld [vmem:[%s0 + $0x3a8] sm:$0xff]
  %v140 = vld [vmem:[%s0 + $0x3b0] sm:$0xff]
  %v141 = vld [vmem:[%s0 + $0x3b8] sm:$0xff]
  %v142 = vld [vmem:[%s0 + $0x3c0] sm:$0xff]
  %v143 = vld [vmem:[%s0 + $0x3c8] sm:$0xff]
  %v144 = vld [vmem:[%s0 + $0x3d0] sm:$0xff]
  %v145 = vld [vmem:[%s0 + $0x3d8] sm:$0xff]
  %v146 = vld [vmem:[%s0 + $0x3e0] sm:$0xff]
  %v147 = vld [vmem:[%s0 + $0x3e8] sm:$0xff]
  %v148 = vld [vmem:[%s0 + $0x3f0] sm:$0xff]
  %v149 = vld [vmem:[%s0 + $0x3f8] sm:$0xff]
  %v150 = vld [vmem:[%s1] sm:$0x1]
  %v151 = vld [vmem:[%s2] sm:$0xff]
  %v152 = vld [vmem:[%s2 + $0x8] sm:$0xff]
  %v153 = vld [vmem:[%s2 + $0x10] sm:$0xff]
  %v154 = vld [vmem:[%s2 + $0x18] sm:$0xff]
  %v155 = vld [vmem:[%s2 + $0x20] sm:$0xff]
  %v156 = vld [vmem:[%s2 + $0x28] sm:$0xff]
  %v157 = vld [vmem:[%s2 + $0x30] sm:$0xff]
  %v158 = vld [vmem:[%s2 + $0x38] sm:$0xff]
  %v159 = vld [vmem:[%s2 + $0x40] sm:$0xff]
  %v160 = vld [vmem:[%s2 + $0x48] sm:$0xff]
  %v161 = vld [vmem:[%s2 + $0x50] sm:$0xff]
  %v162 = vld [vmem:[%s2 + $0x58] sm:$0xff]
  %v163 = vld [vmem:[%s2 + $0x60] sm:$0xff]
  %v164 = vld [vmem:[%s2 + $0x68] sm:$0xff]
  %v165 = vld [vmem:[%s2 + $0x70] sm:$0xff]
  %v166 = vld [vmem:[%s2 + $0x78] sm:$0xff]
  %v167 = vld [vmem:[%s3] sm:$0x1]
  %v168 = vld [vmem:[%s4] sm:$0xff]
  %v169 = vlaneseq
  %v170 = vand.u32 %v169, 127
  %vm171 = vcmp.eq.s32.totalorder %v170, 0
  %v172 = vsel %vm171, 1, 0
  %v173 = vcvt.s32.f32 %v172
  %174 = vmatprep.subr.mxu0 %v83
  %175 = vmatpush1.msra.mxu0 %v82
  %176 = vmatprep.subr.mxu0 %v79
  %177 = vmatpush1.msra.mxu0 %v78
  %178 = vmatprep.subr.mxu0 %v75
  %179 = vmatpush1.msra.mxu0 %v74
  %180 = vmatprep.subr.mxu0 %v71
  %181 = vmatpush1.msra.mxu0 %v70
  %182 = vmatprep.subr.mxu0 %v67
  %183 = vmatpush1.msra.mxu0 %v66
  %184 = vmatprep.subr.mxu0 %v63
  %185 = vmatpush1.msra.mxu0 %v62
  %186 = vmatprep.subr.mxu0 %v59
  %187 = vmatpush1.msra.mxu0 %v58
  %188 = vmatprep.subr.mxu0 %v55
  %189 = vmatpush1.msra.mxu0 %v54
  %190 = vmatprep.subr.mxu0 %v51
  %191 = vmatpush1.msra.mxu0 %v50
  %192 = vmatprep.subr.mxu0 %v47
  %193 = vmatpush1.msra.mxu0 %v46
  %194 = vmatprep.subr.mxu0 %v43
  %195 = vmatpush1.msra.mxu0 %v42
  %196 = vmatprep.subr.mxu0 %v39
  %197 = vmatpush1.msra.mxu0 %v38
  %198 = vmatprep.subr.mxu0 %v35
  %199 = vmatpush1.msra.mxu0 %v34
  %200 = vmatprep.subr.mxu0 %v31
  %201 = vmatpush1.msra.mxu0 %v30
  %202 = vmatprep.subr.mxu0 %v27
  %203 = vmatpush1.msra.mxu0 %v26
  %204 = vmatprep.subr.mxu0 %v23
  %205 = vmatpush1.msra.mxu0 %v22
  %206 = vmatprep.subr.mxu0 %v147
  %207 = vmatpush2.msra.mxu0 %v146
  %208 = vmatprep.subr.mxu0 %v143
  %209 = vmatpush2.msra.mxu0 %v142
  %210 = vmatprep.subr.mxu0 %v139
  %211 = vmatpush2.msra.mxu0 %v138
  %212 = vmatprep.subr.mxu0 %v135
  %213 = vmatpush2.msra.mxu0 %v134
  %214 = vmatprep.subr.mxu0 %v131
  %215 = vmatpush2.msra.mxu0 %v130
  %216 = vmatprep.subr.mxu0 %v127
  %217 = vmatpush2.msra.mxu0 %v126
  %218 = vmatprep.subr.mxu0 %v123
  %219 = vmatpush2.msra.mxu0 %v122
  %220 = vmatprep.subr.mxu0 %v119
  %221 = vmatpush2.msra.mxu0 %v118
  %222 = vmatprep.subr.mxu0 %v115
  %223 = vmatpush2.msra.mxu0 %v114
  %224 = vmatprep.subr.mxu0 %v111
  %225 = vmatpush2.msra.mxu0 %v110
  %226 = vmatprep.subr.mxu0 %v107
  %227 = vmatpush2.msra.mxu0 %v106
  %228 = vmatprep.subr.mxu0 %v103
  %229 = vmatpush2.msra.mxu0 %v102
  %230 = vmatprep.subr.mxu0 %v99
  %231 = vmatpush2.msra.mxu0 %v98
  %232 = vmatprep.subr.mxu0 %v95
  %233 = vmatpush2.msra.mxu0 %v94
  %234 = vmatprep.subr.mxu0 %v91
  %235 = vmatpush2.msra.mxu0 %v90
  %236 = vmatprep.subr.mxu0 %v87
  %237 = vmatpush2.msra.mxu0 %v86
  %238 = vmatprep.mubr.f32.mxu0 %v168
  %239 = vmatmul.mubr.f32.gmra.mxu0 %v173
  %v240 = vpop.f32.mrf.mxu0
  %v241 = vadd.f32 0.0, %v240
  %v242 = vpop.f32.mrf.mxu0
  %v243 = vadd.f32 0.0, %v242
  %244 = vdwg.mxu0
  %245 = vmatprep.subr.mxu0 %v85
  %246 = vmatpush1.msra.mxu0 %v84
  %247 = vmatprep.subr.mxu0 %v81
  %248 = vmatpush1.msra.mxu0 %v80
  %249 = vmatprep.subr.mxu0 %v77
  %250 = vmatpush1.msra.mxu0 %v76
  %251 = vmatprep.subr.mxu0 %v73
  %252 = vmatpush1.msra.mxu0 %v72
  %253 = vmatprep.subr.mxu0 %v69
  %254 = vmatpush1.msra.mxu0 %v68
  %255 = vmatprep.subr.mxu0 %v65
  %256 = vmatpush1.msra.mxu0 %v64
  %257 = vmatprep.subr.mxu0 %v61
  %258 = vmatpush1.msra.mxu0 %v60
  %259 = vmatprep.subr.mxu0 %v57
  %260 = vmatpush1.msra.mxu0 %v56
  %261 = vmatprep.subr.mxu0 %v53
  %262 = vmatpush1.msra.mxu0 %v52
  %263 = vmatprep.subr.mxu0 %v49
  %264 = vmatpush1.msra.mxu0 %v48
  %265 = vmatprep.subr.mxu0 %v45
  %266 = vmatpush1.msra.mxu0 %v44
  %267 = vmatprep.subr.mxu0 %v41
  %268 = vmatpush1.msra.mxu0 %v40
  %269 = vmatprep.subr.mxu0 %v37
  %270 = vmatpush1.msra.mxu0 %v36
  %271 = vmatprep.subr.mxu0 %v33
  %272 = vmatpush1.msra.mxu0 %v32
  %273 = vmatprep.subr.mxu0 %v29
  %274 = vmatpush1.msra.mxu0 %v28
  %275 = vmatprep.subr.mxu0 %v25
  %276 = vmatpush1.msra.mxu0 %v24
  %277 = vmatprep.subr.mxu0 %v149
  %278 = vmatpush2.msra.mxu0 %v148
  %279 = vmatprep.subr.mxu0 %v145
  %280 = vmatpush2.msra.mxu0 %v144
  %281 = vmatprep.subr.mxu0 %v141
  %282 = vmatpush2.msra.mxu0 %v140
  %283 = vmatprep.subr.mxu0 %v137
  %284 = vmatpush2.msra.mxu0 %v136
  %285 = vmatprep.subr.mxu0 %v133
  %286 = vmatpush2.msra.mxu0 %v132
  %287 = vmatprep.subr.mxu0 %v129
  %288 = vmatpush2.msra.mxu0 %v128
  %289 = vmatprep.subr.mxu0 %v125
  %290 = vmatpush2.msra.mxu0 %v124
  %291 = vmatprep.subr.mxu0 %v121
  %292 = vmatpush2.msra.mxu0 %v120
  %293 = vmatprep.subr.mxu0 %v117
  %294 = vmatpush2.msra.mxu0 %v116
  %295 = vmatprep.subr.mxu0 %v113
  %296 = vmatpush2.msra.mxu0 %v112
  %297 = vmatprep.subr.mxu0 %v109
  %298 = vmatpush2.msra.mxu0 %v108
  %299 = vmatprep.subr.mxu0 %v105
  %300 = vmatpush2.msra.mxu0 %v104
  %301 = vmatprep.subr.mxu0 %v101
  %302 = vmatpush2.msra.mxu0 %v100
  %303 = vmatprep.subr.mxu0 %v97
  %304 = vmatpush2.msra.mxu0 %v96
  %305 = vmatprep.subr.mxu0 %v93
  %306 = vmatpush2.msra.mxu0 %v92
  %307 = vmatprep.subr.mxu0 %v89
  %308 = vmatpush2.msra.mxu0 %v88
  %309 = vmatprep.mubr.f32.mxu0 %v168
  %310 = vmatmul.mubr.f32.gmra.mxu0 %v173
  %v311 = vpop.f32.mrf.mxu0
  %v312 = vadd.f32 0.0, %v311
  %v313 = vpop.f32.mrf.mxu0
  %v314 = vadd.f32 0.0, %v313
  %315 = vdwg.mxu0
  %v316 = vxor.u32 %v241, 2147483648
  %v317 = vmul.f32 %v316, 1.442695
  %v318 = vpow.pop %v317
  %v319 = vadd.f32 %v318, 1.0
  %v320 = vrcp.pop %v319
  %v321 = vmul.f32 1.0, %v320
  %v322 = vxor.u32 %v243, 2147483648
  %v323 = vmul.f32 %v322, 1.442695
  %v324 = vpow.pop %v323
  %v325 = vadd.f32 %v324, 1.0
  %v326 = vrcp.pop %v325
  %v327 = vmul.f32 1.0, %v326
  %v329 = vlaneseq
  %v330 = vshrl.u32 %v329, 7
  %v331 = vsub.s32 0, %v330
  %v332 = vrot.slane %v150, %v331
  %v334 = vadd.f32 %v314, %v332
  %v335 = vmul.f32 %v321, %v334
  %v336 = vadd.f32 %v312, %v335
  %v337 = vtanh.pop %v336
  %v338 = vsub.f32 1.0, %v327
  %v339 = vmul.f32 %v338, %v337
  %v340 = vmul.f32 %v327, %v168
  %v341 = vadd.f32 %v339, %v340
  %v343 = vlaneseq
  %v344 = vshrl.u32 %v343, 7
  %v345 = vsub.s32 0, %v344
  %v346 = vrot.slane %v167, %v345
  %348 = vmatprep.subr.mxu0 0.0
  %349 = vmatpush1.msra.mxu0 %v166
  %350 = vmatprep.subr.mxu0 0.0
  %351 = vmatpush1.msra.mxu0 %v165
  %352 = vmatprep.subr.mxu0 0.0
  %353 = vmatpush1.msra.mxu0 %v164
  %354 = vmatprep.subr.mxu0 0.0
  %355 = vmatpush1.msra.mxu0 %v163
  %356 = vmatprep.subr.mxu0 0.0
  %357 = vmatpush1.msra.mxu0 %v162
  %358 = vmatprep.subr.mxu0 0.0
  %359 = vmatpush1.msra.mxu0 %v161
  %360 = vmatprep.subr.mxu0 0.0
  %361 = vmatpush1.msra.mxu0 %v160
  %362 = vmatprep.subr.mxu0 0.0
  %363 = vmatpush1.msra.mxu0 %v159
  %364 = vmatprep.subr.mxu0 0.0
  %365 = vmatpush1.msra.mxu0 %v158
  %366 = vmatprep.subr.mxu0 0.0
  %367 = vmatpush1.msra.mxu0 %v157
  %368 = vmatprep.subr.mxu0 0.0
  %369 = vmatpush1.msra.mxu0 %v156
  %370 = vmatprep.subr.mxu0 0.0
  %371 = vmatpush1.msra.mxu0 %v155
  %372 = vmatprep.subr.mxu0 0.0
  %373 = vmatpush1.msra.mxu0 %v154
  %374 = vmatprep.subr.mxu0 0.0
  %375 = vmatpush1.msra.mxu0 %v153
  %376 = vmatprep.subr.mxu0 0.0
  %377 = vmatpush1.msra.mxu0 %v152
  %378 = vmatprep.subr.mxu0 0.0
  %379 = vmatpush1.msra.mxu0 %v151
  %380 = vmatprep.subr.mxu0 0.0
  %381 = vmatpush2.msra.mxu0 0.0
  %382 = vmatprep.subr.mxu0 0.0
  %383 = vmatpush2.msra.mxu0 0.0
  %384 = vmatprep.subr.mxu0 0.0
  %385 = vmatpush2.msra.mxu0 0.0
  %386 = vmatprep.subr.mxu0 0.0
  %387 = vmatpush2.msra.mxu0 0.0
  %388 = vmatprep.subr.mxu0 0.0
  %389 = vmatpush2.msra.mxu0 0.0
  %390 = vmatprep.subr.mxu0 0.0
  %391 = vmatpush2.msra.mxu0 0.0
  %392 = vmatprep.subr.mxu0 0.0
  %393 = vmatpush2.msra.mxu0 0.0
  %394 = vmatprep.subr.mxu0 0.0
  %395 = vmatpush2.msra.mxu0 0.0
  %396 = vmatprep.subr.mxu0 0.0
  %397 = vmatpush2.msra.mxu0 0.0
  %398 = vmatprep.subr.mxu0 0.0
  %399 = vmatpush2.msra.mxu0 0.0
  %400 = vmatprep.subr.mxu0 0.0
  %401 = vmatpush2.msra.mxu0 0.0
  %402 = vmatprep.subr.mxu0 0.0
  %403 = vmatpush2.msra.mxu0 0.0
  %404 = vmatprep.subr.mxu0 0.0
  %405 = vmatpush2.msra.mxu0 0.0
  %406 = vmatprep.subr.mxu0 0.0
  %407 = vmatpush2.msra.mxu0 0.0
  %408 = vmatprep.subr.mxu0 0.0
  %409 = vmatpush2.msra.mxu0 0.0
  %410 = vmatprep.subr.mxu0 0.0
  %411 = vmatpush2.msra.mxu0 0.0
  %412 = vmatprep.mubr.f32.mxu0 0.0
  %413 = vmatmul.mubr.f32.gmra.mxu0 %v341
  %v414 = vpop.f32.mrf.mxu0
  %v415 = vadd.f32 %v346, %v414
  %v416 = vpop.f32.mrf.mxu0
  %417 = vdwg.mxu0
  %418 = vmax.xlane.f32.xlu0 %v415
  %v419 = vpop.xlane.xlu0 %418
  %vm420 = vcmp.ge.f32.partialorder %v415, %v419
  %v421 = vsel %vm420, %v170, 128
  %v422 = vand.u32 %v421, 65535
  %v423 = vshra.s32 %v421, 16
  %v424 = vcvt.s32.f32 %v422
  %v425 = vcvt.s32.f32 %v423
  %426 = vmin.xlane.f32.xlu0 %v425
  %v427 = vpop.xlane.xlu0 %426
  %vm428 = vcmp.eq.f32.partialorder %v425, %v427
  %v429 = vsel %vm428, %v424, inf
  %430 = vmin.xlane.f32.xlu0 %v429
  %v431 = vpop.xlane.xlu0 %430
  %v432 = vcvt.f32.s32 %v431
  %v433 = vcvt.f32.s32 %v427
  %v434 = vshll.u32 %v433, 16
  %v435 = vadd.s32 %v434, %v432
  %vm436 = vcmp.eq.s32.totalorder %v170, %v435
  %v437 = vsel %vm436, 1, 0
  %v438 = vcvt.s32.f32 %v437
  %439 = vmatprep.subr.mxu0 %v83
  %440 = vmatpush1.msra.mxu0 %v82
  %441 = vmatprep.subr.mxu0 %v79
  %442 = vmatpush1.msra.mxu0 %v78
  %443 = vmatprep.subr.mxu0 %v75
  %444 = vmatpush1.msra.mxu0 %v74
  %445 = vmatprep.subr.mxu0 %v71
  %446 = vmatpush1.msra.mxu0 %v70
  %447 = vmatprep.subr.mxu0 %v67
  %448 = vmatpush1.msra.mxu0 %v66
  %449 = vmatprep.subr.mxu0 %v63
  %450 = vmatpush1.msra.mxu0 %v62
  %451 = vmatprep.subr.mxu0 %v59
  %452 = vmatpush1.msra.mxu0 %v58
  %453 = vmatprep.subr.mxu0 %v55
  %454 = vmatpush1.msra.mxu0 %v54
  %455 = vmatprep.subr.mxu0 %v51
  %456 = vmatpush1.msra.mxu0 %v50
  %457 = vmatprep.subr.mxu0 %v47
  %458 = vmatpush1.msra.mxu0 %v46
  %459 = vmatprep.subr.mxu0 %v43
  %460 = vmatpush1.msra.mxu0 %v42
  %461 = vmatprep.subr.mxu0 %v39
  %462 = vmatpush1.msra.mxu0 %v38
  %463 = vmatprep.subr.mxu0 %v35
  %464 = vmatpush1.msra.mxu0 %v34
  %465 = vmatprep.subr.mxu0 %v31
  %466 = vmatpush1.msra.mxu0 %v30
  %467 = vmatprep.subr.mxu0 %v27
  %468 = vmatpush1.msra.mxu0 %v26
  %469 = vmatprep.subr.mxu0 %v23
  %470 = vmatpush1.msra.mxu0 %v22
  %471 = vmatprep.subr.mxu0 %v147
  %472 = vmatpush2.msra.mxu0 %v146
  %473 = vmatprep.subr.mxu0 %v143
  %474 = vmatpush2.msra.mxu0 %v142
  %475 = vmatprep.subr.mxu0 %v139
  %476 = vmatpush2.msra.mxu0 %v138
  %477 = vmatprep.subr.mxu0 %v135
  %478 = vmatpush2.msra.mxu0 %v134
  %479 = vmatprep.subr.mxu0 %v131
  %480 = vmatpush2.msra.mxu0 %v130
  %481 = vmatprep.subr.mxu0 %v127
  %482 = vmatpush2.msra.mxu0 %v126
  %483 = vmatprep.subr.mxu0 %v123
  %484 = vmatpush2.msra.mxu0 %v122
  %485 = vmatprep.subr.mxu0 %v119
  %486 = vmatpush2.msra.mxu0 %v118
  %487 = vmatprep.subr.mxu0 %v115
  %488 = vmatpush2.msra.mxu0 %v114
  %489 = vmatprep.subr.mxu0 %v111
  %490 = vmatpush2.msra.mxu0 %v110
  %491 = vmatprep.subr.mxu0 %v107
  %492 = vmatpush2.msra.mxu0 %v106
  %493 = vmatprep.subr.mxu0 %v103
  %494 = vmatpush2.msra.mxu0 %v102
  %495 = vmatprep.subr.mxu0 %v99
  %496 = vmatpush2.msra.mxu0 %v98
  %497 = vmatprep.subr.mxu0 %v95
  %498 = vmatpush2.msra.mxu0 %v94
  %499 = vmatprep.subr.mxu0 %v91
  %500 = vmatpush2.msra.mxu0 %v90
  %501 = vmatprep.subr.mxu0 %v87
  %502 = vmatpush2.msra.mxu0 %v86
  %503 = vmatprep.mubr.f32.mxu0 %v341
  %504 = vmatmul.mubr.f32.gmra.mxu0 %v438
  %v505 = vpop.f32.mrf.mxu0
  %v506 = vadd.f32 0.0, %v505
  %v507 = vpop.f32.mrf.mxu0
  %v508 = vadd.f32 0.0, %v507
  %509 = vdwg.mxu0
  %510 = vmatprep.subr.mxu0 %v85
  %511 = vmatpush1.msra.mxu0 %v84
  %512 = vmatprep.subr.mxu0 %v81
  %513 = vmatpush1.msra.mxu0 %v80
  %514 = vmatprep.subr.mxu0 %v77
  %515 = vmatpush1.msra.mxu0 %v76
  %516 = vmatprep.subr.mxu0 %v73
  %517 = vmatpush1.msra.mxu0 %v72
  %518 = vmatprep.subr.mxu0 %v69
  %519 = vmatpush1.msra.mxu0 %v68
  %520 = vmatprep.subr.mxu0 %v65
  %521 = vmatpush1.msra.mxu0 %v64
  %522 = vmatprep.subr.mxu0 %v61
  %523 = vmatpush1.msra.mxu0 %v60
  %524 = vmatprep.subr.mxu0 %v57
  %525 = vmatpush1.msra.mxu0 %v56
  %526 = vmatprep.subr.mxu0 %v53
  %527 = vmatpush1.msra.mxu0 %v52
  %528 = vmatprep.subr.mxu0 %v49
  %529 = vmatpush1.msra.mxu0 %v48
  %530 = vmatprep.subr.mxu0 %v45
  %531 = vmatpush1.msra.mxu0 %v44
  %532 = vmatprep.subr.mxu0 %v41
  %533 = vmatpush1.msra.mxu0 %v40
  %534 = vmatprep.subr.mxu0 %v37
  %535 = vmatpush1.msra.mxu0 %v36
  %536 = vmatprep.subr.mxu0 %v33
  %537 = vmatpush1.msra.mxu0 %v32
  %538 = vmatprep.subr.mxu0 %v29
  %539 = vmatpush1.msra.mxu0 %v28
  %540 = vmatprep.subr.mxu0 %v25
  %541 = vmatpush1.msra.mxu0 %v24
  %542 = vmatprep.subr.mxu0 %v149
  %543 = vmatpush2.msra.mxu0 %v148
  %544 = vmatprep.subr.mxu0 %v145
  %545 = vmatpush2.msra.mxu0 %v144
  %546 = vmatprep.subr.mxu0 %v141
  %547 = vmatpush2.msra.mxu0 %v140
  %548 = vmatprep.subr.mxu0 %v137
  %549 = vmatpush2.msra.mxu0 %v136
  %550 = vmatprep.subr.mxu0 %v133
  %551 = vmatpush2.msra.mxu0 %v132
  %552 = vmatprep.subr.mxu0 %v129
  %553 = vmatpush2.msra.mxu0 %v128
  %554 = vmatprep.subr.mxu0 %v125
  %555 = vmatpush2.msra.mxu0 %v124
  %556 = vmatprep.subr.mxu0 %v121
  %557 = vmatpush2.msra.mxu0 %v120
  %558 = vmatprep.subr.mxu0 %v117
  %559 = vmatpush2.msra.mxu0 %v116
  %560 = vmatprep.subr.mxu0 %v113
  %561 = vmatpush2.msra.mxu0 %v112
  %562 = vmatprep.subr.mxu0 %v109
  %563 = vmatpush2.msra.mxu0 %v108
  %564 = vmatprep.subr.mxu0 %v105
  %565 = vmatpush2.msra.mxu0 %v104
  %566 = vmatprep.subr.mxu0 %v101
  %567 = vmatpush2.msra.mxu0 %v100
  %568 = vmatprep.subr.mxu0 %v97
  %569 = vmatpush2.msra.mxu0 %v96
  %570 = vmatprep.subr.mxu0 %v93
  %571 = vmatpush2.msra.mxu0 %v92
  %572 = vmatprep.subr.mxu0 %v89
  %573 = vmatpush2.msra.mxu0 %v88
  %574 = vmatprep.mubr.f32.mxu0 %v341
  %575 = vmatmul.mubr.f32.gmra.mxu0 %v438
  %v576 = vpop.f32.mrf.mxu0
  %v577 = vadd.f32 0.0, %v576
  %v578 = vpop.f32.mrf.mxu0
  %v579 = vadd.f32 0.0, %v578
  %580 = vdwg.mxu0
  %v581 = vxor.u32 %v506, 2147483648
  %v582 = vmul.f32 %v581, 1.442695
  %v583 = vpow.pop %v582
  %v584 = vadd.f32 %v583, 1.0
  %v585 = vrcp.pop %v584
  %v586 = vmul.f32 1.0, %v585
  %v587 = vxor.u32 %v508, 2147483648
  %v588 = vmul.f32 %v587, 1.442695
  %v589 = vpow.pop %v588
  %v590 = vadd.f32 %v589, 1.0
  %v591 = vrcp.pop %v590
  %v592 = vmul.f32 1.0, %v591
  %v593 = vadd.f32 %v579, %v332
  %v594 = vmul.f32 %v586, %v593
  %v595 = vadd.f32 %v577, %v594
  %v596 = vtanh.pop %v595
  %v597 = vsub.f32 1.0, %v592
  %v598 = vmul.f32 %v597, %v596
  %v599 = vmul.f32 %v592, %v341
  %v600 = vadd.f32 %v598, %v599
  %601 = vmatprep.subr.mxu0 0.0
  %602 = vmatpush1.msra.mxu0 %v166
  %603 = vmatprep.subr.mxu0 0.0
  %604 = vmatpush1.msra.mxu0 %v165
  %605 = vmatprep.subr.mxu0 0.0
  %606 = vmatpush1.msra.mxu0 %v164
  %607 = vmatprep.subr.mxu0 0.0
  %608 = vmatpush1.msra.mxu0 %v163
  %609 = vmatprep.subr.mxu0 0.0
  %610 = vmatpush1.msra.mxu0 %v162
  %611 = vmatprep.subr.mxu0 0.0
  %612 = vmatpush1.msra.mxu0 %v161
  %613 = vmatprep.subr.mxu0 0.0
  %614 = vmatpush1.msra.mxu0 %v160
  %615 = vmatprep.subr.mxu0 0.0
  %616 = vmatpush1.msra.mxu0 %v159
  %617 = vmatprep.subr.mxu0 0.0
  %618 = vmatpush1.msra.mxu0 %v158
  %619 = vmatprep.subr.mxu0 0.0
  %620 = vmatpush1.msra.mxu0 %v157
  %621 = vmatprep.subr.mxu0 0.0
  %622 = vmatpush1.msra.mxu0 %v156
  %623 = vmatprep.subr.mxu0 0.0
  %624 = vmatpush1.msra.mxu0 %v155
  %625 = vmatprep.subr.mxu0 0.0
  %626 = vmatpush1.msra.mxu0 %v154
  %627 = vmatprep.subr.mxu0 0.0
  %628 = vmatpush1.msra.mxu0 %v153
  %629 = vmatprep.subr.mxu0 0.0
  %630 = vmatpush1.msra.mxu0 %v152
  %631 = vmatprep.subr.mxu0 0.0
  %632 = vmatpush1.msra.mxu0 %v151
  %633 = vmatprep.subr.mxu0 0.0
  %634 = vmatpush2.msra.mxu0 0.0
  %635 = vmatprep.subr.mxu0 0.0
  %636 = vmatpush2.msra.mxu0 0.0
  %637 = vmatprep.subr.mxu0 0.0
  %638 = vmatpush2.msra.mxu0 0.0
  %639 = vmatprep.subr.mxu0 0.0
  %640 = vmatpush2.msra.mxu0 0.0
  %641 = vmatprep.subr.mxu0 0.0
  %642 = vmatpush2.msra.mxu0 0.0
  %643 = vmatprep.subr.mxu0 0.0
  %644 = vmatpush2.msra.mxu0 0.0
  %645 = vmatprep.subr.mxu0 0.0
  %646 = vmatpush2.msra.mxu0 0.0
  %647 = vmatprep.subr.mxu0 0.0
  %648 = vmatpush2.msra.mxu0 0.0
  %649 = vmatprep.subr.mxu0 0.0
  %650 = vmatpush2.msra.mxu0 0.0
  %651 = vmatprep.subr.mxu0 0.0
  %652 = vmatpush2.msra.mxu0 0.0
  %653 = vmatprep.subr.mxu0 0.0
  %654 = vmatpush2.msra.mxu0 0.0
  %655 = vmatprep.subr.mxu0 0.0
  %656 = vmatpush2.msra.mxu0 0.0
  %657 = vmatprep.subr.mxu0 0.0
  %658 = vmatpush2.msra.mxu0 0.0
  %659 = vmatprep.subr.mxu0 0.0
  %660 = vmatpush2.msra.mxu0 0.0
  %661 = vmatprep.subr.mxu0 0.0
  %662 = vmatpush2.msra.mxu0 0.0
  %663 = vmatprep.subr.mxu0 0.0
  %664 = vmatpush2.msra.mxu0 0.0
  %665 = vmatprep.mubr.f32.mxu0 0.0
  %666 = vmatmul.mubr.f32.gmra.mxu0 %v600
  %v667 = vpop.f32.mrf.mxu0
  %v668 = vadd.f32 %v346, %v667
  %v669 = vpop.f32.mrf.mxu0
  %670 = vdwg.mxu0
  %671 = vmax.xlane.f32.xlu0 %v668
  %v672 = vpop.xlane.xlu0 %671
  %vm673 = vcmp.ge.f32.partialorder %v668, %v672
  %v674 = vsel %vm673, %v170, 128
  %v675 = vand.u32 %v674, 65535
  %v676 = vshra.s32 %v674, 16
  %v677 = vcvt.s32.f32 %v675
  %v678 = vcvt.s32.f32 %v676
  %679 = vmin.xlane.f32.xlu0 %v678
  %v680 = vpop.xlane.xlu0 %679
  %vm681 = vcmp.eq.f32.partialorder %v678, %v680
  %v682 = vsel %vm681, %v677, inf
  %683 = vmin.xlane.f32.xlu0 %v682
  %v684 = vpop.xlane.xlu0 %683
  %v685 = vcvt.f32.s32 %v684
  %v686 = vcvt.f32.s32 %v680
  %v687 = vshll.u32 %v686, 16
  %v688 = vadd.s32 %v687, %v685
  %vm689 = vcmp.eq.s32.totalorder %v170, %v688
  %v690 = vsel %vm689, 1, 0
  %v691 = vcvt.s32.f32 %v690
  %692 = vmatprep.subr.mxu0 %v83
  %693 = vmatpush1.msra.mxu0 %v82
  %694 = vmatprep.subr.mxu0 %v79
  %695 = vmatpush1.msra.mxu0 %v78
  %696 = vmatprep.subr.mxu0 %v75
  %697 = vmatpush1.msra.mxu0 %v74
  %698 = vmatprep.subr.mxu0 %v71
  %699 = vmatpush1.msra.mxu0 %v70
  %700 = vmatprep.subr.mxu0 %v67
  %701 = vmatpush1.msra.mxu0 %v66
  %702 = vmatprep.subr.mxu0 %v63
  %703 = vmatpush1.msra.mxu0 %v62
  %704 = vmatprep.subr.mxu0 %v59
  %705 = vmatpush1.msra.mxu0 %v58
  %706 = vmatprep.subr.mxu0 %v55
  %707 = vmatpush1.msra.mxu0 %v54
  %708 = vmatprep.subr.mxu0 %v51
  %709 = vmatpush1.msra.mxu0 %v50
  %710 = vmatprep.subr.mxu0 %v47
  %711 = vmatpush1.msra.mxu0 %v46
  %712 = vmatprep.subr.mxu0 %v43
  %713 = vmatpush1.msra.mxu0 %v42
  %714 = vmatprep.subr.mxu0 %v39
  %715 = vmatpush1.msra.mxu0 %v38
  %716 = vmatprep.subr.mxu0 %v35
  %717 = vmatpush1.msra.mxu0 %v34
  %718 = vmatprep.subr.mxu0 %v31
  %719 = vmatpush1.msra.mxu0 %v30
  %720 = vmatprep.subr.mxu0 %v27
  %721 = vmatpush1.msra.mxu0 %v26
  %722 = vmatprep.subr.mxu0 %v23
  %723 = vmatpush1.msra.mxu0 %v22
  %724 = vmatprep.subr.mxu0 %v147
  %725 = vmatpush2.msra.mxu0 %v146
  %726 = vmatprep.subr.mxu0 %v143
  %727 = vmatpush2.msra.mxu0 %v142
  %728 = vmatprep.subr.mxu0 %v139
  %729 = vmatpush2.msra.mxu0 %v138
  %730 = vmatprep.subr.mxu0 %v135
  %731 = vmatpush2.msra.mxu0 %v134
  %732 = vmatprep.subr.mxu0 %v131
  %733 = vmatpush2.msra.mxu0 %v130
  %734 = vmatprep.subr.mxu0 %v127
  %735 = vmatpush2.msra.mxu0 %v126
  %736 = vmatprep.subr.mxu0 %v123
  %737 = vmatpush2.msra.mxu0 %v122
  %738 = vmatprep.subr.mxu0 %v119
  %739 = vmatpush2.msra.mxu0 %v118
  %740 = vmatprep.subr.mxu0 %v115
  %741 = vmatpush2.msra.mxu0 %v114
  %742 = vmatprep.subr.mxu0 %v111
  %743 = vmatpush2.msra.mxu0 %v110
  %744 = vmatprep.subr.mxu0 %v107
  %745 = vmatpush2.msra.mxu0 %v106
  %746 = vmatprep.subr.mxu0 %v103
  %747 = vmatpush2.msra.mxu0 %v102
  %748 = vmatprep.subr.mxu0 %v99
  %749 = vmatpush2.msra.mxu0 %v98
  %750 = vmatprep.subr.mxu0 %v95
  %751 = vmatpush2.msra.mxu0 %v94
  %752 = vmatprep.subr.mxu0 %v91
  %753 = vmatpush2.msra.mxu0 %v90
  %754 = vmatprep.subr.mxu0 %v87
  %755 = vmatpush2.msra.mxu0 %v86
  %756 = vmatprep.mubr.f32.mxu0 %v600
  %757 = vmatmul.mubr.f32.gmra.mxu0 %v691
  %v758 = vpop.f32.mrf.mxu0
  %v759 = vadd.f32 0.0, %v758
  %v760 = vpop.f32.mrf.mxu0
  %v761 = vadd.f32 0.0, %v760
  %762 = vdwg.mxu0
  %763 = vmatprep.subr.mxu0 %v85
  %764 = vmatpush1.msra.mxu0 %v84
  %765 = vmatprep.subr.mxu0 %v81
  %766 = vmatpush1.msra.mxu0 %v80
  %767 = vmatprep.subr.mxu0 %v77
  %768 = vmatpush1.msra.mxu0 %v76
  %769 = vmatprep.subr.mxu0 %v73
  %770 = vmatpush1.msra.mxu0 %v72
  %771 = vmatprep.subr.mxu0 %v69
  %772 = vmatpush1.msra.mxu0 %v68
  %773 = vmatprep.subr.mxu0 %v65
  %774 = vmatpush1.msra.mxu0 %v64
  %775 = vmatprep.subr.mxu0 %v61
  %776 = vmatpush1.msra.mxu0 %v60
  %777 = vmatprep.subr.mxu0 %v57
  %778 = vmatpush1.msra.mxu0 %v56
  %779 = vmatprep.subr.mxu0 %v53
  %780 = vmatpush1.msra.mxu0 %v52
  %781 = vmatprep.subr.mxu0 %v49
  %782 = vmatpush1.msra.mxu0 %v48
  %783 = vmatprep.subr.mxu0 %v45
  %784 = vmatpush1.msra.mxu0 %v44
  %785 = vmatprep.subr.mxu0 %v41
  %786 = vmatpush1.msra.mxu0 %v40
  %787 = vmatprep.subr.mxu0 %v37
  %788 = vmatpush1.msra.mxu0 %v36
  %789 = vmatprep.subr.mxu0 %v33
  %790 = vmatpush1.msra.mxu0 %v32
  %791 = vmatprep.subr.mxu0 %v29
  %792 = vmatpush1.msra.mxu0 %v28
  %793 = vmatprep.subr.mxu0 %v25
  %794 = vmatpush1.msra.mxu0 %v24
  %795 = vmatprep.subr.mxu0 %v149
  %796 = vmatpush2.msra.mxu0 %v148
  %797 = vmatprep.subr.mxu0 %v145
  %798 = vmatpush2.msra.mxu0 %v144
  %799 = vmatprep.subr.mxu0 %v141
  %800 = vmatpush2.msra.mxu0 %v140
  %801 = vmatprep.subr.mxu0 %v137
  %802 = vmatpush2.msra.mxu0 %v136
  %803 = vmatprep.subr.mxu0 %v133
  %804 = vmatpush2.msra.mxu0 %v132
  %805 = vmatprep.subr.mxu0 %v129
  %806 = vmatpush2.msra.mxu0 %v128
  %807 = vmatprep.subr.mxu0 %v125
  %808 = vmatpush2.msra.mxu0 %v124
  %809 = vmatprep.subr.mxu0 %v121
  %810 = vmatpush2.msra.mxu0 %v120
  %811 = vmatprep.subr.mxu0 %v117
  %812 = vmatpush2.msra.mxu0 %v116
  %813 = vmatprep.subr.mxu0 %v113
  %814 = vmatpush2.msra.mxu0 %v112
  %815 = vmatprep.subr.mxu0 %v109
  %816 = vmatpush2.msra.mxu0 %v108
  %817 = vmatprep.subr.mxu0 %v105
  %818 = vmatpush2.msra.mxu0 %v104
  %819 = vmatprep.subr.mxu0 %v101
  %820 = vmatpush2.msra.mxu0 %v100
  %821 = vmatprep.subr.mxu0 %v97
  %822 = vmatpush2.msra.mxu0 %v96
  %823 = vmatprep.subr.mxu0 %v93
  %824 = vmatpush2.msra.mxu0 %v92
  %825 = vmatprep.subr.mxu0 %v89
  %826 = vmatpush2.msra.mxu0 %v88
  %827 = vmatprep.mubr.f32.mxu0 %v600
  %828 = vmatmul.mubr.f32.gmra.mxu0 %v691
  %v829 = vpop.f32.mrf.mxu0
  %v830 = vadd.f32 0.0, %v829
  %v831 = vpop.f32.mrf.mxu0
  %v832 = vadd.f32 0.0, %v831
  %833 = vdwg.mxu0
  %v834 = vxor.u32 %v759, 2147483648
  %v835 = vmul.f32 %v834, 1.442695
  %v836 = vpow.pop %v835
  %v837 = vadd.f32 %v836, 1.0
  %v838 = vrcp.pop %v837
  %v839 = vmul.f32 1.0, %v838
  %v840 = vxor.u32 %v761, 2147483648
  %v841 = vmul.f32 %v840, 1.442695
  %v842 = vpow.pop %v841
  %v843 = vadd.f32 %v842, 1.0
  %v844 = vrcp.pop %v843
  %v845 = vmul.f32 1.0, %v844
  %v846 = vadd.f32 %v832, %v332
  %v847 = vmul.f32 %v839, %v846
  %v848 = vadd.f32 %v830, %v847
  %v849 = vtanh.pop %v848
  %v850 = vsub.f32 1.0, %v845
  %v851 = vmul.f32 %v850, %v849
  %v852 = vmul.f32 %v845, %v600
  %v853 = vadd.f32 %v851, %v852
  %854 = vmatprep.subr.mxu0 0.0
  %855 = vmatpush1.msra.mxu0 %v166
  %856 = vmatprep.subr.mxu0 0.0
  %857 = vmatpush1.msra.mxu0 %v165
  %858 = vmatprep.subr.mxu0 0.0
  %859 = vmatpush1.msra.mxu0 %v164
  %860 = vmatprep.subr.mxu0 0.0
  %861 = vmatpush1.msra.mxu0 %v163
  %862 = vmatprep.subr.mxu0 0.0
  %863 = vmatpush1.msra.mxu0 %v162
  %864 = vmatprep.subr.mxu0 0.0
  %865 = vmatpush1.msra.mxu0 %v161
  %866 = vmatprep.subr.mxu0 0.0
  %867 = vmatpush1.msra.mxu0 %v160
  %868 = vmatprep.subr.mxu0 0.0
  %869 = vmatpush1.msra.mxu0 %v159
  %870 = vmatprep.subr.mxu0 0.0
  %871 = vmatpush1.msra.mxu0 %v158
  %872 = vmatprep.subr.mxu0 0.0
  %873 = vmatpush1.msra.mxu0 %v157
  %874 = vmatprep.subr.mxu0 0.0
  %875 = vmatpush1.msra.mxu0 %v156
  %876 = vmatprep.subr.mxu0 0.0
  %877 = vmatpush1.msra.mxu0 %v155
  %878 = vmatprep.subr.mxu0 0.0
  %879 = vmatpush1.msra.mxu0 %v154
  %880 = vmatprep.subr.mxu0 0.0
  %881 = vmatpush1.msra.mxu0 %v153
  %882 = vmatprep.subr.mxu0 0.0
  %883 = vmatpush1.msra.mxu0 %v152
  %884 = vmatprep.subr.mxu0 0.0
  %885 = vmatpush1.msra.mxu0 %v151
  %886 = vmatprep.subr.mxu0 0.0
  %887 = vmatpush2.msra.mxu0 0.0
  %888 = vmatprep.subr.mxu0 0.0
  %889 = vmatpush2.msra.mxu0 0.0
  %890 = vmatprep.subr.mxu0 0.0
  %891 = vmatpush2.msra.mxu0 0.0
  %892 = vmatprep.subr.mxu0 0.0
  %893 = vmatpush2.msra.mxu0 0.0
  %894 = vmatprep.subr.mxu0 0.0
  %895 = vmatpush2.msra.mxu0 0.0
  %896 = vmatprep.subr.mxu0 0.0
  %897 = vmatpush2.msra.mxu0 0.0
  %898 = vmatprep.subr.mxu0 0.0
  %899 = vmatpush2.msra.mxu0 0.0
  %900 = vmatprep.subr.mxu0 0.0
  %901 = vmatpush2.msra.mxu0 0.0
  %902 = vmatprep.subr.mxu0 0.0
  %903 = vmatpush2.msra.mxu0 0.0
  %904 = vmatprep.subr.mxu0 0.0
  %905 = vmatpush2.msra.mxu0 0.0
  %906 = vmatprep.subr.mxu0 0.0
  %907 = vmatpush2.msra.mxu0 0.0
  %908 = vmatprep.subr.mxu0 0.0
  %909 = vmatpush2.msra.mxu0 0.0
  %910 = vmatprep.subr.mxu0 0.0
  %911 = vmatpush2.msra.mxu0 0.0
  %912 = vmatprep.subr.mxu0 0.0
  %913 = vmatpush2.msra.mxu0 0.0
  %914 = vmatprep.subr.mxu0 0.0
  %915 = vmatpush2.msra.mxu0 0.0
  %916 = vmatprep.subr.mxu0 0.0
  %917 = vmatpush2.msra.mxu0 0.0
  %918 = vmatprep.mubr.f32.mxu0 0.0
  %919 = vmatmul.mubr.f32.gmra.mxu0 %v853
  %v920 = vpop.f32.mrf.mxu0
  %v921 = vadd.f32 %v346, %v920
  %v922 = vpop.f32.mrf.mxu0
  %923 = vdwg.mxu0
  %924 = vmax.xlane.f32.xlu0 %v921
  %v925 = vpop.xlane.xlu0 %924
  %vm926 = vcmp.ge.f32.partialorder %v921, %v925
  %v927 = vsel %vm926, %v170, 128
  %v928 = vand.u32 %v927, 65535
  %v929 = vshra.s32 %v927, 16
  %v930 = vcvt.s32.f32 %v928
  %v931 = vcvt.s32.f32 %v929
  %932 = vmin.xlane.f32.xlu0 %v931
  %v933 = vpop.xlane.xlu0 %932
  %vm934 = vcmp.eq.f32.partialorder %v931, %v933
  %v935 = vsel %vm934, %v930, inf
  %936 = vmin.xlane.f32.xlu0 %v935
  %v937 = vpop.xlane.xlu0 %936
  %v938 = vcvt.f32.s32 %v937
  %v939 = vcvt.f32.s32 %v933
  %v940 = vshll.u32 %v939, 16
  %v941 = vadd.s32 %v940, %v938
  %vm942 = vcmp.eq.s32.totalorder %v170, %v941
  %v943 = vsel %vm942, 1, 0
  %v944 = vcvt.s32.f32 %v943
  %945 = vmatprep.subr.mxu0 %v83
  %946 = vmatpush1.msra.mxu0 %v82
  %947 = vmatprep.subr.mxu0 %v79
  %948 = vmatpush1.msra.mxu0 %v78
  %949 = vmatprep.subr.mxu0 %v75
  %950 = vmatpush1.msra.mxu0 %v74
  %951 = vmatprep.subr.mxu0 %v71
  %952 = vmatpush1.msra.mxu0 %v70
  %953 = vmatprep.subr.mxu0 %v67
  %954 = vmatpush1.msra.mxu0 %v66
  %955 = vmatprep.subr.mxu0 %v63
  %956 = vmatpush1.msra.mxu0 %v62
  %957 = vmatprep.subr.mxu0 %v59
  %958 = vmatpush1.msra.mxu0 %v58
  %959 = vmatprep.subr.mxu0 %v55
  %960 = vmatpush1.msra.mxu0 %v54
  %961 = vmatprep.subr.mxu0 %v51
  %962 = vmatpush1.msra.mxu0 %v50
  %963 = vmatprep.subr.mxu0 %v47
  %964 = vmatpush1.msra.mxu0 %v46
  %965 = vmatprep.subr.mxu0 %v43
  %966 = vmatpush1.msra.mxu0 %v42
  %967 = vmatprep.subr.mxu0 %v39
  %968 = vmatpush1.msra.mxu0 %v38
  %969 = vmatprep.subr.mxu0 %v35
  %970 = vmatpush1.msra.mxu0 %v34
  %971 = vmatprep.subr.mxu0 %v31
  %972 = vmatpush1.msra.mxu0 %v30
  %973 = vmatprep.subr.mxu0 %v27
  %974 = vmatpush1.msra.mxu0 %v26
  %975 = vmatprep.subr.mxu0 %v23
  %976 = vmatpush1.msra.mxu0 %v22
  %977 = vmatprep.subr.mxu0 %v147
  %978 = vmatpush2.msra.mxu0 %v146
  %979 = vmatprep.subr.mxu0 %v143
  %980 = vmatpush2.msra.mxu0 %v142
  %981 = vmatprep.subr.mxu0 %v139
  %982 = vmatpush2.msra.mxu0 %v138
  %983 = vmatprep.subr.mxu0 %v135
  %984 = vmatpush2.msra.mxu0 %v134
  %985 = vmatprep.subr.mxu0 %v131
  %986 = vmatpush2.msra.mxu0 %v130
  %987 = vmatprep.subr.mxu0 %v127
  %988 = vmatpush2.msra.mxu0 %v126
  %989 = vmatprep.subr.mxu0 %v123
  %990 = vmatpush2.msra.mxu0 %v122
  %991 = vmatprep.subr.mxu0 %v119
  %992 = vmatpush2.msra.mxu0 %v118
  %993 = vmatprep.subr.mxu0 %v115
  %994 = vmatpush2.msra.mxu0 %v114
  %995 = vmatprep.subr.mxu0 %v111
  %996 = vmatpush2.msra.mxu0 %v110
  %997 = vmatprep.subr.mxu0 %v107
  %998 = vmatpush2.msra.mxu0 %v106
  %999 = vmatprep.subr.mxu0 %v103
  %1000 = vmatpush2.msra.mxu0 %v102
  %1001 = vmatprep.subr.mxu0 %v99
  %1002 = vmatpush2.msra.mxu0 %v98
  %1003 = vmatprep.subr.mxu0 %v95
  %1004 = vmatpush2.msra.mxu0 %v94
  %1005 = vmatprep.subr.mxu0 %v91
  %1006 = vmatpush2.msra.mxu0 %v90
  %1007 = vmatprep.subr.mxu0 %v87
  %1008 = vmatpush2.msra.mxu0 %v86
  %1009 = vmatprep.mubr.f32.mxu0 %v853
  %1010 = vmatmul.mubr.f32.gmra.mxu0 %v944
  %v1011 = vpop.f32.mrf.mxu0
  %v1012 = vadd.f32 0.0, %v1011
  %v1013 = vpop.f32.mrf.mxu0
  %v1014 = vadd.f32 0.0, %v1013
  %1015 = vdwg.mxu0
  %1016 = vmatprep.subr.mxu0 %v85
  %1017 = vmatpush1.msra.mxu0 %v84
  %1018 = vmatprep.subr.mxu0 %v81
  %1019 = vmatpush1.msra.mxu0 %v80
  %1020 = vmatprep.subr.mxu0 %v77
  %1021 = vmatpush1.msra.mxu0 %v76
  %1022 = vmatprep.subr.mxu0 %v73
  %1023 = vmatpush1.msra.mxu0 %v72
  %1024 = vmatprep.subr.mxu0 %v69
  %1025 = vmatpush1.msra.mxu0 %v68
  %1026 = vmatprep.subr.mxu0 %v65
  %1027 = vmatpush1.msra.mxu0 %v64
  %1028 = vmatprep.subr.mxu0 %v61
  %1029 = vmatpush1.msra.mxu0 %v60
  %1030 = vmatprep.subr.mxu0 %v57
  %1031 = vmatpush1.msra.mxu0 %v56
  %1032 = vmatprep.subr.mxu0 %v53
  %1033 = vmatpush1.msra.mxu0 %v52
  %1034 = vmatprep.subr.mxu0 %v49
  %1035 = vmatpush1.msra.mxu0 %v48
  %1036 = vmatprep.subr.mxu0 %v45
  %1037 = vmatpush1.msra.mxu0 %v44
  %1038 = vmatprep.subr.mxu0 %v41
  %1039 = vmatpush1.msra.mxu0 %v40
  %1040 = vmatprep.subr.mxu0 %v37
  %1041 = vmatpush1.msra.mxu0 %v36
  %1042 = vmatprep.subr.mxu0 %v33
  %1043 = vmatpush1.msra.mxu0 %v32
  %1044 = vmatprep.subr.mxu0 %v29
  %1045 = vmatpush1.msra.mxu0 %v28
  %1046 = vmatprep.subr.mxu0 %v25
  %1047 = vmatpush1.msra.mxu0 %v24
  %1048 = vmatprep.subr.mxu0 %v149
  %1049 = vmatpush2.msra.mxu0 %v148
  %1050 = vmatprep.subr.mxu0 %v145
  %1051 = vmatpush2.msra.mxu0 %v144
  %1052 = vmatprep.subr.mxu0 %v141
  %1053 = vmatpush2.msra.mxu0 %v140
  %1054 = vmatprep.subr.mxu0 %v137
  %1055 = vmatpush2.msra.mxu0 %v136
  %1056 = vmatprep.subr.mxu0 %v133
  %1057 = vmatpush2.msra.mxu0 %v132
  %1058 = vmatprep.subr.mxu0 %v129
  %1059 = vmatpush2.msra.mxu0 %v128
  %1060 = vmatprep.subr.mxu0 %v125
  %1061 = vmatpush2.msra.mxu0 %v124
  %1062 = vmatprep.subr.mxu0 %v121
  %1063 = vmatpush2.msra.mxu0 %v120
  %1064 = vmatprep.subr.mxu0 %v117
  %1065 = vmatpush2.msra.mxu0 %v116
  %1066 = vmatprep.subr.mxu0 %v113
  %1067 = vmatpush2.msra.mxu0 %v112
  %1068 = vmatprep.subr.mxu0 %v109
  %1069 = vmatpush2.msra.mxu0 %v108
  %1070 = vmatprep.subr.mxu0 %v105
  %1071 = vmatpush2.msra.mxu0 %v104
  %1072 = vmatprep.subr.mxu0 %v101
  %1073 = vmatpush2.msra.mxu0 %v100
  %1074 = vmatprep.subr.mxu0 %v97
  %1075 = vmatpush2.msra.mxu0 %v96
  %1076 = vmatprep.subr.mxu0 %v93
  %1077 = vmatpush2.msra.mxu0 %v92
  %1078 = vmatprep.subr.mxu0 %v89
  %1079 = vmatpush2.msra.mxu0 %v88
  %1080 = vmatprep.mubr.f32.mxu0 %v853
  %1081 = vmatmul.mubr.f32.gmra.mxu0 %v944
  %v1082 = vpop.f32.mrf.mxu0
  %v1083 = vadd.f32 0.0, %v1082
  %v1084 = vpop.f32.mrf.mxu0
  %v1085 = vadd.f32 0.0, %v1084
  %1086 = vdwg.mxu0
  %v1087 = vxor.u32 %v1012, 2147483648
  %v1088 = vmul.f32 %v1087, 1.442695
  %v1089 = vpow.pop %v1088
  %v1090 = vadd.f32 %v1089, 1.0
  %v1091 = vrcp.pop %v1090
  %v1092 = vmul.f32 1.0, %v1091
  %v1093 = vxor.u32 %v1014, 2147483648
  %v1094 = vmul.f32 %v1093, 1.442695
  %v1095 = vpow.pop %v1094
  %v1096 = vadd.f32 %v1095, 1.0
  %v1097 = vrcp.pop %v1096
  %v1098 = vmul.f32 1.0, %v1097
  %v1099 = vadd.f32 %v1085, %v332
  %v1100 = vmul.f32 %v1092, %v1099
  %v1101 = vadd.f32 %v1083, %v1100
  %v1102 = vtanh.pop %v1101
  %v1103 = vsub.f32 1.0, %v1098
  %v1104 = vmul.f32 %v1103, %v1102
  %v1105 = vmul.f32 %v1098, %v853
  %v1106 = vadd.f32 %v1104, %v1105
  %1107 = vmatprep.subr.mxu0 0.0
  %1108 = vmatpush1.msra.mxu0 %v166
  %1109 = vmatprep.subr.mxu0 0.0
  %1110 = vmatpush1.msra.mxu0 %v165
  %1111 = vmatprep.subr.mxu0 0.0
  %1112 = vmatpush1.msra.mxu0 %v164
  %1113 = vmatprep.subr.mxu0 0.0
  %1114 = vmatpush1.msra.mxu0 %v163
  %1115 = vmatprep.subr.mxu0 0.0
  %1116 = vmatpush1.msra.mxu0 %v162
  %1117 = vmatprep.subr.mxu0 0.0
  %1118 = vmatpush1.msra.mxu0 %v161
  %1119 = vmatprep.subr.mxu0 0.0
  %1120 = vmatpush1.msra.mxu0 %v160
  %1121 = vmatprep.subr.mxu0 0.0
  %1122 = vmatpush1.msra.mxu0 %v159
  %1123 = vmatprep.subr.mxu0 0.0
  %1124 = vmatpush1.msra.mxu0 %v158
  %1125 = vmatprep.subr.mxu0 0.0
  %1126 = vmatpush1.msra.mxu0 %v157
  %1127 = vmatprep.subr.mxu0 0.0
  %1128 = vmatpush1.msra.mxu0 %v156
  %1129 = vmatprep.subr.mxu0 0.0
  %1130 = vmatpush1.msra.mxu0 %v155
  %1131 = vmatprep.subr.mxu0 0.0
  %1132 = vmatpush1.msra.mxu0 %v154
  %1133 = vmatprep.subr.mxu0 0.0
  %1134 = vmatpush1.msra.mxu0 %v153
  %1135 = vmatprep.subr.mxu0 0.0
  %1136 = vmatpush1.msra.mxu0 %v152
  %1137 = vmatprep.subr.mxu0 0.0
  %1138 = vmatpush1.msra.mxu0 %v151
  %1139 = vmatprep.subr.mxu0 0.0
  %1140 = vmatpush2.msra.mxu0 0.0
  %1141 = vmatprep.subr.mxu0 0.0
  %1142 = vmatpush2.msra.mxu0 0.0
  %1143 = vmatprep.subr.mxu0 0.0
  %1144 = vmatpush2.msra.mxu0 0.0
  %1145 = vmatprep.subr.mxu0 0.0
  %1146 = vmatpush2.msra.mxu0 0.0
  %1147 = vmatprep.subr.mxu0 0.0
  %1148 = vmatpush2.msra.mxu0 0.0
  %1149 = vmatprep.subr.mxu0 0.0
  %1150 = vmatpush2.msra.mxu0 0.0
  %1151 = vmatprep.subr.mxu0 0.0
  %1152 = vmatpush2.msra.mxu0 0.0
  %1153 = vmatprep.subr.mxu0 0.0
  %1154 = vmatpush2.msra.mxu0 0.0
  %1155 = vmatprep.subr.mxu0 0.0
  %1156 = vmatpush2.msra.mxu0 0.0
  %1157 = vmatprep.subr.mxu0 0.0
  %1158 = vmatpush2.msra.mxu0 0.0
  %1159 = vmatprep.subr.mxu0 0.0
  %1160 = vmatpush2.msra.mxu0 0.0
  %1161 = vmatprep.subr.mxu0 0.0
  %1162 = vmatpush2.msra.mxu0 0.0
  %1163 = vmatprep.subr.mxu0 0.0
  %1164 = vmatpush2.msra.mxu0 0.0
  %1165 = vmatprep.subr.mxu0 0.0
  %1166 = vmatpush2.msra.mxu0 0.0
  %1167 = vmatprep.subr.mxu0 0.0
  %1168 = vmatpush2.msra.mxu0 0.0
  %1169 = vmatprep.subr.mxu0 0.0
  %1170 = vmatpush2.msra.mxu0 0.0
  %1171 = vmatprep.mubr.f32.mxu0 0.0
  %1172 = vmatmul.mubr.f32.gmra.mxu0 %v1106
  %v1173 = vpop.f32.mrf.mxu0
  %v1174 = vadd.f32 %v346, %v1173
  %v1175 = vpop.f32.mrf.mxu0
  %1176 = vdwg.mxu0
  %1177 = vmax.xlane.f32.xlu0 %v1174
  %v1178 = vpop.xlane.xlu0 %1177
  %vm1179 = vcmp.ge.f32.partialorder %v1174, %v1178
  %v1180 = vsel %vm1179, %v170, 128
  %v1181 = vand.u32 %v1180, 65535
  %v1182 = vshra.s32 %v1180, 16
  %v1183 = vcvt.s32.f32 %v1181
  %v1184 = vcvt.s32.f32 %v1182
  %1185 = vmin.xlane.f32.xlu0 %v1184
  %v1186 = vpop.xlane.xlu0 %1185
  %vm1187 = vcmp.eq.f32.partialorder %v1184, %v1186
  %v1188 = vsel %vm1187, %v1183, inf
  %1189 = vmin.xlane.f32.xlu0 %v1188
  %v1190 = vpop.xlane.xlu0 %1189
  %v1191 = vcvt.f32.s32 %v1190
  %v1192 = vcvt.f32.s32 %v1186
  %v1193 = vshll.u32 %v1192, 16
  %v1194 = vadd.s32 %v1193, %v1191
  %vm1195 = vcmp.eq.s32.totalorder %v170, %v1194
  %v1196 = vsel %vm1195, 1, 0
  %v1197 = vcvt.s32.f32 %v1196
  %1198 = vmatprep.subr.mxu0 %v83
  %1199 = vmatpush1.msra.mxu0 %v82
  %1200 = vmatprep.subr.mxu0 %v79
  %1201 = vmatpush1.msra.mxu0 %v78
  %1202 = vmatprep.subr.mxu0 %v75
  %1203 = vmatpush1.msra.mxu0 %v74
  %1204 = vmatprep.subr.mxu0 %v71
  %1205 = vmatpush1.msra.mxu0 %v70
  %1206 = vmatprep.subr.mxu0 %v67
  %1207 = vmatpush1.msra.mxu0 %v66
  %1208 = vmatprep.subr.mxu0 %v63
  %1209 = vmatpush1.msra.mxu0 %v62
  %1210 = vmatprep.subr.mxu0 %v59
  %1211 = vmatpush1.msra.mxu0 %v58
  %1212 = vmatprep.subr.mxu0 %v55
  %1213 = vmatpush1.msra.mxu0 %v54
  %1214 = vmatprep.subr.mxu0 %v51
  %1215 = vmatpush1.msra.mxu0 %v50
  %1216 = vmatprep.subr.mxu0 %v47
  %1217 = vmatpush1.msra.mxu0 %v46
  %1218 = vmatprep.subr.mxu0 %v43
  %1219 = vmatpush1.msra.mxu0 %v42
  %1220 = vmatprep.subr.mxu0 %v39
  %1221 = vmatpush1.msra.mxu0 %v38
  %1222 = vmatprep.subr.mxu0 %v35
  %1223 = vmatpush1.msra.mxu0 %v34
  %1224 = vmatprep.subr.mxu0 %v31
  %1225 = vmatpush1.msra.mxu0 %v30
  %1226 = vmatprep.subr.mxu0 %v27
  %1227 = vmatpush1.msra.mxu0 %v26
  %1228 = vmatprep.subr.mxu0 %v23
  %1229 = vmatpush1.msra.mxu0 %v22
  %1230 = vmatprep.subr.mxu0 %v147
  %1231 = vmatpush2.msra.mxu0 %v146
  %1232 = vmatprep.subr.mxu0 %v143
  %1233 = vmatpush2.msra.mxu0 %v142
  %1234 = vmatprep.subr.mxu0 %v139
  %1235 = vmatpush2.msra.mxu0 %v138
  %1236 = vmatprep.subr.mxu0 %v135
  %1237 = vmatpush2.msra.mxu0 %v134
  %1238 = vmatprep.subr.mxu0 %v131
  %1239 = vmatpush2.msra.mxu0 %v130
  %1240 = vmatprep.subr.mxu0 %v127
  %1241 = vmatpush2.msra.mxu0 %v126
  %1242 = vmatprep.subr.mxu0 %v123
  %1243 = vmatpush2.msra.mxu0 %v122
  %1244 = vmatprep.subr.mxu0 %v119
  %1245 = vmatpush2.msra.mxu0 %v118
  %1246 = vmatprep.subr.mxu0 %v115
  %1247 = vmatpush2.msra.mxu0 %v114
  %1248 = vmatprep.subr.mxu0 %v111
  %1249 = vmatpush2.msra.mxu0 %v110
  %1250 = vmatprep.subr.mxu0 %v107
  %1251 = vmatpush2.msra.mxu0 %v106
  %1252 = vmatprep.subr.mxu0 %v103
  %1253 = vmatpush2.msra.mxu0 %v102
  %1254 = vmatprep.subr.mxu0 %v99
  %1255 = vmatpush2.msra.mxu0 %v98
  %1256 = vmatprep.subr.mxu0 %v95
  %1257 = vmatpush2.msra.mxu0 %v94
  %1258 = vmatprep.subr.mxu0 %v91
  %1259 = vmatpush2.msra.mxu0 %v90
  %1260 = vmatprep.subr.mxu0 %v87
  %1261 = vmatpush2.msra.mxu0 %v86
  %1262 = vmatprep.mubr.f32.mxu0 %v1106
  %1263 = vmatmul.mubr.f32.gmra.mxu0 %v1197
  %v1264 = vpop.f32.mrf.mxu0
  %v1265 = vadd.f32 0.0, %v1264
  %v1266 = vpop.f32.mrf.mxu0
  %v1267 = vadd.f32 0.0, %v1266
  %1268 = vdwg.mxu0
  %1269 = vmatprep.subr.mxu0 %v85
  %1270 = vmatpush1.msra.mxu0 %v84
  %1271 = vmatprep.subr.mxu0 %v81
  %1272 = vmatpush1.msra.mxu0 %v80
  %1273 = vmatprep.subr.mxu0 %v77
  %1274 = vmatpush1.msra.mxu0 %v76
  %1275 = vmatprep.subr.mxu0 %v73
  %1276 = vmatpush1.msra.mxu0 %v72
  %1277 = vmatprep.subr.mxu0 %v69
  %1278 = vmatpush1.msra.mxu0 %v68
  %1279 = vmatprep.subr.mxu0 %v65
  %1280 = vmatpush1.msra.mxu0 %v64
  %1281 = vmatprep.subr.mxu0 %v61
  %1282 = vmatpush1.msra.mxu0 %v60
  %1283 = vmatprep.subr.mxu0 %v57
  %1284 = vmatpush1.msra.mxu0 %v56
  %1285 = vmatprep.subr.mxu0 %v53
  %1286 = vmatpush1.msra.mxu0 %v52
  %1287 = vmatprep.subr.mxu0 %v49
  %1288 = vmatpush1.msra.mxu0 %v48
  %1289 = vmatprep.subr.mxu0 %v45
  %1290 = vmatpush1.msra.mxu0 %v44
  %1291 = vmatprep.subr.mxu0 %v41
  %1292 = vmatpush1.msra.mxu0 %v40
  %1293 = vmatprep.subr.mxu0 %v37
  %1294 = vmatpush1.msra.mxu0 %v36
  %1295 = vmatprep.subr.mxu0 %v33
  %1296 = vmatpush1.msra.mxu0 %v32
  %1297 = vmatprep.subr.mxu0 %v29
  %1298 = vmatpush1.msra.mxu0 %v28
  %1299 = vmatprep.subr.mxu0 %v25
  %1300 = vmatpush1.msra.mxu0 %v24
  %1301 = vmatprep.subr.mxu0 %v149
  %1302 = vmatpush2.msra.mxu0 %v148
  %1303 = vmatprep.subr.mxu0 %v145
  %1304 = vmatpush2.msra.mxu0 %v144
  %1305 = vmatprep.subr.mxu0 %v141
  %1306 = vmatpush2.msra.mxu0 %v140
  %1307 = vmatprep.subr.mxu0 %v137
  %1308 = vmatpush2.msra.mxu0 %v136
  %1309 = vmatprep.subr.mxu0 %v133
  %1310 = vmatpush2.msra.mxu0 %v132
  %1311 = vmatprep.subr.mxu0 %v129
  %1312 = vmatpush2.msra.mxu0 %v128
  %1313 = vmatprep.subr.mxu0 %v125
  %1314 = vmatpush2.msra.mxu0 %v124
  %1315 = vmatprep.subr.mxu0 %v121
  %1316 = vmatpush2.msra.mxu0 %v120
  %1317 = vmatprep.subr.mxu0 %v117
  %1318 = vmatpush2.msra.mxu0 %v116
  %1319 = vmatprep.subr.mxu0 %v113
  %1320 = vmatpush2.msra.mxu0 %v112
  %1321 = vmatprep.subr.mxu0 %v109
  %1322 = vmatpush2.msra.mxu0 %v108
  %1323 = vmatprep.subr.mxu0 %v105
  %1324 = vmatpush2.msra.mxu0 %v104
  %1325 = vmatprep.subr.mxu0 %v101
  %1326 = vmatpush2.msra.mxu0 %v100
  %1327 = vmatprep.subr.mxu0 %v97
  %1328 = vmatpush2.msra.mxu0 %v96
  %1329 = vmatprep.subr.mxu0 %v93
  %1330 = vmatpush2.msra.mxu0 %v92
  %1331 = vmatprep.subr.mxu0 %v89
  %1332 = vmatpush2.msra.mxu0 %v88
  %1333 = vmatprep.mubr.f32.mxu0 %v1106
  %1334 = vmatmul.mubr.f32.gmra.mxu0 %v1197
  %v1335 = vpop.f32.mrf.mxu0
  %v1336 = vadd.f32 0.0, %v1335
  %v1337 = vpop.f32.mrf.mxu0
  %v1338 = vadd.f32 0.0, %v1337
  %1339 = vdwg.mxu0
  %v1340 = vxor.u32 %v1265, 2147483648
  %v1341 = vmul.f32 %v1340, 1.442695
  %v1342 = vpow.pop %v1341
  %v1343 = vadd.f32 %v1342, 1.0
  %v1344 = vrcp.pop %v1343
  %v1345 = vmul.f32 1.0, %v1344
  %v1346 = vxor.u32 %v1267, 2147483648
  %v1347 = vmul.f32 %v1346, 1.442695
  %v1348 = vpow.pop %v1347
  %v1349 = vadd.f32 %v1348, 1.0
  %v1350 = vrcp.pop %v1349
  %v1351 = vmul.f32 1.0, %v1350
  %v1352 = vadd.f32 %v1338, %v332
  %v1353 = vmul.f32 %v1345, %v1352
  %v1354 = vadd.f32 %v1336, %v1353
  %v1355 = vtanh.pop %v1354
  %v1356 = vsub.f32 1.0, %v1351
  %v1357 = vmul.f32 %v1356, %v1355
  %v1358 = vmul.f32 %v1351, %v1106
  %v1359 = vadd.f32 %v1357, %v1358
  %1360 = vmatprep.subr.mxu0 0.0
  %1361 = vmatpush1.msra.mxu0 %v166
  %1362 = vmatprep.subr.mxu0 0.0
  %1363 = vmatpush1.msra.mxu0 %v165
  %1364 = vmatprep.subr.mxu0 0.0
  %1365 = vmatpush1.msra.mxu0 %v164
  %1366 = vmatprep.subr.mxu0 0.0
  %1367 = vmatpush1.msra.mxu0 %v163
  %1368 = vmatprep.subr.mxu0 0.0
  %1369 = vmatpush1.msra.mxu0 %v162
  %1370 = vmatprep.subr.mxu0 0.0
  %1371 = vmatpush1.msra.mxu0 %v161
  %1372 = vmatprep.subr.mxu0 0.0
  %1373 = vmatpush1.msra.mxu0 %v160
  %1374 = vmatprep.subr.mxu0 0.0
  %1375 = vmatpush1.msra.mxu0 %v159
  %1376 = vmatprep.subr.mxu0 0.0
  %1377 = vmatpush1.msra.mxu0 %v158
  %1378 = vmatprep.subr.mxu0 0.0
  %1379 = vmatpush1.msra.mxu0 %v157
  %1380 = vmatprep.subr.mxu0 0.0
  %1381 = vmatpush1.msra.mxu0 %v156
  %1382 = vmatprep.subr.mxu0 0.0
  %1383 = vmatpush1.msra.mxu0 %v155
  %1384 = vmatprep.subr.mxu0 0.0
  %1385 = vmatpush1.msra.mxu0 %v154
  %1386 = vmatprep.subr.mxu0 0.0
  %1387 = vmatpush1.msra.mxu0 %v153
  %1388 = vmatprep.subr.mxu0 0.0
  %1389 = vmatpush1.msra.mxu0 %v152
  %1390 = vmatprep.subr.mxu0 0.0
  %1391 = vmatpush1.msra.mxu0 %v151
  %1392 = vmatprep.subr.mxu0 0.0
  %1393 = vmatpush2.msra.mxu0 0.0
  %1394 = vmatprep.subr.mxu0 0.0
  %1395 = vmatpush2.msra.mxu0 0.0
  %1396 = vmatprep.subr.mxu0 0.0
  %1397 = vmatpush2.msra.mxu0 0.0
  %1398 = vmatprep.subr.mxu0 0.0
  %1399 = vmatpush2.msra.mxu0 0.0
  %1400 = vmatprep.subr.mxu0 0.0
  %1401 = vmatpush2.msra.mxu0 0.0
  %1402 = vmatprep.subr.mxu0 0.0
  %1403 = vmatpush2.msra.mxu0 0.0
  %1404 = vmatprep.subr.mxu0 0.0
  %1405 = vmatpush2.msra.mxu0 0.0
  %1406 = vmatprep.subr.mxu0 0.0
  %1407 = vmatpush2.msra.mxu0 0.0
  %1408 = vmatprep.subr.mxu0 0.0
  %1409 = vmatpush2.msra.mxu0 0.0
  %1410 = vmatprep.subr.mxu0 0.0
  %1411 = vmatpush2.msra.mxu0 0.0
  %1412 = vmatprep.subr.mxu0 0.0
  %1413 = vmatpush2.msra.mxu0 0.0
  %1414 = vmatprep.subr.mxu0 0.0
  %1415 = vmatpush2.msra.mxu0 0.0
  %1416 = vmatprep.subr.mxu0 0.0
  %1417 = vmatpush2.msra.mxu0 0.0
  %1418 = vmatprep.subr.mxu0 0.0
  %1419 = vmatpush2.msra.mxu0 0.0
  %1420 = vmatprep.subr.mxu0 0.0
  %1421 = vmatpush2.msra.mxu0 0.0
  %1422 = vmatprep.subr.mxu0 0.0
  %1423 = vmatpush2.msra.mxu0 0.0
  %1424 = vmatprep.mubr.f32.mxu0 0.0
  %1425 = vmatmul.mubr.f32.gmra.mxu0 %v1359
  %v1426 = vpop.f32.mrf.mxu0
  %v1427 = vadd.f32 %v346, %v1426
  %v1428 = vpop.f32.mrf.mxu0
  %1429 = vdwg.mxu0
  %1430 = vmax.xlane.f32.xlu0 %v1427
  %v1431 = vpop.xlane.xlu0 %1430
  %vm1432 = vcmp.ge.f32.partialorder %v1427, %v1431
  %v1433 = vsel %vm1432, %v170, 128
  %v1434 = vand.u32 %v1433, 65535
  %v1435 = vshra.s32 %v1433, 16
  %v1436 = vcvt.s32.f32 %v1434
  %v1437 = vcvt.s32.f32 %v1435
  %1438 = vmin.xlane.f32.xlu0 %v1437
  %v1439 = vpop.xlane.xlu0 %1438
  %vm1440 = vcmp.eq.f32.partialorder %v1437, %v1439
  %v1441 = vsel %vm1440, %v1436, inf
  %1442 = vmin.xlane.f32.xlu0 %v1441
  %v1443 = vpop.xlane.xlu0 %1442
  %v1444 = vcvt.f32.s32 %v1443
  %v1445 = vcvt.f32.s32 %v1439
  %v1446 = vshll.u32 %v1445, 16
  %v1447 = vadd.s32 %v1446, %v1444
  %vm1448 = vcmp.eq.s32.totalorder %v170, %v1447
  %v1449 = vsel %vm1448, 1, 0
  %v1450 = vcvt.s32.f32 %v1449
  %1451 = vmatprep.subr.mxu0 %v83
  %1452 = vmatpush1.msra.mxu0 %v82
  %1453 = vmatprep.subr.mxu0 %v79
  %1454 = vmatpush1.msra.mxu0 %v78
  %1455 = vmatprep.subr.mxu0 %v75
  %1456 = vmatpush1.msra.mxu0 %v74
  %1457 = vmatprep.subr.mxu0 %v71
  %1458 = vmatpush1.msra.mxu0 %v70
  %1459 = vmatprep.subr.mxu0 %v67
  %1460 = vmatpush1.msra.mxu0 %v66
  %1461 = vmatprep.subr.mxu0 %v63
  %1462 = vmatpush1.msra.mxu0 %v62
  %1463 = vmatprep.subr.mxu0 %v59
  %1464 = vmatpush1.msra.mxu0 %v58
  %1465 = vmatprep.subr.mxu0 %v55
  %1466 = vmatpush1.msra.mxu0 %v54
  %1467 = vmatprep.subr.mxu0 %v51
  %1468 = vmatpush1.msra.mxu0 %v50
  %1469 = vmatprep.subr.mxu0 %v47
  %1470 = vmatpush1.msra.mxu0 %v46
  %1471 = vmatprep.subr.mxu0 %v43
  %1472 = vmatpush1.msra.mxu0 %v42
  %1473 = vmatprep.subr.mxu0 %v39
  %1474 = vmatpush1.msra.mxu0 %v38
  %1475 = vmatprep.subr.mxu0 %v35
  %1476 = vmatpush1.msra.mxu0 %v34
  %1477 = vmatprep.subr.mxu0 %v31
  %1478 = vmatpush1.msra.mxu0 %v30
  %1479 = vmatprep.subr.mxu0 %v27
  %1480 = vmatpush1.msra.mxu0 %v26
  %1481 = vmatprep.subr.mxu0 %v23
  %1482 = vmatpush1.msra.mxu0 %v22
  %1483 = vmatprep.subr.mxu0 %v147
  %1484 = vmatpush2.msra.mxu0 %v146
  %1485 = vmatprep.subr.mxu0 %v143
  %1486 = vmatpush2.msra.mxu0 %v142
  %1487 = vmatprep.subr.mxu0 %v139
  %1488 = vmatpush2.msra.mxu0 %v138
  %1489 = vmatprep.subr.mxu0 %v135
  %1490 = vmatpush2.msra.mxu0 %v134
  %1491 = vmatprep.subr.mxu0 %v131
  %1492 = vmatpush2.msra.mxu0 %v130
  %1493 = vmatprep.subr.mxu0 %v127
  %1494 = vmatpush2.msra.mxu0 %v126
  %1495 = vmatprep.subr.mxu0 %v123
  %1496 = vmatpush2.msra.mxu0 %v122
  %1497 = vmatprep.subr.mxu0 %v119
  %1498 = vmatpush2.msra.mxu0 %v118
  %1499 = vmatprep.subr.mxu0 %v115
  %1500 = vmatpush2.msra.mxu0 %v114
  %1501 = vmatprep.subr.mxu0 %v111
  %1502 = vmatpush2.msra.mxu0 %v110
  %1503 = vmatprep.subr.mxu0 %v107
  %1504 = vmatpush2.msra.mxu0 %v106
  %1505 = vmatprep.subr.mxu0 %v103
  %1506 = vmatpush2.msra.mxu0 %v102
  %1507 = vmatprep.subr.mxu0 %v99
  %1508 = vmatpush2.msra.mxu0 %v98
  %1509 = vmatprep.subr.mxu0 %v95
  %1510 = vmatpush2.msra.mxu0 %v94
  %1511 = vmatprep.subr.mxu0 %v91
  %1512 = vmatpush2.msra.mxu0 %v90
  %1513 = vmatprep.subr.mxu0 %v87
  %1514 = vmatpush2.msra.mxu0 %v86
  %1515 = vmatprep.mubr.f32.mxu0 %v1359
  %1516 = vmatmul.mubr.f32.gmra.mxu0 %v1450
  %v1517 = vpop.f32.mrf.mxu0
  %v1518 = vadd.f32 0.0, %v1517
  %v1519 = vpop.f32.mrf.mxu0
  %v1520 = vadd.f32 0.0, %v1519
  %1521 = vdwg.mxu0
  %1522 = vmatprep.subr.mxu0 %v85
  %1523 = vmatpush1.msra.mxu0 %v84
  %1524 = vmatprep.subr.mxu0 %v81
  %1525 = vmatpush1.msra.mxu0 %v80
  %1526 = vmatprep.subr.mxu0 %v77
  %1527 = vmatpush1.msra.mxu0 %v76
  %1528 = vmatprep.subr.mxu0 %v73
  %1529 = vmatpush1.msra.mxu0 %v72
  %1530 = vmatprep.subr.mxu0 %v69
  %1531 = vmatpush1.msra.mxu0 %v68
  %1532 = vmatprep.subr.mxu0 %v65
  %1533 = vmatpush1.msra.mxu0 %v64
  %1534 = vmatprep.subr.mxu0 %v61
  %1535 = vmatpush1.msra.mxu0 %v60
  %1536 = vmatprep.subr.mxu0 %v57
  %1537 = vmatpush1.msra.mxu0 %v56
  %1538 = vmatprep.subr.mxu0 %v53
  %1539 = vmatpush1.msra.mxu0 %v52
  %1540 = vmatprep.subr.mxu0 %v49
  %1541 = vmatpush1.msra.mxu0 %v48
  %1542 = vmatprep.subr.mxu0 %v45
  %1543 = vmatpush1.msra.mxu0 %v44
  %1544 = vmatprep.subr.mxu0 %v41
  %1545 = vmatpush1.msra.mxu0 %v40
  %1546 = vmatprep.subr.mxu0 %v37
  %1547 = vmatpush1.msra.mxu0 %v36
  %1548 = vmatprep.subr.mxu0 %v33
  %1549 = vmatpush1.msra.mxu0 %v32
  %1550 = vmatprep.subr.mxu0 %v29
  %1551 = vmatpush1.msra.mxu0 %v28
  %1552 = vmatprep.subr.mxu0 %v25
  %1553 = vmatpush1.msra.mxu0 %v24
  %1554 = vmatprep.subr.mxu0 %v149
  %1555 = vmatpush2.msra.mxu0 %v148
  %1556 = vmatprep.subr.mxu0 %v145
  %1557 = vmatpush2.msra.mxu0 %v144
  %1558 = vmatprep.subr.mxu0 %v141
  %1559 = vmatpush2.msra.mxu0 %v140
  %1560 = vmatprep.subr.mxu0 %v137
  %1561 = vmatpush2.msra.mxu0 %v136
  %1562 = vmatprep.subr.mxu0 %v133
  %1563 = vmatpush2.msra.mxu0 %v132
  %1564 = vmatprep.subr.mxu0 %v129
  %1565 = vmatpush2.msra.mxu0 %v128
  %1566 = vmatprep.subr.mxu0 %v125
  %1567 = vmatpush2.msra.mxu0 %v124
  %1568 = vmatprep.subr.mxu0 %v121
  %1569 = vmatpush2.msra.mxu0 %v120
  %1570 = vmatprep.subr.mxu0 %v117
  %1571 = vmatpush2.msra.mxu0 %v116
  %1572 = vmatprep.subr.mxu0 %v113
  %1573 = vmatpush2.msra.mxu0 %v112
  %1574 = vmatprep.subr.mxu0 %v109
  %1575 = vmatpush2.msra.mxu0 %v108
  %1576 = vmatprep.subr.mxu0 %v105
  %1577 = vmatpush2.msra.mxu0 %v104
  %1578 = vmatprep.subr.mxu0 %v101
  %1579 = vmatpush2.msra.mxu0 %v100
  %1580 = vmatprep.subr.mxu0 %v97
  %1581 = vmatpush2.msra.mxu0 %v96
  %1582 = vmatprep.subr.mxu0 %v93
  %1583 = vmatpush2.msra.mxu0 %v92
  %1584 = vmatprep.subr.mxu0 %v89
  %1585 = vmatpush2.msra.mxu0 %v88
  %1586 = vmatprep.mubr.f32.mxu0 %v1359
  %1587 = vmatmul.mubr.f32.gmra.mxu0 %v1450
  %v1588 = vpop.f32.mrf.mxu0
  %v1589 = vadd.f32 0.0, %v1588
  %v1590 = vpop.f32.mrf.mxu0
  %v1591 = vadd.f32 0.0, %v1590
  %1592 = vdwg.mxu0
  %v1593 = vxor.u32 %v1518, 2147483648
  %v1594 = vmul.f32 %v1593, 1.442695
  %v1595 = vpow.pop %v1594
  %v1596 = vadd.f32 %v1595, 1.0
  %v1597 = vrcp.pop %v1596
  %v1598 = vmul.f32 1.0, %v1597
  %v1599 = vxor.u32 %v1520, 2147483648
  %v1600 = vmul.f32 %v1599, 1.442695
  %v1601 = vpow.pop %v1600
  %v1602 = vadd.f32 %v1601, 1.0
  %v1603 = vrcp.pop %v1602
  %v1604 = vmul.f32 1.0, %v1603
  %v1605 = vadd.f32 %v1591, %v332
  %v1606 = vmul.f32 %v1598, %v1605
  %v1607 = vadd.f32 %v1589, %v1606
  %v1608 = vtanh.pop %v1607
  %v1609 = vsub.f32 1.0, %v1604
  %v1610 = vmul.f32 %v1609, %v1608
  %v1611 = vmul.f32 %v1604, %v1359
  %v1612 = vadd.f32 %v1610, %v1611
  %1613 = vmatprep.subr.mxu0 0.0
  %1614 = vmatpush1.msra.mxu0 %v166
  %1615 = vmatprep.subr.mxu0 0.0
  %1616 = vmatpush1.msra.mxu0 %v165
  %1617 = vmatprep.subr.mxu0 0.0
  %1618 = vmatpush1.msra.mxu0 %v164
  %1619 = vmatprep.subr.mxu0 0.0
  %1620 = vmatpush1.msra.mxu0 %v163
  %1621 = vmatprep.subr.mxu0 0.0
  %1622 = vmatpush1.msra.mxu0 %v162
  %1623 = vmatprep.subr.mxu0 0.0
  %1624 = vmatpush1.msra.mxu0 %v161
  %1625 = vmatprep.subr.mxu0 0.0
  %1626 = vmatpush1.msra.mxu0 %v160
  %1627 = vmatprep.subr.mxu0 0.0
  %1628 = vmatpush1.msra.mxu0 %v159
  %1629 = vmatprep.subr.mxu0 0.0
  %1630 = vmatpush1.msra.mxu0 %v158
  %1631 = vmatprep.subr.mxu0 0.0
  %1632 = vmatpush1.msra.mxu0 %v157
  %1633 = vmatprep.subr.mxu0 0.0
  %1634 = vmatpush1.msra.mxu0 %v156
  %1635 = vmatprep.subr.mxu0 0.0
  %1636 = vmatpush1.msra.mxu0 %v155
  %1637 = vmatprep.subr.mxu0 0.0
  %1638 = vmatpush1.msra.mxu0 %v154
  %1639 = vmatprep.subr.mxu0 0.0
  %1640 = vmatpush1.msra.mxu0 %v153
  %1641 = vmatprep.subr.mxu0 0.0
  %1642 = vmatpush1.msra.mxu0 %v152
  %1643 = vmatprep.subr.mxu0 0.0
  %1644 = vmatpush1.msra.mxu0 %v151
  %1645 = vmatprep.subr.mxu0 0.0
  %1646 = vmatpush2.msra.mxu0 0.0
  %1647 = vmatprep.subr.mxu0 0.0
  %1648 = vmatpush2.msra.mxu0 0.0
  %1649 = vmatprep.subr.mxu0 0.0
  %1650 = vmatpush2.msra.mxu0 0.0
  %1651 = vmatprep.subr.mxu0 0.0
  %1652 = vmatpush2.msra.mxu0 0.0
  %1653 = vmatprep.subr.mxu0 0.0
  %1654 = vmatpush2.msra.mxu0 0.0
  %1655 = vmatprep.subr.mxu0 0.0
  %1656 = vmatpush2.msra.mxu0 0.0
  %1657 = vmatprep.subr.mxu0 0.0
  %1658 = vmatpush2.msra.mxu0 0.0
  %1659 = vmatprep.subr.mxu0 0.0
  %1660 = vmatpush2.msra.mxu0 0.0
  %1661 = vmatprep.subr.mxu0 0.0
  %1662 = vmatpush2.msra.mxu0 0.0
  %1663 = vmatprep.subr.mxu0 0.0
  %1664 = vmatpush2.msra.mxu0 0.0
  %1665 = vmatprep.subr.mxu0 0.0
  %1666 = vmatpush2.msra.mxu0 0.0
  %1667 = vmatprep.subr.mxu0 0.0
  %1668 = vmatpush2.msra.mxu0 0.0
  %1669 = vmatprep.subr.mxu0 0.0
  %1670 = vmatpush2.msra.mxu0 0.0
  %1671 = vmatprep.subr.mxu0 0.0
  %1672 = vmatpush2.msra.mxu0 0.0
  %1673 = vmatprep.subr.mxu0 0.0
  %1674 = vmatpush2.msra.mxu0 0.0
  %1675 = vmatprep.subr.mxu0 0.0
  %1676 = vmatpush2.msra.mxu0 0.0
  %1677 = vmatprep.mubr.f32.mxu0 0.0
  %1678 = vmatmul.mubr.f32.gmra.mxu0 %v1612
  %v1679 = vpop.f32.mrf.mxu0
  %v1680 = vadd.f32 %v346, %v1679
  %v1681 = vpop.f32.mrf.mxu0
  %1682 = vdwg.mxu0
  %1683 = vmax.xlane.f32.xlu0 %v1680
  %v1684 = vpop.xlane.xlu0 %1683
  %vm1685 = vcmp.ge.f32.partialorder %v1680, %v1684
  %v1686 = vsel %vm1685, %v170, 128
  %v1687 = vand.u32 %v1686, 65535
  %v1688 = vshra.s32 %v1686, 16
  %v1689 = vcvt.s32.f32 %v1687
  %v1690 = vcvt.s32.f32 %v1688
  %1691 = vmin.xlane.f32.xlu0 %v1690
  %v1692 = vpop.xlane.xlu0 %1691
  %vm1693 = vcmp.eq.f32.partialorder %v1690, %v1692
  %v1694 = vsel %vm1693, %v1689, inf
  %1695 = vmin.xlane.f32.xlu0 %v1694
  %v1696 = vpop.xlane.xlu0 %1695
  %v1697 = vcvt.f32.s32 %v1696
  %v1698 = vcvt.f32.s32 %v1692
  %v1699 = vshll.u32 %v1698, 16
  %v1700 = vadd.s32 %v1699, %v1697
  %vm1701 = vcmp.eq.s32.totalorder %v170, %v1700
  %v1702 = vsel %vm1701, 1, 0
  %v1703 = vcvt.s32.f32 %v1702
  %1704 = vmatprep.subr.mxu0 %v83
  %1705 = vmatpush1.msra.mxu0 %v82
  %1706 = vmatprep.subr.mxu0 %v79
  %1707 = vmatpush1.msra.mxu0 %v78
  %1708 = vmatprep.subr.mxu0 %v75
  %1709 = vmatpush1.msra.mxu0 %v74
  %1710 = vmatprep.subr.mxu0 %v71
  %1711 = vmatpush1.msra.mxu0 %v70
  %1712 = vmatprep.subr.mxu0 %v67
  %1713 = vmatpush1.msra.mxu0 %v66
  %1714 = vmatprep.subr.mxu0 %v63
  %1715 = vmatpush1.msra.mxu0 %v62
  %1716 = vmatprep.subr.mxu0 %v59
  %1717 = vmatpush1.msra.mxu0 %v58
  %1718 = vmatprep.subr.mxu0 %v55
  %1719 = vmatpush1.msra.mxu0 %v54
  %1720 = vmatprep.subr.mxu0 %v51
  %1721 = vmatpush1.msra.mxu0 %v50
  %1722 = vmatprep.subr.mxu0 %v47
  %1723 = vmatpush1.msra.mxu0 %v46
  %1724 = vmatprep.subr.mxu0 %v43
  %1725 = vmatpush1.msra.mxu0 %v42
  %1726 = vmatprep.subr.mxu0 %v39
  %1727 = vmatpush1.msra.mxu0 %v38
  %1728 = vmatprep.subr.mxu0 %v35
  %1729 = vmatpush1.msra.mxu0 %v34
  %1730 = vmatprep.subr.mxu0 %v31
  %1731 = vmatpush1.msra.mxu0 %v30
  %1732 = vmatprep.subr.mxu0 %v27
  %1733 = vmatpush1.msra.mxu0 %v26
  %1734 = vmatprep.subr.mxu0 %v23
  %1735 = vmatpush1.msra.mxu0 %v22
  %1736 = vmatprep.subr.mxu0 %v147
  %1737 = vmatpush2.msra.mxu0 %v146
  %1738 = vmatprep.subr.mxu0 %v143
  %1739 = vmatpush2.msra.mxu0 %v142
  %1740 = vmatprep.subr.mxu0 %v139
  %1741 = vmatpush2.msra.mxu0 %v138
  %1742 = vmatprep.subr.mxu0 %v135
  %1743 = vmatpush2.msra.mxu0 %v134
  %1744 = vmatprep.subr.mxu0 %v131
  %1745 = vmatpush2.msra.mxu0 %v130
  %1746 = vmatprep.subr.mxu0 %v127
  %1747 = vmatpush2.msra.mxu0 %v126
  %1748 = vmatprep.subr.mxu0 %v123
  %1749 = vmatpush2.msra.mxu0 %v122
  %1750 = vmatprep.subr.mxu0 %v119
  %1751 = vmatpush2.msra.mxu0 %v118
  %1752 = vmatprep.subr.mxu0 %v115
  %1753 = vmatpush2.msra.mxu0 %v114
  %1754 = vmatprep.subr.mxu0 %v111
  %1755 = vmatpush2.msra.mxu0 %v110
  %1756 = vmatprep.subr.mxu0 %v107
  %1757 = vmatpush2.msra.mxu0 %v106
  %1758 = vmatprep.subr.mxu0 %v103
  %1759 = vmatpush2.msra.mxu0 %v102
  %1760 = vmatprep.subr.mxu0 %v99
  %1761 = vmatpush2.msra.mxu0 %v98
  %1762 = vmatprep.subr.mxu0 %v95
  %1763 = vmatpush2.msra.mxu0 %v94
  %1764 = vmatprep.subr.mxu0 %v91
  %1765 = vmatpush2.msra.mxu0 %v90
  %1766 = vmatprep.subr.mxu0 %v87
  %1767 = vmatpush2.msra.mxu0 %v86
  %1768 = vmatprep.mubr.f32.mxu0 %v1612
  %1769 = vmatmul.mubr.f32.gmra.mxu0 %v1703
  %v1770 = vpop.f32.mrf.mxu0
  %v1771 = vadd.f32 0.0, %v1770
  %v1772 = vpop.f32.mrf.mxu0
  %v1773 = vadd.f32 0.0, %v1772
  %1774 = vdwg.mxu0
  %1775 = vmatprep.subr.mxu0 %v85
  %1776 = vmatpush1.msra.mxu0 %v84
  %1777 = vmatprep.subr.mxu0 %v81
  %1778 = vmatpush1.msra.mxu0 %v80
  %1779 = vmatprep.subr.mxu0 %v77
  %1780 = vmatpush1.msra.mxu0 %v76
  %1781 = vmatprep.subr.mxu0 %v73
  %1782 = vmatpush1.msra.mxu0 %v72
  %1783 = vmatprep.subr.mxu0 %v69
  %1784 = vmatpush1.msra.mxu0 %v68
  %1785 = vmatprep.subr.mxu0 %v65
  %1786 = vmatpush1.msra.mxu0 %v64
  %1787 = vmatprep.subr.mxu0 %v61
  %1788 = vmatpush1.msra.mxu0 %v60
  %1789 = vmatprep.subr.mxu0 %v57
  %1790 = vmatpush1.msra.mxu0 %v56
  %1791 = vmatprep.subr.mxu0 %v53
  %1792 = vmatpush1.msra.mxu0 %v52
  %1793 = vmatprep.subr.mxu0 %v49
  %1794 = vmatpush1.msra.mxu0 %v48
  %1795 = vmatprep.subr.mxu0 %v45
  %1796 = vmatpush1.msra.mxu0 %v44
  %1797 = vmatprep.subr.mxu0 %v41
  %1798 = vmatpush1.msra.mxu0 %v40
  %1799 = vmatprep.subr.mxu0 %v37
  %1800 = vmatpush1.msra.mxu0 %v36
  %1801 = vmatprep.subr.mxu0 %v33
  %1802 = vmatpush1.msra.mxu0 %v32
  %1803 = vmatprep.subr.mxu0 %v29
  %1804 = vmatpush1.msra.mxu0 %v28
  %1805 = vmatprep.subr.mxu0 %v25
  %1806 = vmatpush1.msra.mxu0 %v24
  %1807 = vmatprep.subr.mxu0 %v149
  %1808 = vmatpush2.msra.mxu0 %v148
  %1809 = vmatprep.subr.mxu0 %v145
  %1810 = vmatpush2.msra.mxu0 %v144
  %1811 = vmatprep.subr.mxu0 %v141
  %1812 = vmatpush2.msra.mxu0 %v140
  %1813 = vmatprep.subr.mxu0 %v137
  %1814 = vmatpush2.msra.mxu0 %v136
  %1815 = vmatprep.subr.mxu0 %v133
  %1816 = vmatpush2.msra.mxu0 %v132
  %1817 = vmatprep.subr.mxu0 %v129
  %1818 = vmatpush2.msra.mxu0 %v128
  %1819 = vmatprep.subr.mxu0 %v125
  %1820 = vmatpush2.msra.mxu0 %v124
  %1821 = vmatprep.subr.mxu0 %v121
  %1822 = vmatpush2.msra.mxu0 %v120
  %1823 = vmatprep.subr.mxu0 %v117
  %1824 = vmatpush2.msra.mxu0 %v116
  %1825 = vmatprep.subr.mxu0 %v113
  %1826 = vmatpush2.msra.mxu0 %v112
  %1827 = vmatprep.subr.mxu0 %v109
  %1828 = vmatpush2.msra.mxu0 %v108
  %1829 = vmatprep.subr.mxu0 %v105
  %1830 = vmatpush2.msra.mxu0 %v104
  %1831 = vmatprep.subr.mxu0 %v101
  %1832 = vmatpush2.msra.mxu0 %v100
  %1833 = vmatprep.subr.mxu0 %v97
  %1834 = vmatpush2.msra.mxu0 %v96
  %1835 = vmatprep.subr.mxu0 %v93
  %1836 = vmatpush2.msra.mxu0 %v92
  %1837 = vmatprep.subr.mxu0 %v89
  %1838 = vmatpush2.msra.mxu0 %v88
  %1839 = vmatprep.mubr.f32.mxu0 %v1612
  %1840 = vmatmul.mubr.f32.gmra.mxu0 %v1703
  %v1841 = vpop.f32.mrf.mxu0
  %v1842 = vadd.f32 0.0, %v1841
  %v1843 = vpop.f32.mrf.mxu0
  %v1844 = vadd.f32 0.0, %v1843
  %1845 = vdwg.mxu0
  %v1846 = vxor.u32 %v1771, 2147483648
  %v1847 = vmul.f32 %v1846, 1.442695
  %v1848 = vpow.pop %v1847
  %v1849 = vadd.f32 %v1848, 1.0
  %v1850 = vrcp.pop %v1849
  %v1851 = vmul.f32 1.0, %v1850
  %v1852 = vxor.u32 %v1773, 2147483648
  %v1853 = vmul.f32 %v1852, 1.442695
  %v1854 = vpow.pop %v1853
  %v1855 = vadd.f32 %v1854, 1.0
  %v1856 = vrcp.pop %v1855
  %v1857 = vmul.f32 1.0, %v1856
  %v1858 = vadd.f32 %v1844, %v332
  %v1859 = vmul.f32 %v1851, %v1858
  %v1860 = vadd.f32 %v1842, %v1859
  %v1861 = vtanh.pop %v1860
  %v1862 = vsub.f32 1.0, %v1857
  %v1863 = vmul.f32 %v1862, %v1861
  %v1864 = vmul.f32 %v1857, %v1612
  %v1865 = vadd.f32 %v1863, %v1864
  %1866 = vmatprep.subr.mxu0 0.0
  %1867 = vmatpush1.msra.mxu0 %v166
  %1868 = vmatprep.subr.mxu0 0.0
  %1869 = vmatpush1.msra.mxu0 %v165
  %1870 = vmatprep.subr.mxu0 0.0
  %1871 = vmatpush1.msra.mxu0 %v164
  %1872 = vmatprep.subr.mxu0 0.0
  %1873 = vmatpush1.msra.mxu0 %v163
  %1874 = vmatprep.subr.mxu0 0.0
  %1875 = vmatpush1.msra.mxu0 %v162
  %1876 = vmatprep.subr.mxu0 0.0
  %1877 = vmatpush1.msra.mxu0 %v161
  %1878 = vmatprep.subr.mxu0 0.0
  %1879 = vmatpush1.msra.mxu0 %v160
  %1880 = vmatprep.subr.mxu0 0.0
  %1881 = vmatpush1.msra.mxu0 %v159
  %1882 = vmatprep.subr.mxu0 0.0
  %1883 = vmatpush1.msra.mxu0 %v158
  %1884 = vmatprep.subr.mxu0 0.0
  %1885 = vmatpush1.msra.mxu0 %v157
  %1886 = vmatprep.subr.mxu0 0.0
  %1887 = vmatpush1.msra.mxu0 %v156
  %1888 = vmatprep.subr.mxu0 0.0
  %1889 = vmatpush1.msra.mxu0 %v155
  %1890 = vmatprep.subr.mxu0 0.0
  %1891 = vmatpush1.msra.mxu0 %v154
  %1892 = vmatprep.subr.mxu0 0.0
  %1893 = vmatpush1.msra.mxu0 %v153
  %1894 = vmatprep.subr.mxu0 0.0
  %1895 = vmatpush1.msra.mxu0 %v152
  %1896 = vmatprep.subr.mxu0 0.0
  %1897 = vmatpush1.msra.mxu0 %v151
  %1898 = vmatprep.subr.mxu0 0.0
  %1899 = vmatpush2.msra.mxu0 0.0
  %1900 = vmatprep.subr.mxu0 0.0
  %1901 = vmatpush2.msra.mxu0 0.0
  %1902 = vmatprep.subr.mxu0 0.0
  %1903 = vmatpush2.msra.mxu0 0.0
  %1904 = vmatprep.subr.mxu0 0.0
  %1905 = vmatpush2.msra.mxu0 0.0
  %1906 = vmatprep.subr.mxu0 0.0
  %1907 = vmatpush2.msra.mxu0 0.0
  %1908 = vmatprep.subr.mxu0 0.0
  %1909 = vmatpush2.msra.mxu0 0.0
  %1910 = vmatprep.subr.mxu0 0.0
  %1911 = vmatpush2.msra.mxu0 0.0
  %1912 = vmatprep.subr.mxu0 0.0
  %1913 = vmatpush2.msra.mxu0 0.0
  %1914 = vmatprep.subr.mxu0 0.0
  %1915 = vmatpush2.msra.mxu0 0.0
  %1916 = vmatprep.subr.mxu0 0.0
  %1917 = vmatpush2.msra.mxu0 0.0
  %1918 = vmatprep.subr.mxu0 0.0
  %1919 = vmatpush2.msra.mxu0 0.0
  %1920 = vmatprep.subr.mxu0 0.0
  %1921 = vmatpush2.msra.mxu0 0.0
  %1922 = vmatprep.subr.mxu0 0.0
  %1923 = vmatpush2.msra.mxu0 0.0
  %1924 = vmatprep.subr.mxu0 0.0
  %1925 = vmatpush2.msra.mxu0 0.0
  %1926 = vmatprep.subr.mxu0 0.0
  %1927 = vmatpush2.msra.mxu0 0.0
  %1928 = vmatprep.subr.mxu0 0.0
  %1929 = vmatpush2.msra.mxu0 0.0
  %1930 = vmatprep.mubr.f32.mxu0 0.0
  %1931 = vmatmul.mubr.f32.gmra.mxu0 %v1865
  %v1932 = vpop.f32.mrf.mxu0
  %v1933 = vadd.f32 %v346, %v1932
  %v1934 = vpop.f32.mrf.mxu0
  %1935 = vdwg.mxu0
  %1936 = vmax.xlane.f32.xlu0 %v1933
  %v1937 = vpop.xlane.xlu0 %1936
  %vm1938 = vcmp.ge.f32.partialorder %v1933, %v1937
  %v1939 = vsel %vm1938, %v170, 128
  %v1940 = vand.u32 %v1939, 65535
  %v1941 = vshra.s32 %v1939, 16
  %v1942 = vcvt.s32.f32 %v1940
  %v1943 = vcvt.s32.f32 %v1941
  %1944 = vmin.xlane.f32.xlu0 %v1943
  %v1945 = vpop.xlane.xlu0 %1944
  %vm1946 = vcmp.eq.f32.partialorder %v1943, %v1945
  %v1947 = vsel %vm1946, %v1942, inf
  %1948 = vmin.xlane.f32.xlu0 %v1947
  %v1949 = vpop.xlane.xlu0 %1948
  %v1950 = vcvt.f32.s32 %v1949
  %v1951 = vcvt.f32.s32 %v1945
  %v1952 = vshll.u32 %v1951, 16
  %v1953 = vadd.s32 %v1952, %v1950
  %vm1954 = vcmp.eq.s32.totalorder %v170, %v1953
  %v1955 = vsel %vm1954, 1, 0
  %v1956 = vcvt.s32.f32 %v1955
  %1957 = vmatprep.subr.mxu0 %v83
  %1958 = vmatpush1.msra.mxu0 %v82
  %1959 = vmatprep.subr.mxu0 %v79
  %1960 = vmatpush1.msra.mxu0 %v78
  %1961 = vmatprep.subr.mxu0 %v75
  %1962 = vmatpush1.msra.mxu0 %v74
  %1963 = vmatprep.subr.mxu0 %v71
  %1964 = vmatpush1.msra.mxu0 %v70
  %1965 = vmatprep.subr.mxu0 %v67
  %1966 = vmatpush1.msra.mxu0 %v66
  %1967 = vmatprep.subr.mxu0 %v63
  %1968 = vmatpush1.msra.mxu0 %v62
  %1969 = vmatprep.subr.mxu0 %v59
  %1970 = vmatpush1.msra.mxu0 %v58
  %1971 = vmatprep.subr.mxu0 %v55
  %1972 = vmatpush1.msra.mxu0 %v54
  %1973 = vmatprep.subr.mxu0 %v51
  %1974 = vmatpush1.msra.mxu0 %v50
  %1975 = vmatprep.subr.mxu0 %v47
  %1976 = vmatpush1.msra.mxu0 %v46
  %1977 = vmatprep.subr.mxu0 %v43
  %1978 = vmatpush1.msra.mxu0 %v42
  %1979 = vmatprep.subr.mxu0 %v39
  %1980 = vmatpush1.msra.mxu0 %v38
  %1981 = vmatprep.subr.mxu0 %v35
  %1982 = vmatpush1.msra.mxu0 %v34
  %1983 = vmatprep.subr.mxu0 %v31
  %1984 = vmatpush1.msra.mxu0 %v30
  %1985 = vmatprep.subr.mxu0 %v27
  %1986 = vmatpush1.msra.mxu0 %v26
  %1987 = vmatprep.subr.mxu0 %v23
  %1988 = vmatpush1.msra.mxu0 %v22
  %1989 = vmatprep.subr.mxu0 %v147
  %1990 = vmatpush2.msra.mxu0 %v146
  %1991 = vmatprep.subr.mxu0 %v143
  %1992 = vmatpush2.msra.mxu0 %v142
  %1993 = vmatprep.subr.mxu0 %v139
  %1994 = vmatpush2.msra.mxu0 %v138
  %1995 = vmatprep.subr.mxu0 %v135
  %1996 = vmatpush2.msra.mxu0 %v134
  %1997 = vmatprep.subr.mxu0 %v131
  %1998 = vmatpush2.msra.mxu0 %v130
  %1999 = vmatprep.subr.mxu0 %v127
  %2000 = vmatpush2.msra.mxu0 %v126
  %2001 = vmatprep.subr.mxu0 %v123
  %2002 = vmatpush2.msra.mxu0 %v122
  %2003 = vmatprep.subr.mxu0 %v119
  %2004 = vmatpush2.msra.mxu0 %v118
  %2005 = vmatprep.subr.mxu0 %v115
  %2006 = vmatpush2.msra.mxu0 %v114
  %2007 = vmatprep.subr.mxu0 %v111
  %2008 = vmatpush2.msra.mxu0 %v110
  %2009 = vmatprep.subr.mxu0 %v107
  %2010 = vmatpush2.msra.mxu0 %v106
  %2011 = vmatprep.subr.mxu0 %v103
  %2012 = vmatpush2.msra.mxu0 %v102
  %2013 = vmatprep.subr.mxu0 %v99
  %2014 = vmatpush2.msra.mxu0 %v98
  %2015 = vmatprep.subr.mxu0 %v95
  %2016 = vmatpush2.msra.mxu0 %v94
  %2017 = vmatprep.subr.mxu0 %v91
  %2018 = vmatpush2.msra.mxu0 %v90
  %2019 = vmatprep.subr.mxu0 %v87
  %2020 = vmatpush2.msra.mxu0 %v86
  %2021 = vmatprep.mubr.f32.mxu0 %v1865
  %2022 = vmatmul.mubr.f32.gmra.mxu0 %v1956
  %v2023 = vpop.f32.mrf.mxu0
  %v2024 = vadd.f32 0.0, %v2023
  %v2025 = vpop.f32.mrf.mxu0
  %v2026 = vadd.f32 0.0, %v2025
  %2027 = vdwg.mxu0
  %2028 = vmatprep.subr.mxu0 %v85
  %2029 = vmatpush1.msra.mxu0 %v84
  %2030 = vmatprep.subr.mxu0 %v81
  %2031 = vmatpush1.msra.mxu0 %v80
  %2032 = vmatprep.subr.mxu0 %v77
  %2033 = vmatpush1.msra.mxu0 %v76
  %2034 = vmatprep.subr.mxu0 %v73
  %2035 = vmatpush1.msra.mxu0 %v72
  %2036 = vmatprep.subr.mxu0 %v69
  %2037 = vmatpush1.msra.mxu0 %v68
  %2038 = vmatprep.subr.mxu0 %v65
  %2039 = vmatpush1.msra.mxu0 %v64
  %2040 = vmatprep.subr.mxu0 %v61
  %2041 = vmatpush1.msra.mxu0 %v60
  %2042 = vmatprep.subr.mxu0 %v57
  %2043 = vmatpush1.msra.mxu0 %v56
  %2044 = vmatprep.subr.mxu0 %v53
  %2045 = vmatpush1.msra.mxu0 %v52
  %2046 = vmatprep.subr.mxu0 %v49
  %2047 = vmatpush1.msra.mxu0 %v48
  %2048 = vmatprep.subr.mxu0 %v45
  %2049 = vmatpush1.msra.mxu0 %v44
  %2050 = vmatprep.subr.mxu0 %v41
  %2051 = vmatpush1.msra.mxu0 %v40
  %2052 = vmatprep.subr.mxu0 %v37
  %2053 = vmatpush1.msra.mxu0 %v36
  %2054 = vmatprep.subr.mxu0 %v33
  %2055 = vmatpush1.msra.mxu0 %v32
  %2056 = vmatprep.subr.mxu0 %v29
  %2057 = vmatpush1.msra.mxu0 %v28
  %2058 = vmatprep.subr.mxu0 %v25
  %2059 = vmatpush1.msra.mxu0 %v24
  %2060 = vmatprep.subr.mxu0 %v149
  %2061 = vmatpush2.msra.mxu0 %v148
  %2062 = vmatprep.subr.mxu0 %v145
  %2063 = vmatpush2.msra.mxu0 %v144
  %2064 = vmatprep.subr.mxu0 %v141
  %2065 = vmatpush2.msra.mxu0 %v140
  %2066 = vmatprep.subr.mxu0 %v137
  %2067 = vmatpush2.msra.mxu0 %v136
  %2068 = vmatprep.subr.mxu0 %v133
  %2069 = vmatpush2.msra.mxu0 %v132
  %2070 = vmatprep.subr.mxu0 %v129
  %2071 = vmatpush2.msra.mxu0 %v128
  %2072 = vmatprep.subr.mxu0 %v125
  %2073 = vmatpush2.msra.mxu0 %v124
  %2074 = vmatprep.subr.mxu0 %v121
  %2075 = vmatpush2.msra.mxu0 %v120
  %2076 = vmatprep.subr.mxu0 %v117
  %2077 = vmatpush2.msra.mxu0 %v116
  %2078 = vmatprep.subr.mxu0 %v113
  %2079 = vmatpush2.msra.mxu0 %v112
  %2080 = vmatprep.subr.mxu0 %v109
  %2081 = vmatpush2.msra.mxu0 %v108
  %2082 = vmatprep.subr.mxu0 %v105
  %2083 = vmatpush2.msra.mxu0 %v104
  %2084 = vmatprep.subr.mxu0 %v101
  %2085 = vmatpush2.msra.mxu0 %v100
  %2086 = vmatprep.subr.mxu0 %v97
  %2087 = vmatpush2.msra.mxu0 %v96
  %2088 = vmatprep.subr.mxu0 %v93
  %2089 = vmatpush2.msra.mxu0 %v92
  %2090 = vmatprep.subr.mxu0 %v89
  %2091 = vmatpush2.msra.mxu0 %v88
  %2092 = vmatprep.mubr.f32.mxu0 %v1865
  %2093 = vmatmul.mubr.f32.gmra.mxu0 %v1956
  %v2094 = vpop.f32.mrf.mxu0
  %v2095 = vadd.f32 0.0, %v2094
  %v2096 = vpop.f32.mrf.mxu0
  %v2097 = vadd.f32 0.0, %v2096
  %2098 = vdwg.mxu0
  %v2099 = vxor.u32 %v2024, 2147483648
  %v2100 = vmul.f32 %v2099, 1.442695
  %v2101 = vpow.pop %v2100
  %v2102 = vadd.f32 %v2101, 1.0
  %v2103 = vrcp.pop %v2102
  %v2104 = vmul.f32 1.0, %v2103
  %v2105 = vxor.u32 %v2026, 2147483648
  %v2106 = vmul.f32 %v2105, 1.442695
  %v2107 = vpow.pop %v2106
  %v2108 = vadd.f32 %v2107, 1.0
  %v2109 = vrcp.pop %v2108
  %v2110 = vmul.f32 1.0, %v2109
  %v2111 = vadd.f32 %v2097, %v332
  %v2112 = vmul.f32 %v2104, %v2111
  %v2113 = vadd.f32 %v2095, %v2112
  %v2114 = vtanh.pop %v2113
  %v2115 = vsub.f32 1.0, %v2110
  %v2116 = vmul.f32 %v2115, %v2114
  %v2117 = vmul.f32 %v2110, %v1865
  %v2118 = vadd.f32 %v2116, %v2117
  %2119 = vmatprep.subr.mxu0 0.0
  %2120 = vmatpush1.msra.mxu0 %v166
  %2121 = vmatprep.subr.mxu0 0.0
  %2122 = vmatpush1.msra.mxu0 %v165
  %2123 = vmatprep.subr.mxu0 0.0
  %2124 = vmatpush1.msra.mxu0 %v164
  %2125 = vmatprep.subr.mxu0 0.0
  %2126 = vmatpush1.msra.mxu0 %v163
  %2127 = vmatprep.subr.mxu0 0.0
  %2128 = vmatpush1.msra.mxu0 %v162
  %2129 = vmatprep.subr.mxu0 0.0
  %2130 = vmatpush1.msra.mxu0 %v161
  %2131 = vmatprep.subr.mxu0 0.0
  %2132 = vmatpush1.msra.mxu0 %v160
  %2133 = vmatprep.subr.mxu0 0.0
  %2134 = vmatpush1.msra.mxu0 %v159
  %2135 = vmatprep.subr.mxu0 0.0
  %2136 = vmatpush1.msra.mxu0 %v158
  %2137 = vmatprep.subr.mxu0 0.0
  %2138 = vmatpush1.msra.mxu0 %v157
  %2139 = vmatprep.subr.mxu0 0.0
  %2140 = vmatpush1.msra.mxu0 %v156
  %2141 = vmatprep.subr.mxu0 0.0
  %2142 = vmatpush1.msra.mxu0 %v155
  %2143 = vmatprep.subr.mxu0 0.0
  %2144 = vmatpush1.msra.mxu0 %v154
  %2145 = vmatprep.subr.mxu0 0.0
  %2146 = vmatpush1.msra.mxu0 %v153
  %2147 = vmatprep.subr.mxu0 0.0
  %2148 = vmatpush1.msra.mxu0 %v152
  %2149 = vmatprep.subr.mxu0 0.0
  %2150 = vmatpush1.msra.mxu0 %v151
  %2151 = vmatprep.subr.mxu0 0.0
  %2152 = vmatpush2.msra.mxu0 0.0
  %2153 = vmatprep.subr.mxu0 0.0
  %2154 = vmatpush2.msra.mxu0 0.0
  %2155 = vmatprep.subr.mxu0 0.0
  %2156 = vmatpush2.msra.mxu0 0.0
  %2157 = vmatprep.subr.mxu0 0.0
  %2158 = vmatpush2.msra.mxu0 0.0
  %2159 = vmatprep.subr.mxu0 0.0
  %2160 = vmatpush2.msra.mxu0 0.0
  %2161 = vmatprep.subr.mxu0 0.0
  %2162 = vmatpush2.msra.mxu0 0.0
  %2163 = vmatprep.subr.mxu0 0.0
  %2164 = vmatpush2.msra.mxu0 0.0
  %2165 = vmatprep.subr.mxu0 0.0
  %2166 = vmatpush2.msra.mxu0 0.0
  %2167 = vmatprep.subr.mxu0 0.0
  %2168 = vmatpush2.msra.mxu0 0.0
  %2169 = vmatprep.subr.mxu0 0.0
  %2170 = vmatpush2.msra.mxu0 0.0
  %2171 = vmatprep.subr.mxu0 0.0
  %2172 = vmatpush2.msra.mxu0 0.0
  %2173 = vmatprep.subr.mxu0 0.0
  %2174 = vmatpush2.msra.mxu0 0.0
  %2175 = vmatprep.subr.mxu0 0.0
  %2176 = vmatpush2.msra.mxu0 0.0
  %2177 = vmatprep.subr.mxu0 0.0
  %2178 = vmatpush2.msra.mxu0 0.0
  %2179 = vmatprep.subr.mxu0 0.0
  %2180 = vmatpush2.msra.mxu0 0.0
  %2181 = vmatprep.subr.mxu0 0.0
  %2182 = vmatpush2.msra.mxu0 0.0
  %2183 = vmatprep.mubr.f32.mxu0 0.0
  %2184 = vmatmul.mubr.f32.gmra.mxu0 %v2118
  %v2185 = vpop.f32.mrf.mxu0
  %v2186 = vadd.f32 %v346, %v2185
  %v2187 = vpop.f32.mrf.mxu0
  %2188 = vdwg.mxu0
  %2189 = vmax.xlane.f32.xlu0 %v2186
  %v2190 = vpop.xlane.xlu0 %2189
  %vm2191 = vcmp.ge.f32.partialorder %v2186, %v2190
  %v2192 = vsel %vm2191, %v170, 128
  %v2193 = vand.u32 %v2192, 65535
  %v2194 = vshra.s32 %v2192, 16
  %v2195 = vcvt.s32.f32 %v2193
  %v2196 = vcvt.s32.f32 %v2194
  %2197 = vmin.xlane.f32.xlu0 %v2196
  %v2198 = vpop.xlane.xlu0 %2197
  %vm2199 = vcmp.eq.f32.partialorder %v2196, %v2198
  %v2200 = vsel %vm2199, %v2195, inf
  %2201 = vmin.xlane.f32.xlu0 %v2200
  %v2202 = vpop.xlane.xlu0 %2201
  %v2203 = vcvt.f32.s32 %v2202
  %v2204 = vcvt.f32.s32 %v2198
  %v2205 = vshll.u32 %v2204, 16
  %v2206 = vadd.s32 %v2205, %v2203
  %vm2207 = vcmp.eq.s32.totalorder %v170, %v2206
  %v2208 = vsel %vm2207, 1, 0
  %v2209 = vcvt.s32.f32 %v2208
  %2210 = vmatprep.subr.mxu0 %v83
  %2211 = vmatpush1.msra.mxu0 %v82
  %2212 = vmatprep.subr.mxu0 %v79
  %2213 = vmatpush1.msra.mxu0 %v78
  %2214 = vmatprep.subr.mxu0 %v75
  %2215 = vmatpush1.msra.mxu0 %v74
  %2216 = vmatprep.subr.mxu0 %v71
  %2217 = vmatpush1.msra.mxu0 %v70
  %2218 = vmatprep.subr.mxu0 %v67
  %2219 = vmatpush1.msra.mxu0 %v66
  %2220 = vmatprep.subr.mxu0 %v63
  %2221 = vmatpush1.msra.mxu0 %v62
  %2222 = vmatprep.subr.mxu0 %v59
  %2223 = vmatpush1.msra.mxu0 %v58
  %2224 = vmatprep.subr.mxu0 %v55
  %2225 = vmatpush1.msra.mxu0 %v54
  %2226 = vmatprep.subr.mxu0 %v51
  %2227 = vmatpush1.msra.mxu0 %v50
  %2228 = vmatprep.subr.mxu0 %v47
  %2229 = vmatpush1.msra.mxu0 %v46
  %2230 = vmatprep.subr.mxu0 %v43
  %2231 = vmatpush1.msra.mxu0 %v42
  %2232 = vmatprep.subr.mxu0 %v39
  %2233 = vmatpush1.msra.mxu0 %v38
  %2234 = vmatprep.subr.mxu0 %v35
  %2235 = vmatpush1.msra.mxu0 %v34
  %2236 = vmatprep.subr.mxu0 %v31
  %2237 = vmatpush1.msra.mxu0 %v30
  %2238 = vmatprep.subr.mxu0 %v27
  %2239 = vmatpush1.msra.mxu0 %v26
  %2240 = vmatprep.subr.mxu0 %v23
  %2241 = vmatpush1.msra.mxu0 %v22
  %2242 = vmatprep.subr.mxu0 %v147
  %2243 = vmatpush2.msra.mxu0 %v146
  %2244 = vmatprep.subr.mxu0 %v143
  %2245 = vmatpush2.msra.mxu0 %v142
  %2246 = vmatprep.subr.mxu0 %v139
  %2247 = vmatpush2.msra.mxu0 %v138
  %2248 = vmatprep.subr.mxu0 %v135
  %2249 = vmatpush2.msra.mxu0 %v134
  %2250 = vmatprep.subr.mxu0 %v131
  %2251 = vmatpush2.msra.mxu0 %v130
  %2252 = vmatprep.subr.mxu0 %v127
  %2253 = vmatpush2.msra.mxu0 %v126
  %2254 = vmatprep.subr.mxu0 %v123
  %2255 = vmatpush2.msra.mxu0 %v122
  %2256 = vmatprep.subr.mxu0 %v119
  %2257 = vmatpush2.msra.mxu0 %v118
  %2258 = vmatprep.subr.mxu0 %v115
  %2259 = vmatpush2.msra.mxu0 %v114
  %2260 = vmatprep.subr.mxu0 %v111
  %2261 = vmatpush2.msra.mxu0 %v110
  %2262 = vmatprep.subr.mxu0 %v107
  %2263 = vmatpush2.msra.mxu0 %v106
  %2264 = vmatprep.subr.mxu0 %v103
  %2265 = vmatpush2.msra.mxu0 %v102
  %2266 = vmatprep.subr.mxu0 %v99
  %2267 = vmatpush2.msra.mxu0 %v98
  %2268 = vmatprep.subr.mxu0 %v95
  %2269 = vmatpush2.msra.mxu0 %v94
  %2270 = vmatprep.subr.mxu0 %v91
  %2271 = vmatpush2.msra.mxu0 %v90
  %2272 = vmatprep.subr.mxu0 %v87
  %2273 = vmatpush2.msra.mxu0 %v86
  %2274 = vmatprep.mubr.f32.mxu0 %v2118
  %2275 = vmatmul.mubr.f32.gmra.mxu0 %v2209
  %v2276 = vpop.f32.mrf.mxu0
  %v2277 = vadd.f32 0.0, %v2276
  %v2278 = vpop.f32.mrf.mxu0
  %v2279 = vadd.f32 0.0, %v2278
  %2280 = vdwg.mxu0
  %2281 = vmatprep.subr.mxu0 %v85
  %2282 = vmatpush1.msra.mxu0 %v84
  %2283 = vmatprep.subr.mxu0 %v81
  %2284 = vmatpush1.msra.mxu0 %v80
  %2285 = vmatprep.subr.mxu0 %v77
  %2286 = vmatpush1.msra.mxu0 %v76
  %2287 = vmatprep.subr.mxu0 %v73
  %2288 = vmatpush1.msra.mxu0 %v72
  %2289 = vmatprep.subr.mxu0 %v69
  %2290 = vmatpush1.msra.mxu0 %v68
  %2291 = vmatprep.subr.mxu0 %v65
  %2292 = vmatpush1.msra.mxu0 %v64
  %2293 = vmatprep.subr.mxu0 %v61
  %2294 = vmatpush1.msra.mxu0 %v60
  %2295 = vmatprep.subr.mxu0 %v57
  %2296 = vmatpush1.msra.mxu0 %v56
  %2297 = vmatprep.subr.mxu0 %v53
  %2298 = vmatpush1.msra.mxu0 %v52
  %2299 = vmatprep.subr.mxu0 %v49
  %2300 = vmatpush1.msra.mxu0 %v48
  %2301 = vmatprep.subr.mxu0 %v45
  %2302 = vmatpush1.msra.mxu0 %v44
  %2303 = vmatprep.subr.mxu0 %v41
  %2304 = vmatpush1.msra.mxu0 %v40
  %2305 = vmatprep.subr.mxu0 %v37
  %2306 = vmatpush1.msra.mxu0 %v36
  %2307 = vmatprep.subr.mxu0 %v33
  %2308 = vmatpush1.msra.mxu0 %v32
  %2309 = vmatprep.subr.mxu0 %v29
  %2310 = vmatpush1.msra.mxu0 %v28
  %2311 = vmatprep.subr.mxu0 %v25
  %2312 = vmatpush1.msra.mxu0 %v24
  %2313 = vmatprep.subr.mxu0 %v149
  %2314 = vmatpush2.msra.mxu0 %v148
  %2315 = vmatprep.subr.mxu0 %v145
  %2316 = vmatpush2.msra.mxu0 %v144
  %2317 = vmatprep.subr.mxu0 %v141
  %2318 = vmatpush2.msra.mxu0 %v140
  %2319 = vmatprep.subr.mxu0 %v137
  %2320 = vmatpush2.msra.mxu0 %v136
  %2321 = vmatprep.subr.mxu0 %v133
  %2322 = vmatpush2.msra.mxu0 %v132
  %2323 = vmatprep.subr.mxu0 %v129
  %2324 = vmatpush2.msra.mxu0 %v128
  %2325 = vmatprep.subr.mxu0 %v125
  %2326 = vmatpush2.msra.mxu0 %v124
  %2327 = vmatprep.subr.mxu0 %v121
  %2328 = vmatpush2.msra.mxu0 %v120
  %2329 = vmatprep.subr.mxu0 %v117
  %2330 = vmatpush2.msra.mxu0 %v116
  %2331 = vmatprep.subr.mxu0 %v113
  %2332 = vmatpush2.msra.mxu0 %v112
  %2333 = vmatprep.subr.mxu0 %v109
  %2334 = vmatpush2.msra.mxu0 %v108
  %2335 = vmatprep.subr.mxu0 %v105
  %2336 = vmatpush2.msra.mxu0 %v104
  %2337 = vmatprep.subr.mxu0 %v101
  %2338 = vmatpush2.msra.mxu0 %v100
  %2339 = vmatprep.subr.mxu0 %v97
  %2340 = vmatpush2.msra.mxu0 %v96
  %2341 = vmatprep.subr.mxu0 %v93
  %2342 = vmatpush2.msra.mxu0 %v92
  %2343 = vmatprep.subr.mxu0 %v89
  %2344 = vmatpush2.msra.mxu0 %v88
  %2345 = vmatprep.mubr.f32.mxu0 %v2118
  %2346 = vmatmul.mubr.f32.gmra.mxu0 %v2209
  %v2347 = vpop.f32.mrf.mxu0
  %v2348 = vadd.f32 0.0, %v2347
  %v2349 = vpop.f32.mrf.mxu0
  %v2350 = vadd.f32 0.0, %v2349
  %2351 = vdwg.mxu0
  %v2352 = vxor.u32 %v2277, 2147483648
  %v2353 = vmul.f32 %v2352, 1.442695
  %v2354 = vpow.pop %v2353
  %v2355 = vadd.f32 %v2354, 1.0
  %v2356 = vrcp.pop %v2355
  %v2357 = vmul.f32 1.0, %v2356
  %v2358 = vxor.u32 %v2279, 2147483648
  %v2359 = vmul.f32 %v2358, 1.442695
  %v2360 = vpow.pop %v2359
  %v2361 = vadd.f32 %v2360, 1.0
  %v2362 = vrcp.pop %v2361
  %v2363 = vmul.f32 1.0, %v2362
  %v2364 = vadd.f32 %v2350, %v332
  %v2365 = vmul.f32 %v2357, %v2364
  %v2366 = vadd.f32 %v2348, %v2365
  %v2367 = vtanh.pop %v2366
  %v2368 = vsub.f32 1.0, %v2363
  %v2369 = vmul.f32 %v2368, %v2367
  %v2370 = vmul.f32 %v2363, %v2118
  %v2371 = vadd.f32 %v2369, %v2370
  %2372 = vmatprep.subr.mxu0 0.0
  %2373 = vmatpush1.msra.mxu0 %v166
  %2374 = vmatprep.subr.mxu0 0.0
  %2375 = vmatpush1.msra.mxu0 %v165
  %2376 = vmatprep.subr.mxu0 0.0
  %2377 = vmatpush1.msra.mxu0 %v164
  %2378 = vmatprep.subr.mxu0 0.0
  %2379 = vmatpush1.msra.mxu0 %v163
  %2380 = vmatprep.subr.mxu0 0.0
  %2381 = vmatpush1.msra.mxu0 %v162
  %2382 = vmatprep.subr.mxu0 0.0
  %2383 = vmatpush1.msra.mxu0 %v161
  %2384 = vmatprep.subr.mxu0 0.0
  %2385 = vmatpush1.msra.mxu0 %v160
  %2386 = vmatprep.subr.mxu0 0.0
  %2387 = vmatpush1.msra.mxu0 %v159
  %2388 = vmatprep.subr.mxu0 0.0
  %2389 = vmatpush1.msra.mxu0 %v158
  %2390 = vmatprep.subr.mxu0 0.0
  %2391 = vmatpush1.msra.mxu0 %v157
  %2392 = vmatprep.subr.mxu0 0.0
  %2393 = vmatpush1.msra.mxu0 %v156
  %2394 = vmatprep.subr.mxu0 0.0
  %2395 = vmatpush1.msra.mxu0 %v155
  %2396 = vmatprep.subr.mxu0 0.0
  %2397 = vmatpush1.msra.mxu0 %v154
  %2398 = vmatprep.subr.mxu0 0.0
  %2399 = vmatpush1.msra.mxu0 %v153
  %2400 = vmatprep.subr.mxu0 0.0
  %2401 = vmatpush1.msra.mxu0 %v152
  %2402 = vmatprep.subr.mxu0 0.0
  %2403 = vmatpush1.msra.mxu0 %v151
  %2404 = vmatprep.subr.mxu0 0.0
  %2405 = vmatpush2.msra.mxu0 0.0
  %2406 = vmatprep.subr.mxu0 0.0
  %2407 = vmatpush2.msra.mxu0 0.0
  %2408 = vmatprep.subr.mxu0 0.0
  %2409 = vmatpush2.msra.mxu0 0.0
  %2410 = vmatprep.subr.mxu0 0.0
  %2411 = vmatpush2.msra.mxu0 0.0
  %2412 = vmatprep.subr.mxu0 0.0
  %2413 = vmatpush2.msra.mxu0 0.0
  %2414 = vmatprep.subr.mxu0 0.0
  %2415 = vmatpush2.msra.mxu0 0.0
  %2416 = vmatprep.subr.mxu0 0.0
  %2417 = vmatpush2.msra.mxu0 0.0
  %2418 = vmatprep.subr.mxu0 0.0
  %2419 = vmatpush2.msra.mxu0 0.0
  %2420 = vmatprep.subr.mxu0 0.0
  %2421 = vmatpush2.msra.mxu0 0.0
  %2422 = vmatprep.subr.mxu0 0.0
  %2423 = vmatpush2.msra.mxu0 0.0
  %2424 = vmatprep.subr.mxu0 0.0
  %2425 = vmatpush2.msra.mxu0 0.0
  %2426 = vmatprep.subr.mxu0 0.0
  %2427 = vmatpush2.msra.mxu0 0.0
  %2428 = vmatprep.subr.mxu0 0.0
  %2429 = vmatpush2.msra.mxu0 0.0
  %2430 = vmatprep.subr.mxu0 0.0
  %2431 = vmatpush2.msra.mxu0 0.0
  %2432 = vmatprep.subr.mxu0 0.0
  %2433 = vmatpush2.msra.mxu0 0.0
  %2434 = vmatprep.subr.mxu0 0.0
  %2435 = vmatpush2.msra.mxu0 0.0
  %2436 = vmatprep.mubr.f32.mxu0 0.0
  %2437 = vmatmul.mubr.f32.gmra.mxu0 %v2371
  %v2438 = vpop.f32.mrf.mxu0
  %v2439 = vadd.f32 %v346, %v2438
  %v2440 = vpop.f32.mrf.mxu0
  %2441 = vdwg.mxu0
  %2442 = vmax.xlane.f32.xlu0 %v2439
  %v2443 = vpop.xlane.xlu0 %2442
  %vm2444 = vcmp.ge.f32.partialorder %v2439, %v2443
  %v2445 = vsel %vm2444, %v170, 128
  %v2446 = vand.u32 %v2445, 65535
  %v2447 = vshra.s32 %v2445, 16
  %v2448 = vcvt.s32.f32 %v2446
  %v2449 = vcvt.s32.f32 %v2447
  %2450 = vmin.xlane.f32.xlu0 %v2449
  %v2451 = vpop.xlane.xlu0 %2450
  %vm2452 = vcmp.eq.f32.partialorder %v2449, %v2451
  %v2453 = vsel %vm2452, %v2448, inf
  %2454 = vmin.xlane.f32.xlu0 %v2453
  %v2455 = vpop.xlane.xlu0 %2454
  %v2456 = vcvt.f32.s32 %v2455
  %v2457 = vcvt.f32.s32 %v2451
  %v2458 = vshll.u32 %v2457, 16
  %v2459 = vadd.s32 %v2458, %v2456
  %vm2460 = vcmp.eq.s32.totalorder %v170, %v2459
  %v2461 = vsel %vm2460, 1, 0
  %v2462 = vcvt.s32.f32 %v2461
  %2463 = vmatprep.subr.mxu0 %v83
  %2464 = vmatpush1.msra.mxu0 %v82
  %2465 = vmatprep.subr.mxu0 %v79
  %2466 = vmatpush1.msra.mxu0 %v78
  %2467 = vmatprep.subr.mxu0 %v75
  %2468 = vmatpush1.msra.mxu0 %v74
  %2469 = vmatprep.subr.mxu0 %v71
  %2470 = vmatpush1.msra.mxu0 %v70
  %2471 = vmatprep.subr.mxu0 %v67
  %2472 = vmatpush1.msra.mxu0 %v66
  %2473 = vmatprep.subr.mxu0 %v63
  %2474 = vmatpush1.msra.mxu0 %v62
  %2475 = vmatprep.subr.mxu0 %v59
  %2476 = vmatpush1.msra.mxu0 %v58
  %2477 = vmatprep.subr.mxu0 %v55
  %2478 = vmatpush1.msra.mxu0 %v54
  %2479 = vmatprep.subr.mxu0 %v51
  %2480 = vmatpush1.msra.mxu0 %v50
  %2481 = vmatprep.subr.mxu0 %v47
  %2482 = vmatpush1.msra.mxu0 %v46
  %2483 = vmatprep.subr.mxu0 %v43
  %2484 = vmatpush1.msra.mxu0 %v42
  %2485 = vmatprep.subr.mxu0 %v39
  %2486 = vmatpush1.msra.mxu0 %v38
  %2487 = vmatprep.subr.mxu0 %v35
  %2488 = vmatpush1.msra.mxu0 %v34
  %2489 = vmatprep.subr.mxu0 %v31
  %2490 = vmatpush1.msra.mxu0 %v30
  %2491 = vmatprep.subr.mxu0 %v27
  %2492 = vmatpush1.msra.mxu0 %v26
  %2493 = vmatprep.subr.mxu0 %v23
  %2494 = vmatpush1.msra.mxu0 %v22
  %2495 = vmatprep.subr.mxu0 %v147
  %2496 = vmatpush2.msra.mxu0 %v146
  %2497 = vmatprep.subr.mxu0 %v143
  %2498 = vmatpush2.msra.mxu0 %v142
  %2499 = vmatprep.subr.mxu0 %v139
  %2500 = vmatpush2.msra.mxu0 %v138
  %2501 = vmatprep.subr.mxu0 %v135
  %2502 = vmatpush2.msra.mxu0 %v134
  %2503 = vmatprep.subr.mxu0 %v131
  %2504 = vmatpush2.msra.mxu0 %v130
  %2505 = vmatprep.subr.mxu0 %v127
  %2506 = vmatpush2.msra.mxu0 %v126
  %2507 = vmatprep.subr.mxu0 %v123
  %2508 = vmatpush2.msra.mxu0 %v122
  %2509 = vmatprep.subr.mxu0 %v119
  %2510 = vmatpush2.msra.mxu0 %v118
  %2511 = vmatprep.subr.mxu0 %v115
  %2512 = vmatpush2.msra.mxu0 %v114
  %2513 = vmatprep.subr.mxu0 %v111
  %2514 = vmatpush2.msra.mxu0 %v110
  %2515 = vmatprep.subr.mxu0 %v107
  %2516 = vmatpush2.msra.mxu0 %v106
  %2517 = vmatprep.subr.mxu0 %v103
  %2518 = vmatpush2.msra.mxu0 %v102
  %2519 = vmatprep.subr.mxu0 %v99
  %2520 = vmatpush2.msra.mxu0 %v98
  %2521 = vmatprep.subr.mxu0 %v95
  %2522 = vmatpush2.msra.mxu0 %v94
  %2523 = vmatprep.subr.mxu0 %v91
  %2524 = vmatpush2.msra.mxu0 %v90
  %2525 = vmatprep.subr.mxu0 %v87
  %2526 = vmatpush2.msra.mxu0 %v86
  %2527 = vmatprep.mubr.f32.mxu0 %v2371
  %2528 = vmatmul.mubr.f32.gmra.mxu0 %v2462
  %v2529 = vpop.f32.mrf.mxu0
  %v2530 = vadd.f32 0.0, %v2529
  %v2531 = vpop.f32.mrf.mxu0
  %v2532 = vadd.f32 0.0, %v2531
  %2533 = vdwg.mxu0
  %2534 = vmatprep.subr.mxu0 %v85
  %2535 = vmatpush1.msra.mxu0 %v84
  %2536 = vmatprep.subr.mxu0 %v81
  %2537 = vmatpush1.msra.mxu0 %v80
  %2538 = vmatprep.subr.mxu0 %v77
  %2539 = vmatpush1.msra.mxu0 %v76
  %2540 = vmatprep.subr.mxu0 %v73
  %2541 = vmatpush1.msra.mxu0 %v72
  %2542 = vmatprep.subr.mxu0 %v69
  %2543 = vmatpush1.msra.mxu0 %v68
  %2544 = vmatprep.subr.mxu0 %v65
  %2545 = vmatpush1.msra.mxu0 %v64
  %2546 = vmatprep.subr.mxu0 %v61
  %2547 = vmatpush1.msra.mxu0 %v60
  %2548 = vmatprep.subr.mxu0 %v57
  %2549 = vmatpush1.msra.mxu0 %v56
  %2550 = vmatprep.subr.mxu0 %v53
  %2551 = vmatpush1.msra.mxu0 %v52
  %2552 = vmatprep.subr.mxu0 %v49
  %2553 = vmatpush1.msra.mxu0 %v48
  %2554 = vmatprep.subr.mxu0 %v45
  %2555 = vmatpush1.msra.mxu0 %v44
  %2556 = vmatprep.subr.mxu0 %v41
  %2557 = vmatpush1.msra.mxu0 %v40
  %2558 = vmatprep.subr.mxu0 %v37
  %2559 = vmatpush1.msra.mxu0 %v36
  %2560 = vmatprep.subr.mxu0 %v33
  %2561 = vmatpush1.msra.mxu0 %v32
  %2562 = vmatprep.subr.mxu0 %v29
  %2563 = vmatpush1.msra.mxu0 %v28
  %2564 = vmatprep.subr.mxu0 %v25
  %2565 = vmatpush1.msra.mxu0 %v24
  %2566 = vmatprep.subr.mxu0 %v149
  %2567 = vmatpush2.msra.mxu0 %v148
  %2568 = vmatprep.subr.mxu0 %v145
  %2569 = vmatpush2.msra.mxu0 %v144
  %2570 = vmatprep.subr.mxu0 %v141
  %2571 = vmatpush2.msra.mxu0 %v140
  %2572 = vmatprep.subr.mxu0 %v137
  %2573 = vmatpush2.msra.mxu0 %v136
  %2574 = vmatprep.subr.mxu0 %v133
  %2575 = vmatpush2.msra.mxu0 %v132
  %2576 = vmatprep.subr.mxu0 %v129
  %2577 = vmatpush2.msra.mxu0 %v128
  %2578 = vmatprep.subr.mxu0 %v125
  %2579 = vmatpush2.msra.mxu0 %v124
  %2580 = vmatprep.subr.mxu0 %v121
  %2581 = vmatpush2.msra.mxu0 %v120
  %2582 = vmatprep.subr.mxu0 %v117
  %2583 = vmatpush2.msra.mxu0 %v116
  %2584 = vmatprep.subr.mxu0 %v113
  %2585 = vmatpush2.msra.mxu0 %v112
  %2586 = vmatprep.subr.mxu0 %v109
  %2587 = vmatpush2.msra.mxu0 %v108
  %2588 = vmatprep.subr.mxu0 %v105
  %2589 = vmatpush2.msra.mxu0 %v104
  %2590 = vmatprep.subr.mxu0 %v101
  %2591 = vmatpush2.msra.mxu0 %v100
  %2592 = vmatprep.subr.mxu0 %v97
  %2593 = vmatpush2.msra.mxu0 %v96
  %2594 = vmatprep.subr.mxu0 %v93
  %2595 = vmatpush2.msra.mxu0 %v92
  %2596 = vmatprep.subr.mxu0 %v89
  %2597 = vmatpush2.msra.mxu0 %v88
  %2598 = vmatprep.mubr.f32.mxu0 %v2371
  %2599 = vmatmul.mubr.f32.gmra.mxu0 %v2462
  %v2600 = vpop.f32.mrf.mxu0
  %v2601 = vadd.f32 0.0, %v2600
  %v2602 = vpop.f32.mrf.mxu0
  %v2603 = vadd.f32 0.0, %v2602
  %2604 = vdwg.mxu0
  %v2605 = vxor.u32 %v2530, 2147483648
  %v2606 = vmul.f32 %v2605, 1.442695
  %v2607 = vpow.pop %v2606
  %v2608 = vadd.f32 %v2607, 1.0
  %v2609 = vrcp.pop %v2608
  %v2610 = vmul.f32 1.0, %v2609
  %v2611 = vxor.u32 %v2532, 2147483648
  %v2612 = vmul.f32 %v2611, 1.442695
  %v2613 = vpow.pop %v2612
  %v2614 = vadd.f32 %v2613, 1.0
  %v2615 = vrcp.pop %v2614
  %v2616 = vmul.f32 1.0, %v2615
  %v2617 = vadd.f32 %v2603, %v332
  %v2618 = vmul.f32 %v2610, %v2617
  %v2619 = vadd.f32 %v2601, %v2618
  %v2620 = vtanh.pop %v2619
  %v2621 = vsub.f32 1.0, %v2616
  %v2622 = vmul.f32 %v2621, %v2620
  %v2623 = vmul.f32 %v2616, %v2371
  %v2624 = vadd.f32 %v2622, %v2623
  %2625 = vmatprep.subr.mxu0 0.0
  %2626 = vmatpush1.msra.mxu0 %v166
  %2627 = vmatprep.subr.mxu0 0.0
  %2628 = vmatpush1.msra.mxu0 %v165
  %2629 = vmatprep.subr.mxu0 0.0
  %2630 = vmatpush1.msra.mxu0 %v164
  %2631 = vmatprep.subr.mxu0 0.0
  %2632 = vmatpush1.msra.mxu0 %v163
  %2633 = vmatprep.subr.mxu0 0.0
  %2634 = vmatpush1.msra.mxu0 %v162
  %2635 = vmatprep.subr.mxu0 0.0
  %2636 = vmatpush1.msra.mxu0 %v161
  %2637 = vmatprep.subr.mxu0 0.0
  %2638 = vmatpush1.msra.mxu0 %v160
  %2639 = vmatprep.subr.mxu0 0.0
  %2640 = vmatpush1.msra.mxu0 %v159
  %2641 = vmatprep.subr.mxu0 0.0
  %2642 = vmatpush1.msra.mxu0 %v158
  %2643 = vmatprep.subr.mxu0 0.0
  %2644 = vmatpush1.msra.mxu0 %v157
  %2645 = vmatprep.subr.mxu0 0.0
  %2646 = vmatpush1.msra.mxu0 %v156
  %2647 = vmatprep.subr.mxu0 0.0
  %2648 = vmatpush1.msra.mxu0 %v155
  %2649 = vmatprep.subr.mxu0 0.0
  %2650 = vmatpush1.msra.mxu0 %v154
  %2651 = vmatprep.subr.mxu0 0.0
  %2652 = vmatpush1.msra.mxu0 %v153
  %2653 = vmatprep.subr.mxu0 0.0
  %2654 = vmatpush1.msra.mxu0 %v152
  %2655 = vmatprep.subr.mxu0 0.0
  %2656 = vmatpush1.msra.mxu0 %v151
  %2657 = vmatprep.subr.mxu0 0.0
  %2658 = vmatpush2.msra.mxu0 0.0
  %2659 = vmatprep.subr.mxu0 0.0
  %2660 = vmatpush2.msra.mxu0 0.0
  %2661 = vmatprep.subr.mxu0 0.0
  %2662 = vmatpush2.msra.mxu0 0.0
  %2663 = vmatprep.subr.mxu0 0.0
  %2664 = vmatpush2.msra.mxu0 0.0
  %2665 = vmatprep.subr.mxu0 0.0
  %2666 = vmatpush2.msra.mxu0 0.0
  %2667 = vmatprep.subr.mxu0 0.0
  %2668 = vmatpush2.msra.mxu0 0.0
  %2669 = vmatprep.subr.mxu0 0.0
  %2670 = vmatpush2.msra.mxu0 0.0
  %2671 = vmatprep.subr.mxu0 0.0
  %2672 = vmatpush2.msra.mxu0 0.0
  %2673 = vmatprep.subr.mxu0 0.0
  %2674 = vmatpush2.msra.mxu0 0.0
  %2675 = vmatprep.subr.mxu0 0.0
  %2676 = vmatpush2.msra.mxu0 0.0
  %2677 = vmatprep.subr.mxu0 0.0
  %2678 = vmatpush2.msra.mxu0 0.0
  %2679 = vmatprep.subr.mxu0 0.0
  %2680 = vmatpush2.msra.mxu0 0.0
  %2681 = vmatprep.subr.mxu0 0.0
  %2682 = vmatpush2.msra.mxu0 0.0
  %2683 = vmatprep.subr.mxu0 0.0
  %2684 = vmatpush2.msra.mxu0 0.0
  %2685 = vmatprep.subr.mxu0 0.0
  %2686 = vmatpush2.msra.mxu0 0.0
  %2687 = vmatprep.subr.mxu0 0.0
  %2688 = vmatpush2.msra.mxu0 0.0
  %2689 = vmatprep.mubr.f32.mxu0 0.0
  %2690 = vmatmul.mubr.f32.gmra.mxu0 %v2624
  %v2691 = vpop.f32.mrf.mxu0
  %v2692 = vadd.f32 %v346, %v2691
  %v2693 = vpop.f32.mrf.mxu0
  %2694 = vdwg.mxu0
  %2695 = vmax.xlane.f32.xlu0 %v2692
  %v2696 = vpop.xlane.xlu0 %2695
  %v2697 = vsub.f32 %v415, %v419
  %v2698 = vsub.f32 %v668, %v672
  %v2699 = vsub.f32 %v921, %v925
  %v2700 = vsub.f32 %v1174, %v1178
  %v2701 = vsub.f32 %v1427, %v1431
  %v2702 = vsub.f32 %v1680, %v1684
  %v2703 = vsub.f32 %v1933, %v1937
  %v2704 = vsub.f32 %v2186, %v2190
  %v2705 = vsub.f32 %v2439, %v2443
  %v2706 = vsub.f32 %v2692, %v2696
  %v2707 = vmul.f32 %v2697, 1.442695
  %v2708 = vpow.pop %v2707
  %v2709 = vmul.f32 %v2698, 1.442695
  %v2710 = vpow.pop %v2709
  %v2711 = vmul.f32 %v2699, 1.442695
  %v2712 = vpow.pop %v2711
  %v2713 = vmul.f32 %v2700, 1.442695
  %v2714 = vpow.pop %v2713
  %v2715 = vmul.f32 %v2701, 1.442695
  %v2716 = vpow.pop %v2715
  %v2717 = vmul.f32 %v2702, 1.442695
  %v2718 = vpow.pop %v2717
  %v2719 = vmul.f32 %v2703, 1.442695
  %v2720 = vpow.pop %v2719
  %v2721 = vmul.f32 %v2704, 1.442695
  %v2722 = vpow.pop %v2721
  %v2723 = vmul.f32 %v2705, 1.442695
  %v2724 = vpow.pop %v2723
  %v2725 = vmul.f32 %v2706, 1.442695
  %v2726 = vpow.pop %v2725
  %2727 = vadd.xlane.f32.xlu0 %v2708
  %v2728 = vpop.xlane.xlu0 %2727
  %2729 = vadd.xlane.f32.xlu0 %v2710
  %v2730 = vpop.xlane.xlu0 %2729
  %2731 = vadd.xlane.f32.xlu0 %v2712
  %v2732 = vpop.xlane.xlu0 %2731
  %2733 = vadd.xlane.f32.xlu0 %v2714
  %v2734 = vpop.xlane.xlu0 %2733
  %2735 = vadd.xlane.f32.xlu0 %v2716
  %v2736 = vpop.xlane.xlu0 %2735
  %2737 = vadd.xlane.f32.xlu0 %v2718
  %v2738 = vpop.xlane.xlu0 %2737
  %2739 = vadd.xlane.f32.xlu0 %v2720
  %v2740 = vpop.xlane.xlu0 %2739
  %2741 = vadd.xlane.f32.xlu0 %v2722
  %v2742 = vpop.xlane.xlu0 %2741
  %2743 = vadd.xlane.f32.xlu0 %v2724
  %v2744 = vpop.xlane.xlu0 %2743
  %2745 = vadd.xlane.f32.xlu0 %v2726
  %v2746 = vpop.xlane.xlu0 %2745
  %v2747 = vlog2.pop %v2728
  %v2748 = vmul.f32 %v2747, 0.6931472
  %v2749 = vlog2.pop %v2730
  %v2750 = vmul.f32 %v2749, 0.6931472
  %v2751 = vlog2.pop %v2732
  %v2752 = vmul.f32 %v2751, 0.6931472
  %v2753 = vlog2.pop %v2734
  %v2754 = vmul.f32 %v2753, 0.6931472
  %v2755 = vlog2.pop %v2736
  %v2756 = vmul.f32 %v2755, 0.6931472
  %v2757 = vlog2.pop %v2738
  %v2758 = vmul.f32 %v2757, 0.6931472
  %v2759 = vlog2.pop %v2740
  %v2760 = vmul.f32 %v2759, 0.6931472
  %v2761 = vlog2.pop %v2742
  %v2762 = vmul.f32 %v2761, 0.6931472
  %v2763 = vlog2.pop %v2744
  %v2764 = vmul.f32 %v2763, 0.6931472
  %v2765 = vlog2.pop %v2746
  %v2766 = vmul.f32 %v2765, 0.6931472
  %v2767 = vadd.f32 %v419, %v2748
  %v2768 = vadd.f32 %v672, %v2750
  %v2769 = vadd.f32 %v925, %v2752
  %v2770 = vadd.f32 %v1178, %v2754
  %v2771 = vadd.f32 %v1431, %v2756
  %v2772 = vadd.f32 %v1684, %v2758
  %v2773 = vadd.f32 %v1937, %v2760
  %v2774 = vadd.f32 %v2190, %v2762
  %v2775 = vadd.f32 %v2443, %v2764
  %v2776 = vadd.f32 %v2696, %v2766
  %v2777 = vsub.f32 %v415, %v2767
  %v2778 = vsub.f32 %v668, %v2768
  %v2779 = vsub.f32 %v921, %v2769
  %v2780 = vsub.f32 %v1174, %v2770
  %v2781 = vsub.f32 %v1427, %v2771
  %v2782 = vsub.f32 %v1680, %v2772
  %v2783 = vsub.f32 %v1933, %v2773
  %v2784 = vsub.f32 %v2186, %v2774
  %v2785 = vsub.f32 %v2439, %v2775
  %v2786 = vsub.f32 %v2692, %v2776
  %2787 = vst [vmem:[%s5] sm:$0xff] %v2777
  %2788 = vst [vmem:[%s5 + $0x8] sm:$0xff] %v2778
  %2789 = vst [vmem:[%s5 + $0x10] sm:$0xff] %v2779
  %2790 = vst [vmem:[%s5 + $0x18] sm:$0xff] %v2780
  %2791 = vst [vmem:[%s5 + $0x20] sm:$0xff] %v2781
  %2792 = vst [vmem:[%s5 + $0x28] sm:$0xff] %v2782
  %2793 = vst [vmem:[%s5 + $0x30] sm:$0xff] %v2783
  %2794 = vst [vmem:[%s5 + $0x38] sm:$0xff] %v2784
  %2795 = vst [vmem:[%s5 + $0x40] sm:$0xff] %v2785
  %2796 = vst [vmem:[%s5 + $0x48] sm:$0xff] %v2786
  %2797 = vst [vmem:[%s6] sm:$0xff] %v2624
  // Predicated region
  $region22: #{decoder_rnn_forward.1} parent=0 // pred_check
    _
  $region23: #{decoder_rnn_forward.1} parent=0 // pred_check_branch
    %2799 = sbr.rel (0) target = $region25
  $region24: #{decoder_rnn_forward.1} parent=0 // pred_region
    _
  $region25: #{decoder_rnn_forward.1} parent=0 // pred_fallthru
    _
  // Predicated region
  $region26: #{decoder_rnn_forward.1} parent=0 // pred_check
    _
  $region27: #{decoder_rnn_forward.1} parent=0 // pred_check_branch
    %2801 = sbr.rel (0) target = $region29
  $region28: #{decoder_rnn_forward.1} parent=0 // pred_region
    _
  $region29: #{decoder_rnn_forward.1} parent=0 // pred_fallthru
    _
  // Predicated region
  $region30: #{decoder_rnn_forward.1} parent=0 // pred_check
    _
  $region31: #{decoder_rnn_forward.1} parent=0 // pred_check_branch
    %2803 = sbr.rel (0) target = $region33
  $region32: #{decoder_rnn_forward.1} parent=0 // pred_region
    _
  $region33: #{decoder_rnn_forward.1} parent=0 // pred_fallthru
    _
  // Predicated region
  $region34: #{decoder_rnn_forward.1} parent=0 // pred_check
    _
  $region35: #{decoder_rnn_forward.1} parent=0 // pred_check_branch
    %2805 = sbr.rel (0) target = $region37
  $region36: #{decoder_rnn_forward.1} parent=0 // pred_region
    _
  $region37: #{decoder_rnn_forward.1} parent=0 // pred_fallthru
    _

</llo_original>
